<compile_context>
chip_gen: v5e
topology: v5e:2x2
jax: 0.10.0
libtpu: 0.0.40
codegen_flags: <defaults>
</compile_context>

<pallas_src>
import math

import numpy as np
import jax
import jax.numpy as jnp
from jax import lax
from jax.experimental import pallas as pl
from jax.experimental.pallas import tpu as pltpu

# ----------------------------- model config ---------------------------------
S = 10          # vocab / state-space size
SEQ = 8         # D, sequence length
BATCH = 2
EMBED = 32      # embed_dim == qkv_dim
HEADS = 2
DH = EMBED // HEADS
HALF = EMBED // 2
LAYERS = 2
MLP = 64
TIME_SCALE = 1000.0
LN_EPS = 1e-5
S_PAD = 128     # lane-dense logits slab; real logits are the first S lanes
BD = BATCH * SEQ            # 16 flattened rows per direction
ROWS = 2 * BD               # 32 stacked rows (l2r | r2l)

_GELU_C = 0.7978845608028654  # sqrt(2/pi)


# ----------------------------- parameters ------------------------------------
def init_params(key):
    keys = iter(jax.random.split(key, 256))

    def w(shape, scale=0.02):
        return (scale * jax.random.normal(next(keys), shape)).astype(jnp.float32)

    def zeros(shape):
        return jnp.zeros(shape, jnp.float32)

    def layer_params():
        return dict(
            ln1_g=jnp.ones((1, EMBED), jnp.float32), ln1_b=zeros((1, EMBED)),
            wqkv=w((EMBED, 3 * EMBED)), bqkv=zeros((1, 3 * EMBED)),
            wo=w((EMBED, EMBED)), bo=zeros((1, EMBED)),
            ln2_g=jnp.ones((1, EMBED), jnp.float32), ln2_b=zeros((1, EMBED)),
            mlp_w1=w((EMBED, MLP)), mlp_b1=zeros((1, MLP)),
            mlp_w2=w((MLP, EMBED)), mlp_b2=zeros((1, EMBED)),
        )

    def direction_params():
        return dict(pos_embed=w((SEQ, EMBED)),
                    layers=[layer_params() for _ in range(LAYERS)])

    # Readout second layer padded to a lane-dense 128-wide slab (extra cols/bias zero).
    ro_w2 = jnp.zeros((MLP, S_PAD), jnp.float32).at[:, :S].set(w((MLP, S)))
    ro_b2 = jnp.zeros((1, S_PAD), jnp.float32)

    return dict(
        token_embed=w((S, EMBED)),
        l2r=direction_params(),
        r2l=direction_params(),
        ro_w1=w((2 * EMBED, MLP)), ro_b1=zeros((1, MLP)),
        ro_w2=ro_w2, ro_b2=ro_b2,
    )


def pack_params(params):
    """Fold LN affines + attention scale into weights, pre-broadcast biases, precompute constant
    masks / positional / frequency tables, and pack everything into ONE lane-dense [rows, 128]
    f32 slab.  Row offsets are multiples of 8 so the in-kernel static slices are free."""
    blocks = {}

    def add(name, arr):
        arr = np.asarray(arr, dtype=np.float32)
        assert arr.ndim == 2 and arr.shape[1] <= 128, (name, arr.shape)
        blocks[name] = arr

    # Token embedding, padded to 16 rows (matches the 16 one-hot lanes of the input slab).
    tok = np.zeros((16, EMBED), np.float32)
    tok[:S] = np.asarray(params["token_embed"])
    add("tok", tok)

    # Sinusoid frequencies (x TIME_SCALE) and phase (0 | pi/2 so cos == sin(x + pi/2)).
    k = np.arange(HALF, dtype=np.float32)
    sf = TIME_SCALE * np.exp(-math.log(10000.0) * k / (HALF - 1))
    add("freqs", np.tile(np.concatenate([sf, sf])[None, :], (ROWS, 1)))
    phase = np.concatenate([np.zeros(HALF, np.float32),
                            np.full(HALF, 0.5 * np.pi, np.float32)])
    add("phase", np.tile(phase[None, :], (ROWS, 1)))

    # Positional embeddings tiled over batch, directions stacked along rows.
    add("pos", np.concatenate(
        [np.tile(np.asarray(params["l2r"]["pos_embed"]), (BATCH, 1)),
         np.tile(np.asarray(params["r2l"]["pos_embed"]), (BATCH, 1))], axis=0))

    # Conditioning-token row mask (1 where the time token replaces the shifted stream).
    r = np.arange(BD)
    cond = np.concatenate([(r % SEQ == 0), (r % SEQ == SEQ - 1)]).astype(np.float32)
    add("cond", np.tile(cond[:, None], (1, EMBED)))

    # Additive attention mask: block-diagonal over (direction, batch); causal / anti-causal.
    rr = np.arange(ROWS)
    ri, ci = np.meshgrid(rr, rr, indexing="ij")
    same_blk = (ri // SEQ) == (ci // SEQ)
    dir_ok = np.where(ri < BD, (ri % SEQ) >= (ci % SEQ), (ri % SEQ) <= (ci % SEQ))
    add("amask", np.where(same_blk & dir_ok, 0.0, -1e9))

    scale = 1.0 / math.sqrt(DH)
    for dname in ("l2r", "r2l"):
        for l, lp in enumerate(params[dname]["layers"]):
            g1, b1 = np.asarray(lp["ln1_g"])[0], np.asarray(lp["ln1_b"])[0]
            wqkv, bqkv = np.asarray(lp["wqkv"]), np.asarray(lp["bqkv"])[0]
            wqkv_f = g1[:, None] * wqkv
            bqkv_f = b1 @ wqkv + bqkv
            wqkv_f[:, :EMBED] *= scale            # fold 1/sqrt(dh) into the Q projection
            bqkv_f[:EMBED] *= scale
            add(f"{dname}{l}_wqkv", wqkv_f)                                    # [32, 96]
            add(f"{dname}{l}_bqkv", np.tile(bqkv_f[None, :], (BD, 1)))         # [16, 96]
            add(f"{dname}{l}_wo", np.asarray(lp["wo"]))                        # [32, 32]
            add(f"{dname}{l}_bo", np.tile(np.asarray(lp["bo"]), (BD, 1)))      # [16, 32]
            g2, b2 = np.asarray(lp["ln2_g"])[0], np.asarray(lp["ln2_b"])[0]
            w1, b1m = np.asarray(lp["mlp_w1"]), np.asarray(lp["mlp_b1"])[0]
            add(f"{dname}{l}_w1", g2[:, None] * w1)                            # [32, 64]
            add(f"{dname}{l}_b1", np.tile((b2 @ w1 + b1m)[None, :], (BD, 1)))  # [16, 64]
            add(f"{dname}{l}_w2", np.asarray(lp["mlp_w2"]))                    # [64, 32]
            add(f"{dname}{l}_b2", np.tile(np.asarray(lp["mlp_b2"]), (BD, 1)))  # [16, 32]

    add("ro_w1", np.asarray(params["ro_w1"]))                                  # [64, 64]
    add("ro_b1", np.tile(np.asarray(params["ro_b1"]), (BD, 1)))                # [16, 64]
    add("ro_w2", np.asarray(params["ro_w2"]))                                  # [64, 128]
    add("ro_b2", np.tile(np.asarray(params["ro_b2"]), (BD, 1)))                # [16, 128]

    layout, off = {}, 0
    for name, arr in blocks.items():
        layout[name] = (off, arr.shape[0], arr.shape[1])
        off += ((arr.shape[0] + 7) // 8) * 8
    slab = np.zeros((off, 128), np.float32)
    for name, arr in blocks.items():
        o, rws, cols = layout[name]
        slab[o:o + rws, :cols] = arr
    return jnp.asarray(slab), layout


# ----------------------------- fused forward ----------------------------------
def build_forward(layout):
    """Returns a jitted forward(slab, x, times) -> [B, D, S] logits."""

    def blk(ref, name):
        off, rws, cols = layout[name]
        return ref[off:off + rws, 0:cols]

    def _ln(x):  # affine-free LayerNorm (gamma/beta folded into the following matmul)
        mean = jnp.mean(x, axis=-1, keepdims=True)
        xc = x - mean
        var = jnp.mean(xc * xc, axis=-1, keepdims=True)
        return xc * lax.rsqrt(var + LN_EPS)

    def _gelu(x):  # tanh approximation
        return 0.5 * x * (1.0 + jnp.tanh(_GELU_C * (x + 0.044715 * x * x * x)))

    def kernel(slab_ref, dyn_ref, out_ref):
        # ---- embedding of the pre-shifted token streams (both directions at once) ----
        tok = blk(slab_ref, "tok")                                     # [16, H]
        shifted = jnp.dot(dyn_ref[0:ROWS, 0:16], tok,
                          preferred_element_type=jnp.float32)          # [32, H]

        # ---- sinusoidal time embedding: sin(t*freq + phase); phase = pi/2 on the cos lanes ----
        args = dyn_ref[ROWS:2 * ROWS, 0:EMBED] * blk(slab_ref, "freqs")
        temb = jnp.sin(args + blk(slab_ref, "phase"))                  # [32, H]

        # ---- conditioning-token select + positional embedding ----
        x = jnp.where(blk(slab_ref, "cond") > 0.5, temb, shifted) + blk(slab_ref, "pos")

        amask = blk(slab_ref, "amask")                                 # [32, 32] additive

        for l in range(LAYERS):
            # ---------------- attention ----------------
            h = _ln(x)
            qkv = jnp.concatenate([
                jnp.dot(h[0:BD], blk(slab_ref, f"l2r{l}_wqkv"),
                        preferred_element_type=jnp.float32) + blk(slab_ref, f"l2r{l}_bqkv"),
                jnp.dot(h[BD:ROWS], blk(slab_ref, f"r2l{l}_wqkv"),
                        preferred_element_type=jnp.float32) + blk(slab_ref, f"r2l{l}_bqkv"),
            ], axis=0)                                                 # [32, 3H]
            wo_t = blk(slab_ref, f"l2r{l}_wo")
            wo_b = blk(slab_ref, f"r2l{l}_wo")
            att_t = blk(slab_ref, f"l2r{l}_bo")                        # [16, H] pre-broadcast bias
            att_b = blk(slab_ref, f"r2l{l}_bo")
            for hd in range(HEADS):
                q = qkv[:, hd * DH:(hd + 1) * DH]
                k = qkv[:, EMBED + hd * DH:EMBED + (hd + 1) * DH]
                v = qkv[:, 2 * EMBED + hd * DH:2 * EMBED + (hd + 1) * DH]
                s = jnp.einsum('nd,md->nm', q, k,
                               preferred_element_type=jnp.float32) + amask
                # max-subtraction dropped: softmax is shift-invariant and scores are O(1) here
                p = jnp.exp(s)
                p = p * pl.reciprocal(jnp.sum(p, axis=-1, keepdims=True), approx=True)
                o = jnp.dot(p, v, preferred_element_type=jnp.float32)  # [32, DH]
                att_t = att_t + jnp.dot(o[0:BD], wo_t[hd * DH:(hd + 1) * DH, :],
                                        preferred_element_type=jnp.float32)
                att_b = att_b + jnp.dot(o[BD:ROWS], wo_b[hd * DH:(hd + 1) * DH, :],
                                        preferred_element_type=jnp.float32)
            x = x + jnp.concatenate([att_t, att_b], axis=0)

            # ---------------- MLP ----------------
            h = _ln(x)
            h1 = jnp.concatenate([
                jnp.dot(h[0:BD], blk(slab_ref, f"l2r{l}_w1"),
                        preferred_element_type=jnp.float32) + blk(slab_ref, f"l2r{l}_b1"),
                jnp.dot(h[BD:ROWS], blk(slab_ref, f"r2l{l}_w1"),
                        preferred_element_type=jnp.float32) + blk(slab_ref, f"r2l{l}_b1"),
            ], axis=0)
            h1 = _gelu(h1)
            x = x + jnp.concatenate([
                jnp.dot(h1[0:BD], blk(slab_ref, f"l2r{l}_w2"),
                        preferred_element_type=jnp.float32) + blk(slab_ref, f"l2r{l}_b2"),
                jnp.dot(h1[BD:ROWS], blk(slab_ref, f"r2l{l}_w2"),
                        preferred_element_type=jnp.float32) + blk(slab_ref, f"r2l{l}_b2"),
            ], axis=0)

        # ---------------- 'concat' readout (logits lane-dense padded to 128) ----------------
        w1 = blk(slab_ref, "ro_w1")                                    # [2H, MLP]
        hmid = _gelu(jnp.dot(x[0:BD], w1[0:EMBED, :], preferred_element_type=jnp.float32)
                     + jnp.dot(x[BD:ROWS], w1[EMBED:2 * EMBED, :],
                               preferred_element_type=jnp.float32)
                     + blk(slab_ref, "ro_b1"))
        out_ref[...] = (jnp.dot(hmid, blk(slab_ref, "ro_w2"),
                                preferred_element_type=jnp.float32)
                        + blk(slab_ref, "ro_b2"))

    @jax.jit
    def forward(slab, x, times):
        B, D = x.shape
        assert (B, D) == (BATCH, SEQ)
        # Dynamic input slab (one DMA): pre-shifted one-hot token rows for both directions
        # (pure index plumbing -- the shifted rows that wrap per batch are exactly the
        # conditioning-token rows and get overwritten in-kernel), plus times per row.
        ids_l2r = jnp.roll(x, 1, axis=1).reshape(BD)
        ids_r2l = jnp.roll(x, -1, axis=1).reshape(BD)
        onehot = jax.nn.one_hot(jnp.concatenate([ids_l2r, ids_r2l]), 16, dtype=jnp.float32)
        t_rows = jnp.tile(jnp.repeat(times.astype(jnp.float32), D), 2)          # [32]
        dyn = jnp.zeros((2 * ROWS, 128), jnp.float32)
        dyn = dyn.at[0:ROWS, 0:16].set(onehot)
        dyn = dyn.at[ROWS:2 * ROWS, 0:EMBED].set(
            jnp.broadcast_to(t_rows[:, None], (ROWS, EMBED)))

        vmem = pl.BlockSpec(memory_space=pltpu.MemorySpace.VMEM)
        logits_pad = pl.pallas_call(
            kernel,
            out_shape=jax.ShapeDtypeStruct((BD, S_PAD), jnp.float32),
            in_specs=[vmem, vmem],
            out_specs=vmem,
        )(slab, dyn)
        return logits_pad[:, :S].reshape(B, D, S)

    return forward


if __name__ == "__main__":
    key = jax.random.PRNGKey(0)
    pkey, xkey, tkey = jax.random.split(key, 3)
    params = init_params(pkey)
    slab, layout = pack_params(params)          # one-time host-side packing / folding
    forward = build_forward(layout)

    x = jax.random.randint(xkey, (BATCH, SEQ), 0, S, dtype=jnp.int32)
    times = jax.random.uniform(tkey, (BATCH,), dtype=jnp.float32)

    logits = forward(slab, x, times)
    jax.block_until_ready(logits)
    assert logits.shape == (BATCH, SEQ, S) and logits.dtype == jnp.float32
    assert bool(jnp.all(jnp.isfinite(logits)))
    print("KERNEL_OK")
</pallas_src>

<mosaic_0001>
module attributes {stable_mosaic.version = 11 : i64} {
  func.func @kernel(%arg0: memref<1232x128xf32, #tpu.memory_space<vmem>>, %arg1: memref<64x128xf32, #tpu.memory_space<vmem>>, %arg2: memref<16x128xf32, #tpu.memory_space<vmem>>) attributes {dimension_semantics = [], scalar_prefetch = 0 : i64, scratch_operands = 0 : i64, tpu.core_type = #tpu.core_type<tc>} {
    %c0 = arith.constant 0 : index
    %c0_0 = arith.constant 0 : index
    %0 = vector.load %arg0[%c0, %c0_0] : memref<1232x128xf32, #tpu.memory_space<vmem>>, vector<16x32xf32>
    %c0_1 = arith.constant 0 : index
    %c0_2 = arith.constant 0 : index
    %1 = vector.load %arg1[%c0_1, %c0_2] : memref<64x128xf32, #tpu.memory_space<vmem>>, vector<32x16xf32>
    %cst = arith.constant dense<0.000000e+00> : vector<32x32xf32>
    %2 = tpu.matmul %1, %0, %cst {dimension_numbers = #tpu.dot_dimension_numbers<[1], [0], [0], [1], [0, 0, 1, 1], [], []>} : vector<32x16xf32>, vector<16x32xf32>, vector<32x32xf32> -> vector<32x32xf32>
    %c32 = arith.constant 32 : index
    %c0_3 = arith.constant 0 : index
    %3 = vector.load %arg1[%c32, %c0_3] : memref<64x128xf32, #tpu.memory_space<vmem>>, vector<32x32xf32>
    %c16 = arith.constant 16 : index
    %c0_4 = arith.constant 0 : index
    %4 = vector.load %arg0[%c16, %c0_4] : memref<1232x128xf32, #tpu.memory_space<vmem>>, vector<32x32xf32>
    %5 = arith.mulf %3, %4 : vector<32x32xf32>
    %c48 = arith.constant 48 : index
    %c0_5 = arith.constant 0 : index
    %6 = vector.load %arg0[%c48, %c0_5] : memref<1232x128xf32, #tpu.memory_space<vmem>>, vector<32x32xf32>
    %7 = arith.addf %5, %6 : vector<32x32xf32>
    %8 = math.sin %7 : vector<32x32xf32>
    %c112 = arith.constant 112 : index
    %c0_6 = arith.constant 0 : index
    %9 = vector.load %arg0[%c112, %c0_6] : memref<1232x128xf32, #tpu.memory_space<vmem>>, vector<32x32xf32>
    %cst_7 = arith.constant 5.000000e-01 : f32
    %10 = vector.broadcast %cst_7 : f32 to vector<32x32xf32>
    %11 = arith.cmpf ogt, %9, %10 : vector<32x32xf32>
    %12 = arith.select %11, %8, %2 : vector<32x32xi1>, vector<32x32xf32>
    %c80 = arith.constant 80 : index
    %c0_8 = arith.constant 0 : index
    %13 = vector.load %arg0[%c80, %c0_8] : memref<1232x128xf32, #tpu.memory_space<vmem>>, vector<32x32xf32>
    %14 = arith.addf %12, %13 : vector<32x32xf32>
    %c144 = arith.constant 144 : index
    %c0_9 = arith.constant 0 : index
    %15 = vector.load %arg0[%c144, %c0_9] : memref<1232x128xf32, #tpu.memory_space<vmem>>, vector<32x32xf32>
    %cst_10 = arith.constant dense<0.000000e+00> : vector<32xf32>
    %16 = vector.multi_reduction <add>, %14, %cst_10 [1] : vector<32x32xf32> to vector<32xf32>
    %17 = vector.shape_cast %16 : vector<32xf32> to vector<32x1xf32>
    %cst_11 = arith.constant 3.200000e+01 : f32
    %18 = vector.broadcast %cst_11 : f32 to vector<32x1xf32>
    %19 = arith.divf %17, %18 : vector<32x1xf32>
    %20 = vector.broadcast %19 : vector<32x1xf32> to vector<32x32xf32>
    %21 = arith.subf %14, %20 : vector<32x32xf32>
    %22 = arith.mulf %21, %21 : vector<32x32xf32>
    %cst_12 = arith.constant dense<0.000000e+00> : vector<32xf32>
    %23 = vector.multi_reduction <add>, %22, %cst_12 [1] : vector<32x32xf32> to vector<32xf32>
    %24 = vector.shape_cast %23 : vector<32xf32> to vector<32x1xf32>
    %cst_13 = arith.constant 3.200000e+01 : f32
    %25 = vector.broadcast %cst_13 : f32 to vector<32x1xf32>
    %26 = arith.divf %24, %25 : vector<32x1xf32>
    %cst_14 = arith.constant 9.99999974E-6 : f32
    %27 = vector.broadcast %cst_14 : f32 to vector<32x1xf32>
    %28 = arith.addf %26, %27 : vector<32x1xf32>
    %29 = math.rsqrt %28 : vector<32x1xf32>
    %30 = vector.broadcast %29 : vector<32x1xf32> to vector<32x32xf32>
    %31 = arith.mulf %21, %30 : vector<32x32xf32>
    %32 = vector.extract_strided_slice %31 {offsets = [0, 0], sizes = [16, 32], strides = [1, 1]} : vector<32x32xf32> to vector<16x32xf32>
    %c176 = arith.constant 176 : index
    %c0_15 = arith.constant 0 : index
    %33 = vector.load %arg0[%c176, %c0_15] : memref<1232x128xf32, #tpu.memory_space<vmem>>, vector<32x96xf32>
    %cst_16 = arith.constant dense<0.000000e+00> : vector<16x96xf32>
    %34 = tpu.matmul %32, %33, %cst_16 {dimension_numbers = #tpu.dot_dimension_numbers<[1], [0], [0], [1], [0, 0, 1, 1], [], []>} : vector<16x32xf32>, vector<32x96xf32>, vector<16x96xf32> -> vector<16x96xf32>
    %c208 = arith.constant 208 : index
    %c0_17 = arith.constant 0 : index
    %35 = vector.load %arg0[%c208, %c0_17] : memref<1232x128xf32, #tpu.memory_space<vmem>>, vector<16x96xf32>
    %36 = arith.addf %34, %35 : vector<16x96xf32>
    %37 = vector.extract_strided_slice %31 {offsets = [16, 0], sizes = [16, 32], strides = [1, 1]} : vector<32x32xf32> to vector<16x32xf32>
    %c624 = arith.constant 624 : index
    %c0_18 = arith.constant 0 : index
    %38 = vector.load %arg0[%c624, %c0_18] : memref<1232x128xf32, #tpu.memory_space<vmem>>, vector<32x96xf32>
    %cst_19 = arith.constant dense<0.000000e+00> : vector<16x96xf32>
    %39 = tpu.matmul %37, %38, %cst_19 {dimension_numbers = #tpu.dot_dimension_numbers<[1], [0], [0], [1], [0, 0, 1, 1], [], []>} : vector<16x32xf32>, vector<32x96xf32>, vector<16x96xf32> -> vector<16x96xf32>
    %c656 = arith.constant 656 : index
    %c0_20 = arith.constant 0 : index
    %40 = vector.load %arg0[%c656, %c0_20] : memref<1232x128xf32, #tpu.memory_space<vmem>>, vector<16x96xf32>
    %41 = arith.addf %39, %40 : vector<16x96xf32>
    %42 = tpu.concatenate %36, %41 in 0 : vector<16x96xf32>, vector<16x96xf32> -> vector<32x96xf32>
    %c224 = arith.constant 224 : index
    %c0_21 = arith.constant 0 : index
    %43 = vector.load %arg0[%c224, %c0_21] : memref<1232x128xf32, #tpu.memory_space<vmem>>, vector<32x32xf32>
    %c672 = arith.constant 672 : index
    %c0_22 = arith.constant 0 : index
    %44 = vector.load %arg0[%c672, %c0_22] : memref<1232x128xf32, #tpu.memory_space<vmem>>, vector<32x32xf32>
    %c256 = arith.constant 256 : index
    %c0_23 = arith.constant 0 : index
    %45 = vector.load %arg0[%c256, %c0_23] : memref<1232x128xf32, #tpu.memory_space<vmem>>, vector<16x32xf32>
    %c704 = arith.constant 704 : index
    %c0_24 = arith.constant 0 : index
    %46 = vector.load %arg0[%c704, %c0_24] : memref<1232x128xf32, #tpu.memory_space<vmem>>, vector<16x32xf32>
    %47 = vector.extract_strided_slice %42 {offsets = [0, 0], sizes = [32, 16], strides = [1, 1]} : vector<32x96xf32> to vector<32x16xf32>
    %48 = vector.extract_strided_slice %42 {offsets = [0, 32], sizes = [32, 16], strides = [1, 1]} : vector<32x96xf32> to vector<32x16xf32>
    %49 = vector.extract_strided_slice %42 {offsets = [0, 64], sizes = [32, 16], strides = [1, 1]} : vector<32x96xf32> to vector<32x16xf32>
    "tpu.trace_start"() <{level = 10 : i32, message = "nd,md->nm"}> : () -> ()
    %cst_25 = arith.constant dense<0.000000e+00> : vector<32x32xf32>
    %50 = tpu.matmul %47, %48, %cst_25 {dimension_numbers = #tpu.dot_dimension_numbers<[1], [1], [0], [0], [0, 0, 1, 0], [], []>} : vector<32x16xf32>, vector<32x16xf32>, vector<32x32xf32> -> vector<32x32xf32>
    "tpu.trace_stop"() : () -> ()
    %51 = arith.addf %50, %15 : vector<32x32xf32>
    %52 = math.exp %51 : vector<32x32xf32>
    %cst_26 = arith.constant dense<0.000000e+00> : vector<32xf32>
    %53 = vector.multi_reduction <add>, %52, %cst_26 [1] : vector<32x32xf32> to vector<32xf32>
    %54 = vector.shape_cast %53 : vector<32xf32> to vector<32x1xf32>
    %55 = tpu.reciprocal %54 {approx = true} : vector<32x1xf32> -> vector<32x1xf32>
    %56 = vector.broadcast %55 : vector<32x1xf32> to vector<32x32xf32>
    %57 = arith.mulf %52, %56 : vector<32x32xf32>
    %cst_27 = arith.constant dense<0.000000e+00> : vector<32x16xf32>
    %58 = tpu.matmul %57, %49, %cst_27 {dimension_numbers = #tpu.dot_dimension_numbers<[1], [0], [0], [1], [0, 0, 1, 1], [], []>} : vector<32x32xf32>, vector<32x16xf32>, vector<32x16xf32> -> vector<32x16xf32>
    %59 = vector.extract_strided_slice %58 {offsets = [0, 0], sizes = [16, 16], strides = [1, 1]} : vector<32x16xf32> to vector<16x16xf32>
    %60 = vector.extract_strided_slice %43 {offsets = [0, 0], sizes = [16, 32], strides = [1, 1]} : vector<32x32xf32> to vector<16x32xf32>
    %cst_28 = arith.constant dense<0.000000e+00> : vector<16x32xf32>
    %61 = tpu.matmul %59, %60, %cst_28 {dimension_numbers = #tpu.dot_dimension_numbers<[1], [0], [0], [1], [0, 0, 1, 1], [], []>} : vector<16x16xf32>, vector<16x32xf32>, vector<16x32xf32> -> vector<16x32xf32>
    %62 = arith.addf %45, %61 : vector<16x32xf32>
    %63 = vector.extract_strided_slice %58 {offsets = [16, 0], sizes = [16, 16], strides = [1, 1]} : vector<32x16xf32> to vector<16x16xf32>
    %64 = vector.extract_strided_slice %44 {offsets = [0, 0], sizes = [16, 32], strides = [1, 1]} : vector<32x32xf32> to vector<16x32xf32>
    %cst_29 = arith.constant dense<0.000000e+00> : vector<16x32xf32>
    %65 = tpu.matmul %63, %64, %cst_29 {dimension_numbers = #tpu.dot_dimension_numbers<[1], [0], [0], [1], [0, 0, 1, 1], [], []>} : vector<16x16xf32>, vector<16x32xf32>, vector<16x32xf32> -> vector<16x32xf32>
    %66 = arith.addf %46, %65 : vector<16x32xf32>
    %67 = vector.extract_strided_slice %42 {offsets = [0, 16], sizes = [32, 16], strides = [1, 1]} : vector<32x96xf32> to vector<32x16xf32>
    %68 = vector.extract_strided_slice %42 {offsets = [0, 48], sizes = [32, 16], strides = [1, 1]} : vector<32x96xf32> to vector<32x16xf32>
    %69 = vector.extract_strided_slice %42 {offsets = [0, 80], sizes = [32, 16], strides = [1, 1]} : vector<32x96xf32> to vector<32x16xf32>
    "tpu.trace_start"() <{level = 10 : i32, message = "nd,md->nm"}> : () -> ()
    %cst_30 = arith.constant dense<0.000000e+00> : vector<32x32xf32>
    %70 = tpu.matmul %67, %68, %cst_30 {dimension_numbers = #tpu.dot_dimension_numbers<[1], [1], [0], [0], [0, 0, 1, 0], [], []>} : vector<32x16xf32>, vector<32x16xf32>, vector<32x32xf32> -> vector<32x32xf32>
    "tpu.trace_stop"() : () -> ()
    %71 = arith.addf %70, %15 : vector<32x32xf32>
    %72 = math.exp %71 : vector<32x32xf32>
    %cst_31 = arith.constant dense<0.000000e+00> : vector<32xf32>
    %73 = vector.multi_reduction <add>, %72, %cst_31 [1] : vector<32x32xf32> to vector<32xf32>
    %74 = vector.shape_cast %73 : vector<32xf32> to vector<32x1xf32>
    %75 = tpu.reciprocal %74 {approx = true} : vector<32x1xf32> -> vector<32x1xf32>
    %76 = vector.broadcast %75 : vector<32x1xf32> to vector<32x32xf32>
    %77 = arith.mulf %72, %76 : vector<32x32xf32>
    %cst_32 = arith.constant dense<0.000000e+00> : vector<32x16xf32>
    %78 = tpu.matmul %77, %69, %cst_32 {dimension_numbers = #tpu.dot_dimension_numbers<[1], [0], [0], [1], [0, 0, 1, 1], [], []>} : vector<32x32xf32>, vector<32x16xf32>, vector<32x16xf32> -> vector<32x16xf32>
    %79 = vector.extract_strided_slice %78 {offsets = [0, 0], sizes = [16, 16], strides = [1, 1]} : vector<32x16xf32> to vector<16x16xf32>
    %80 = vector.extract_strided_slice %43 {offsets = [16, 0], sizes = [16, 32], strides = [1, 1]} : vector<32x32xf32> to vector<16x32xf32>
    %cst_33 = arith.constant dense<0.000000e+00> : vector<16x32xf32>
    %81 = tpu.matmul %79, %80, %cst_33 {dimension_numbers = #tpu.dot_dimension_numbers<[1], [0], [0], [1], [0, 0, 1, 1], [], []>} : vector<16x16xf32>, vector<16x32xf32>, vector<16x32xf32> -> vector<16x32xf32>
    %82 = arith.addf %62, %81 : vector<16x32xf32>
    %83 = vector.extract_strided_slice %78 {offsets = [16, 0], sizes = [16, 16], strides = [1, 1]} : vector<32x16xf32> to vector<16x16xf32>
    %84 = vector.extract_strided_slice %44 {offsets = [16, 0], sizes = [16, 32], strides = [1, 1]} : vector<32x32xf32> to vector<16x32xf32>
    %cst_34 = arith.constant dense<0.000000e+00> : vector<16x32xf32>
    %85 = tpu.matmul %83, %84, %cst_34 {dimension_numbers = #tpu.dot_dimension_numbers<[1], [0], [0], [1], [0, 0, 1, 1], [], []>} : vector<16x16xf32>, vector<16x32xf32>, vector<16x32xf32> -> vector<16x32xf32>
    %86 = arith.addf %66, %85 : vector<16x32xf32>
    %87 = tpu.concatenate %82, %86 in 0 : vector<16x32xf32>, vector<16x32xf32> -> vector<32x32xf32>
    %88 = arith.addf %14, %87 : vector<32x32xf32>
    %cst_35 = arith.constant dense<0.000000e+00> : vector<32xf32>
    %89 = vector.multi_reduction <add>, %88, %cst_35 [1] : vector<32x32xf32> to vector<32xf32>
    %90 = vector.shape_cast %89 : vector<32xf32> to vector<32x1xf32>
    %cst_36 = arith.constant 3.200000e+01 : f32
    %91 = vector.broadcast %cst_36 : f32 to vector<32x1xf32>
    %92 = arith.divf %90, %91 : vector<32x1xf32>
    %93 = vector.broadcast %92 : vector<32x1xf32> to vector<32x32xf32>
    %94 = arith.subf %88, %93 : vector<32x32xf32>
    %95 = arith.mulf %94, %94 : vector<32x32xf32>
    %cst_37 = arith.constant dense<0.000000e+00> : vector<32xf32>
    %96 = vector.multi_reduction <add>, %95, %cst_37 [1] : vector<32x32xf32> to vector<32xf32>
    %97 = vector.shape_cast %96 : vector<32xf32> to vector<32x1xf32>
    %cst_38 = arith.constant 3.200000e+01 : f32
    %98 = vector.broadcast %cst_38 : f32 to vector<32x1xf32>
    %99 = arith.divf %97, %98 : vector<32x1xf32>
    %cst_39 = arith.constant 9.99999974E-6 : f32
    %100 = vector.broadcast %cst_39 : f32 to vector<32x1xf32>
    %101 = arith.addf %99, %100 : vector<32x1xf32>
    %102 = math.rsqrt %101 : vector<32x1xf32>
    %103 = vector.broadcast %102 : vector<32x1xf32> to vector<32x32xf32>
    %104 = arith.mulf %94, %103 : vector<32x32xf32>
    %105 = vector.extract_strided_slice %104 {offsets = [0, 0], sizes = [16, 32], strides = [1, 1]} : vector<32x32xf32> to vector<16x32xf32>
    %c272 = arith.constant 272 : index
    %c0_40 = arith.constant 0 : index
    %106 = vector.load %arg0[%c272, %c0_40] : memref<1232x128xf32, #tpu.memory_space<vmem>>, vector<32x64xf32>
    %cst_41 = arith.constant dense<0.000000e+00> : vector<16x64xf32>
    %107 = tpu.matmul %105, %106, %cst_41 {dimension_numbers = #tpu.dot_dimension_numbers<[1], [0], [0], [1], [0, 0, 1, 1], [], []>} : vector<16x32xf32>, vector<32x64xf32>, vector<16x64xf32> -> vector<16x64xf32>
    %c304 = arith.constant 304 : index
    %c0_42 = arith.constant 0 : index
    %108 = vector.load %arg0[%c304, %c0_42] : memref<1232x128xf32, #tpu.memory_space<vmem>>, vector<16x64xf32>
    %109 = arith.addf %107, %108 : vector<16x64xf32>
    %110 = vector.extract_strided_slice %104 {offsets = [16, 0], sizes = [16, 32], strides = [1, 1]} : vector<32x32xf32> to vector<16x32xf32>
    %c720 = arith.constant 720 : index
    %c0_43 = arith.constant 0 : index
    %111 = vector.load %arg0[%c720, %c0_43] : memref<1232x128xf32, #tpu.memory_space<vmem>>, vector<32x64xf32>
    %cst_44 = arith.constant dense<0.000000e+00> : vector<16x64xf32>
    %112 = tpu.matmul %110, %111, %cst_44 {dimension_numbers = #tpu.dot_dimension_numbers<[1], [0], [0], [1], [0, 0, 1, 1], [], []>} : vector<16x32xf32>, vector<32x64xf32>, vector<16x64xf32> -> vector<16x64xf32>
    %c752 = arith.constant 752 : index
    %c0_45 = arith.constant 0 : index
    %113 = vector.load %arg0[%c752, %c0_45] : memref<1232x128xf32, #tpu.memory_space<vmem>>, vector<16x64xf32>
    %114 = arith.addf %112, %113 : vector<16x64xf32>
    %115 = tpu.concatenate %109, %114 in 0 : vector<16x64xf32>, vector<16x64xf32> -> vector<32x64xf32>
    %cst_46 = arith.constant 5.000000e-01 : f32
    %116 = vector.broadcast %cst_46 : f32 to vector<32x64xf32>
    %117 = arith.mulf %116, %115 : vector<32x64xf32>
    %cst_47 = arith.constant 4.471500e-02 : f32
    %118 = vector.broadcast %cst_47 : f32 to vector<32x64xf32>
    %119 = arith.mulf %118, %115 : vector<32x64xf32>
    %120 = arith.mulf %119, %115 : vector<32x64xf32>
    %121 = arith.mulf %120, %115 : vector<32x64xf32>
    %122 = arith.addf %115, %121 : vector<32x64xf32>
    %cst_48 = arith.constant 0.797884583 : f32
    %123 = vector.broadcast %cst_48 : f32 to vector<32x64xf32>
    %124 = arith.mulf %123, %122 : vector<32x64xf32>
    %125 = math.tanh %124 : vector<32x64xf32>
    %cst_49 = arith.constant 1.000000e+00 : f32
    %126 = vector.broadcast %cst_49 : f32 to vector<32x64xf32>
    %127 = arith.addf %126, %125 : vector<32x64xf32>
    %128 = arith.mulf %117, %127 : vector<32x64xf32>
    %129 = vector.extract_strided_slice %128 {offsets = [0, 0], sizes = [16, 64], strides = [1, 1]} : vector<32x64xf32> to vector<16x64xf32>
    %c320 = arith.constant 320 : index
    %c0_50 = arith.constant 0 : index
    %130 = vector.load %arg0[%c320, %c0_50] : memref<1232x128xf32, #tpu.memory_space<vmem>>, vector<64x32xf32>
    %cst_51 = arith.constant dense<0.000000e+00> : vector<16x32xf32>
    %131 = tpu.matmul %129, %130, %cst_51 {dimension_numbers = #tpu.dot_dimension_numbers<[1], [0], [0], [1], [0, 0, 1, 1], [], []>} : vector<16x64xf32>, vector<64x32xf32>, vector<16x32xf32> -> vector<16x32xf32>
    %c384 = arith.constant 384 : index
    %c0_52 = arith.constant 0 : index
    %132 = vector.load %arg0[%c384, %c0_52] : memref<1232x128xf32, #tpu.memory_space<vmem>>, vector<16x32xf32>
    %133 = arith.addf %131, %132 : vector<16x32xf32>
    %134 = vector.extract_strided_slice %128 {offsets = [16, 0], sizes = [16, 64], strides = [1, 1]} : vector<32x64xf32> to vector<16x64xf32>
    %c768 = arith.constant 768 : index
    %c0_53 = arith.constant 0 : index
    %135 = vector.load %arg0[%c768, %c0_53] : memref<1232x128xf32, #tpu.memory_space<vmem>>, vector<64x32xf32>
    %cst_54 = arith.constant dense<0.000000e+00> : vector<16x32xf32>
    %136 = tpu.matmul %134, %135, %cst_54 {dimension_numbers = #tpu.dot_dimension_numbers<[1], [0], [0], [1], [0, 0, 1, 1], [], []>} : vector<16x64xf32>, vector<64x32xf32>, vector<16x32xf32> -> vector<16x32xf32>
    %c832 = arith.constant 832 : index
    %c0_55 = arith.constant 0 : index
    %137 = vector.load %arg0[%c832, %c0_55] : memref<1232x128xf32, #tpu.memory_space<vmem>>, vector<16x32xf32>
    %138 = arith.addf %136, %137 : vector<16x32xf32>
    %139 = tpu.concatenate %133, %138 in 0 : vector<16x32xf32>, vector<16x32xf32> -> vector<32x32xf32>
    %140 = arith.addf %88, %139 : vector<32x32xf32>
    %cst_56 = arith.constant dense<0.000000e+00> : vector<32xf32>
    %141 = vector.multi_reduction <add>, %140, %cst_56 [1] : vector<32x32xf32> to vector<32xf32>
    %142 = vector.shape_cast %141 : vector<32xf32> to vector<32x1xf32>
    %cst_57 = arith.constant 3.200000e+01 : f32
    %143 = vector.broadcast %cst_57 : f32 to vector<32x1xf32>
    %144 = arith.divf %142, %143 : vector<32x1xf32>
    %145 = vector.broadcast %144 : vector<32x1xf32> to vector<32x32xf32>
    %146 = arith.subf %140, %145 : vector<32x32xf32>
    %147 = arith.mulf %146, %146 : vector<32x32xf32>
    %cst_58 = arith.constant dense<0.000000e+00> : vector<32xf32>
    %148 = vector.multi_reduction <add>, %147, %cst_58 [1] : vector<32x32xf32> to vector<32xf32>
    %149 = vector.shape_cast %148 : vector<32xf32> to vector<32x1xf32>
    %cst_59 = arith.constant 3.200000e+01 : f32
    %150 = vector.broadcast %cst_59 : f32 to vector<32x1xf32>
    %151 = arith.divf %149, %150 : vector<32x1xf32>
    %cst_60 = arith.constant 9.99999974E-6 : f32
    %152 = vector.broadcast %cst_60 : f32 to vector<32x1xf32>
    %153 = arith.addf %151, %152 : vector<32x1xf32>
    %154 = math.rsqrt %153 : vector<32x1xf32>
    %155 = vector.broadcast %154 : vector<32x1xf32> to vector<32x32xf32>
    %156 = arith.mulf %146, %155 : vector<32x32xf32>
    %157 = vector.extract_strided_slice %156 {offsets = [0, 0], sizes = [16, 32], strides = [1, 1]} : vector<32x32xf32> to vector<16x32xf32>
    %c400 = arith.constant 400 : index
    %c0_61 = arith.constant 0 : index
    %158 = vector.load %arg0[%c400, %c0_61] : memref<1232x128xf32, #tpu.memory_space<vmem>>, vector<32x96xf32>
    %cst_62 = arith.constant dense<0.000000e+00> : vector<16x96xf32>
    %159 = tpu.matmul %157, %158, %cst_62 {dimension_numbers = #tpu.dot_dimension_numbers<[1], [0], [0], [1], [0, 0, 1, 1], [], []>} : vector<16x32xf32>, vector<32x96xf32>, vector<16x96xf32> -> vector<16x96xf32>
    %c432 = arith.constant 432 : index
    %c0_63 = arith.constant 0 : index
    %160 = vector.load %arg0[%c432, %c0_63] : memref<1232x128xf32, #tpu.memory_space<vmem>>, vector<16x96xf32>
    %161 = arith.addf %159, %160 : vector<16x96xf32>
    %162 = vector.extract_strided_slice %156 {offsets = [16, 0], sizes = [16, 32], strides = [1, 1]} : vector<32x32xf32> to vector<16x32xf32>
    %c848 = arith.constant 848 : index
    %c0_64 = arith.constant 0 : index
    %163 = vector.load %arg0[%c848, %c0_64] : memref<1232x128xf32, #tpu.memory_space<vmem>>, vector<32x96xf32>
    %cst_65 = arith.constant dense<0.000000e+00> : vector<16x96xf32>
    %164 = tpu.matmul %162, %163, %cst_65 {dimension_numbers = #tpu.dot_dimension_numbers<[1], [0], [0], [1], [0, 0, 1, 1], [], []>} : vector<16x32xf32>, vector<32x96xf32>, vector<16x96xf32> -> vector<16x96xf32>
    %c880 = arith.constant 880 : index
    %c0_66 = arith.constant 0 : index
    %165 = vector.load %arg0[%c880, %c0_66] : memref<1232x128xf32, #tpu.memory_space<vmem>>, vector<16x96xf32>
    %166 = arith.addf %164, %165 : vector<16x96xf32>
    %167 = tpu.concatenate %161, %166 in 0 : vector<16x96xf32>, vector<16x96xf32> -> vector<32x96xf32>
    %c448 = arith.constant 448 : index
    %c0_67 = arith.constant 0 : index
    %168 = vector.load %arg0[%c448, %c0_67] : memref<1232x128xf32, #tpu.memory_space<vmem>>, vector<32x32xf32>
    %c896 = arith.constant 896 : index
    %c0_68 = arith.constant 0 : index
    %169 = vector.load %arg0[%c896, %c0_68] : memref<1232x128xf32, #tpu.memory_space<vmem>>, vector<32x32xf32>
    %c480 = arith.constant 480 : index
    %c0_69 = arith.constant 0 : index
    %170 = vector.load %arg0[%c480, %c0_69] : memref<1232x128xf32, #tpu.memory_space<vmem>>, vector<16x32xf32>
    %c928 = arith.constant 928 : index
    %c0_70 = arith.constant 0 : index
    %171 = vector.load %arg0[%c928, %c0_70] : memref<1232x128xf32, #tpu.memory_space<vmem>>, vector<16x32xf32>
    %172 = vector.extract_strided_slice %167 {offsets = [0, 0], sizes = [32, 16], strides = [1, 1]} : vector<32x96xf32> to vector<32x16xf32>
    %173 = vector.extract_strided_slice %167 {offsets = [0, 32], sizes = [32, 16], strides = [1, 1]} : vector<32x96xf32> to vector<32x16xf32>
    %174 = vector.extract_strided_slice %167 {offsets = [0, 64], sizes = [32, 16], strides = [1, 1]} : vector<32x96xf32> to vector<32x16xf32>
    "tpu.trace_start"() <{level = 10 : i32, message = "nd,md->nm"}> : () -> ()
    %cst_71 = arith.constant dense<0.000000e+00> : vector<32x32xf32>
    %175 = tpu.matmul %172, %173, %cst_71 {dimension_numbers = #tpu.dot_dimension_numbers<[1], [1], [0], [0], [0, 0, 1, 0], [], []>} : vector<32x16xf32>, vector<32x16xf32>, vector<32x32xf32> -> vector<32x32xf32>
    "tpu.trace_stop"() : () -> ()
    %176 = arith.addf %175, %15 : vector<32x32xf32>
    %177 = math.exp %176 : vector<32x32xf32>
    %cst_72 = arith.constant dense<0.000000e+00> : vector<32xf32>
    %178 = vector.multi_reduction <add>, %177, %cst_72 [1] : vector<32x32xf32> to vector<32xf32>
    %179 = vector.shape_cast %178 : vector<32xf32> to vector<32x1xf32>
    %180 = tpu.reciprocal %179 {approx = true} : vector<32x1xf32> -> vector<32x1xf32>
    %181 = vector.broadcast %180 : vector<32x1xf32> to vector<32x32xf32>
    %182 = arith.mulf %177, %181 : vector<32x32xf32>
    %cst_73 = arith.constant dense<0.000000e+00> : vector<32x16xf32>
    %183 = tpu.matmul %182, %174, %cst_73 {dimension_numbers = #tpu.dot_dimension_numbers<[1], [0], [0], [1], [0, 0, 1, 1], [], []>} : vector<32x32xf32>, vector<32x16xf32>, vector<32x16xf32> -> vector<32x16xf32>
    %184 = vector.extract_strided_slice %183 {offsets = [0, 0], sizes = [16, 16], strides = [1, 1]} : vector<32x16xf32> to vector<16x16xf32>
    %185 = vector.extract_strided_slice %168 {offsets = [0, 0], sizes = [16, 32], strides = [1, 1]} : vector<32x32xf32> to vector<16x32xf32>
    %cst_74 = arith.constant dense<0.000000e+00> : vector<16x32xf32>
    %186 = tpu.matmul %184, %185, %cst_74 {dimension_numbers = #tpu.dot_dimension_numbers<[1], [0], [0], [1], [0, 0, 1, 1], [], []>} : vector<16x16xf32>, vector<16x32xf32>, vector<16x32xf32> -> vector<16x32xf32>
    %187 = arith.addf %170, %186 : vector<16x32xf32>
    %188 = vector.extract_strided_slice %183 {offsets = [16, 0], sizes = [16, 16], strides = [1, 1]} : vector<32x16xf32> to vector<16x16xf32>
    %189 = vector.extract_strided_slice %169 {offsets = [0, 0], sizes = [16, 32], strides = [1, 1]} : vector<32x32xf32> to vector<16x32xf32>
    %cst_75 = arith.constant dense<0.000000e+00> : vector<16x32xf32>
    %190 = tpu.matmul %188, %189, %cst_75 {dimension_numbers = #tpu.dot_dimension_numbers<[1], [0], [0], [1], [0, 0, 1, 1], [], []>} : vector<16x16xf32>, vector<16x32xf32>, vector<16x32xf32> -> vector<16x32xf32>
    %191 = arith.addf %171, %190 : vector<16x32xf32>
    %192 = vector.extract_strided_slice %167 {offsets = [0, 16], sizes = [32, 16], strides = [1, 1]} : vector<32x96xf32> to vector<32x16xf32>
    %193 = vector.extract_strided_slice %167 {offsets = [0, 48], sizes = [32, 16], strides = [1, 1]} : vector<32x96xf32> to vector<32x16xf32>
    %194 = vector.extract_strided_slice %167 {offsets = [0, 80], sizes = [32, 16], strides = [1, 1]} : vector<32x96xf32> to vector<32x16xf32>
    "tpu.trace_start"() <{level = 10 : i32, message = "nd,md->nm"}> : () -> ()
    %cst_76 = arith.constant dense<0.000000e+00> : vector<32x32xf32>
    %195 = tpu.matmul %192, %193, %cst_76 {dimension_numbers = #tpu.dot_dimension_numbers<[1], [1], [0], [0], [0, 0, 1, 0], [], []>} : vector<32x16xf32>, vector<32x16xf32>, vector<32x32xf32> -> vector<32x32xf32>
    "tpu.trace_stop"() : () -> ()
    %196 = arith.addf %195, %15 : vector<32x32xf32>
    %197 = math.exp %196 : vector<32x32xf32>
    %cst_77 = arith.constant dense<0.000000e+00> : vector<32xf32>
    %198 = vector.multi_reduction <add>, %197, %cst_77 [1] : vector<32x32xf32> to vector<32xf32>
    %199 = vector.shape_cast %198 : vector<32xf32> to vector<32x1xf32>
    %200 = tpu.reciprocal %199 {approx = true} : vector<32x1xf32> -> vector<32x1xf32>
    %201 = vector.broadcast %200 : vector<32x1xf32> to vector<32x32xf32>
    %202 = arith.mulf %197, %201 : vector<32x32xf32>
    %cst_78 = arith.constant dense<0.000000e+00> : vector<32x16xf32>
    %203 = tpu.matmul %202, %194, %cst_78 {dimension_numbers = #tpu.dot_dimension_numbers<[1], [0], [0], [1], [0, 0, 1, 1], [], []>} : vector<32x32xf32>, vector<32x16xf32>, vector<32x16xf32> -> vector<32x16xf32>
    %204 = vector.extract_strided_slice %203 {offsets = [0, 0], sizes = [16, 16], strides = [1, 1]} : vector<32x16xf32> to vector<16x16xf32>
    %205 = vector.extract_strided_slice %168 {offsets = [16, 0], sizes = [16, 32], strides = [1, 1]} : vector<32x32xf32> to vector<16x32xf32>
    %cst_79 = arith.constant dense<0.000000e+00> : vector<16x32xf32>
    %206 = tpu.matmul %204, %205, %cst_79 {dimension_numbers = #tpu.dot_dimension_numbers<[1], [0], [0], [1], [0, 0, 1, 1], [], []>} : vector<16x16xf32>, vector<16x32xf32>, vector<16x32xf32> -> vector<16x32xf32>
    %207 = arith.addf %187, %206 : vector<16x32xf32>
    %208 = vector.extract_strided_slice %203 {offsets = [16, 0], sizes = [16, 16], strides = [1, 1]} : vector<32x16xf32> to vector<16x16xf32>
    %209 = vector.extract_strided_slice %169 {offsets = [16, 0], sizes = [16, 32], strides = [1, 1]} : vector<32x32xf32> to vector<16x32xf32>
    %cst_80 = arith.constant dense<0.000000e+00> : vector<16x32xf32>
    %210 = tpu.matmul %208, %209, %cst_80 {dimension_numbers = #tpu.dot_dimension_numbers<[1], [0], [0], [1], [0, 0, 1, 1], [], []>} : vector<16x16xf32>, vector<16x32xf32>, vector<16x32xf32> -> vector<16x32xf32>
    %211 = arith.addf %191, %210 : vector<16x32xf32>
    %212 = tpu.concatenate %207, %211 in 0 : vector<16x32xf32>, vector<16x32xf32> -> vector<32x32xf32>
    %213 = arith.addf %140, %212 : vector<32x32xf32>
    %cst_81 = arith.constant dense<0.000000e+00> : vector<32xf32>
    %214 = vector.multi_reduction <add>, %213, %cst_81 [1] : vector<32x32xf32> to vector<32xf32>
    %215 = vector.shape_cast %214 : vector<32xf32> to vector<32x1xf32>
    %cst_82 = arith.constant 3.200000e+01 : f32
    %216 = vector.broadcast %cst_82 : f32 to vector<32x1xf32>
    %217 = arith.divf %215, %216 : vector<32x1xf32>
    %218 = vector.broadcast %217 : vector<32x1xf32> to vector<32x32xf32>
    %219 = arith.subf %213, %218 : vector<32x32xf32>
    %220 = arith.mulf %219, %219 : vector<32x32xf32>
    %cst_83 = arith.constant dense<0.000000e+00> : vector<32xf32>
    %221 = vector.multi_reduction <add>, %220, %cst_83 [1] : vector<32x32xf32> to vector<32xf32>
    %222 = vector.shape_cast %221 : vector<32xf32> to vector<32x1xf32>
    %cst_84 = arith.constant 3.200000e+01 : f32
    %223 = vector.broadcast %cst_84 : f32 to vector<32x1xf32>
    %224 = arith.divf %222, %223 : vector<32x1xf32>
    %cst_85 = arith.constant 9.99999974E-6 : f32
    %225 = vector.broadcast %cst_85 : f32 to vector<32x1xf32>
    %226 = arith.addf %224, %225 : vector<32x1xf32>
    %227 = math.rsqrt %226 : vector<32x1xf32>
    %228 = vector.broadcast %227 : vector<32x1xf32> to vector<32x32xf32>
    %229 = arith.mulf %219, %228 : vector<32x32xf32>
    %230 = vector.extract_strided_slice %229 {offsets = [0, 0], sizes = [16, 32], strides = [1, 1]} : vector<32x32xf32> to vector<16x32xf32>
    %c496 = arith.constant 496 : index
    %c0_86 = arith.constant 0 : index
    %231 = vector.load %arg0[%c496, %c0_86] : memref<1232x128xf32, #tpu.memory_space<vmem>>, vector<32x64xf32>
    %cst_87 = arith.constant dense<0.000000e+00> : vector<16x64xf32>
    %232 = tpu.matmul %230, %231, %cst_87 {dimension_numbers = #tpu.dot_dimension_numbers<[1], [0], [0], [1], [0, 0, 1, 1], [], []>} : vector<16x32xf32>, vector<32x64xf32>, vector<16x64xf32> -> vector<16x64xf32>
    %c528 = arith.constant 528 : index
    %c0_88 = arith.constant 0 : index
    %233 = vector.load %arg0[%c528, %c0_88] : memref<1232x128xf32, #tpu.memory_space<vmem>>, vector<16x64xf32>
    %234 = arith.addf %232, %233 : vector<16x64xf32>
    %235 = vector.extract_strided_slice %229 {offsets = [16, 0], sizes = [16, 32], strides = [1, 1]} : vector<32x32xf32> to vector<16x32xf32>
    %c944 = arith.constant 944 : index
    %c0_89 = arith.constant 0 : index
    %236 = vector.load %arg0[%c944, %c0_89] : memref<1232x128xf32, #tpu.memory_space<vmem>>, vector<32x64xf32>
    %cst_90 = arith.constant dense<0.000000e+00> : vector<16x64xf32>
    %237 = tpu.matmul %235, %236, %cst_90 {dimension_numbers = #tpu.dot_dimension_numbers<[1], [0], [0], [1], [0, 0, 1, 1], [], []>} : vector<16x32xf32>, vector<32x64xf32>, vector<16x64xf32> -> vector<16x64xf32>
    %c976 = arith.constant 976 : index
    %c0_91 = arith.constant 0 : index
    %238 = vector.load %arg0[%c976, %c0_91] : memref<1232x128xf32, #tpu.memory_space<vmem>>, vector<16x64xf32>
    %239 = arith.addf %237, %238 : vector<16x64xf32>
    %240 = tpu.concatenate %234, %239 in 0 : vector<16x64xf32>, vector<16x64xf32> -> vector<32x64xf32>
    %cst_92 = arith.constant 5.000000e-01 : f32
    %241 = vector.broadcast %cst_92 : f32 to vector<32x64xf32>
    %242 = arith.mulf %241, %240 : vector<32x64xf32>
    %cst_93 = arith.constant 4.471500e-02 : f32
    %243 = vector.broadcast %cst_93 : f32 to vector<32x64xf32>
    %244 = arith.mulf %243, %240 : vector<32x64xf32>
    %245 = arith.mulf %244, %240 : vector<32x64xf32>
    %246 = arith.mulf %245, %240 : vector<32x64xf32>
    %247 = arith.addf %240, %246 : vector<32x64xf32>
    %cst_94 = arith.constant 0.797884583 : f32
    %248 = vector.broadcast %cst_94 : f32 to vector<32x64xf32>
    %249 = arith.mulf %248, %247 : vector<32x64xf32>
    %250 = math.tanh %249 : vector<32x64xf32>
    %cst_95 = arith.constant 1.000000e+00 : f32
    %251 = vector.broadcast %cst_95 : f32 to vector<32x64xf32>
    %252 = arith.addf %251, %250 : vector<32x64xf32>
    %253 = arith.mulf %242, %252 : vector<32x64xf32>
    %254 = vector.extract_strided_slice %253 {offsets = [0, 0], sizes = [16, 64], strides = [1, 1]} : vector<32x64xf32> to vector<16x64xf32>
    %c544 = arith.constant 544 : index
    %c0_96 = arith.constant 0 : index
    %255 = vector.load %arg0[%c544, %c0_96] : memref<1232x128xf32, #tpu.memory_space<vmem>>, vector<64x32xf32>
    %cst_97 = arith.constant dense<0.000000e+00> : vector<16x32xf32>
    %256 = tpu.matmul %254, %255, %cst_97 {dimension_numbers = #tpu.dot_dimension_numbers<[1], [0], [0], [1], [0, 0, 1, 1], [], []>} : vector<16x64xf32>, vector<64x32xf32>, vector<16x32xf32> -> vector<16x32xf32>
    %c608 = arith.constant 608 : index
    %c0_98 = arith.constant 0 : index
    %257 = vector.load %arg0[%c608, %c0_98] : memref<1232x128xf32, #tpu.memory_space<vmem>>, vector<16x32xf32>
    %258 = arith.addf %256, %257 : vector<16x32xf32>
    %259 = vector.extract_strided_slice %253 {offsets = [16, 0], sizes = [16, 64], strides = [1, 1]} : vector<32x64xf32> to vector<16x64xf32>
    %c992 = arith.constant 992 : index
    %c0_99 = arith.constant 0 : index
    %260 = vector.load %arg0[%c992, %c0_99] : memref<1232x128xf32, #tpu.memory_space<vmem>>, vector<64x32xf32>
    %cst_100 = arith.constant dense<0.000000e+00> : vector<16x32xf32>
    %261 = tpu.matmul %259, %260, %cst_100 {dimension_numbers = #tpu.dot_dimension_numbers<[1], [0], [0], [1], [0, 0, 1, 1], [], []>} : vector<16x64xf32>, vector<64x32xf32>, vector<16x32xf32> -> vector<16x32xf32>
    %c1056 = arith.constant 1056 : index
    %c0_101 = arith.constant 0 : index
    %262 = vector.load %arg0[%c1056, %c0_101] : memref<1232x128xf32, #tpu.memory_space<vmem>>, vector<16x32xf32>
    %263 = arith.addf %261, %262 : vector<16x32xf32>
    %264 = tpu.concatenate %258, %263 in 0 : vector<16x32xf32>, vector<16x32xf32> -> vector<32x32xf32>
    %265 = arith.addf %213, %264 : vector<32x32xf32>
    %c1072 = arith.constant 1072 : index
    %c0_102 = arith.constant 0 : index
    %266 = vector.load %arg0[%c1072, %c0_102] : memref<1232x128xf32, #tpu.memory_space<vmem>>, vector<64x64xf32>
    %267 = vector.extract_strided_slice %265 {offsets = [0, 0], sizes = [16, 32], strides = [1, 1]} : vector<32x32xf32> to vector<16x32xf32>
    %268 = vector.extract_strided_slice %266 {offsets = [0, 0], sizes = [32, 64], strides = [1, 1]} : vector<64x64xf32> to vector<32x64xf32>
    %cst_103 = arith.constant dense<0.000000e+00> : vector<16x64xf32>
    %269 = tpu.matmul %267, %268, %cst_103 {dimension_numbers = #tpu.dot_dimension_numbers<[1], [0], [0], [1], [0, 0, 1, 1], [], []>} : vector<16x32xf32>, vector<32x64xf32>, vector<16x64xf32> -> vector<16x64xf32>
    %270 = vector.extract_strided_slice %265 {offsets = [16, 0], sizes = [16, 32], strides = [1, 1]} : vector<32x32xf32> to vector<16x32xf32>
    %271 = vector.extract_strided_slice %266 {offsets = [32, 0], sizes = [32, 64], strides = [1, 1]} : vector<64x64xf32> to vector<32x64xf32>
    %cst_104 = arith.constant dense<0.000000e+00> : vector<16x64xf32>
    %272 = tpu.matmul %270, %271, %cst_104 {dimension_numbers = #tpu.dot_dimension_numbers<[1], [0], [0], [1], [0, 0, 1, 1], [], []>} : vector<16x32xf32>, vector<32x64xf32>, vector<16x64xf32> -> vector<16x64xf32>
    %273 = arith.addf %269, %272 : vector<16x64xf32>
    %c1136 = arith.constant 1136 : index
    %c0_105 = arith.constant 0 : index
    %274 = vector.load %arg0[%c1136, %c0_105] : memref<1232x128xf32, #tpu.memory_space<vmem>>, vector<16x64xf32>
    %275 = arith.addf %273, %274 : vector<16x64xf32>
    %cst_106 = arith.constant 5.000000e-01 : f32
    %276 = vector.broadcast %cst_106 : f32 to vector<16x64xf32>
    %277 = arith.mulf %276, %275 : vector<16x64xf32>
    %cst_107 = arith.constant 4.471500e-02 : f32
    %278 = vector.broadcast %cst_107 : f32 to vector<16x64xf32>
    %279 = arith.mulf %278, %275 : vector<16x64xf32>
    %280 = arith.mulf %279, %275 : vector<16x64xf32>
    %281 = arith.mulf %280, %275 : vector<16x64xf32>
    %282 = arith.addf %275, %281 : vector<16x64xf32>
    %cst_108 = arith.constant 0.797884583 : f32
    %283 = vector.broadcast %cst_108 : f32 to vector<16x64xf32>
    %284 = arith.mulf %283, %282 : vector<16x64xf32>
    %285 = math.tanh %284 : vector<16x64xf32>
    %cst_109 = arith.constant 1.000000e+00 : f32
    %286 = vector.broadcast %cst_109 : f32 to vector<16x64xf32>
    %287 = arith.addf %286, %285 : vector<16x64xf32>
    %288 = arith.mulf %277, %287 : vector<16x64xf32>
    %c1152 = arith.constant 1152 : index
    %c0_110 = arith.constant 0 : index
    %289 = vector.load %arg0[%c1152, %c0_110] : memref<1232x128xf32, #tpu.memory_space<vmem>>, vector<64x128xf32>
    %cst_111 = arith.constant dense<0.000000e+00> : vector<16x128xf32>
    %290 = tpu.matmul %288, %289, %cst_111 {dimension_numbers = #tpu.dot_dimension_numbers<[1], [0], [0], [1], [0, 0, 1, 1], [], []>} : vector<16x64xf32>, vector<64x128xf32>, vector<16x128xf32> -> vector<16x128xf32>
    %c1216 = arith.constant 1216 : index
    %c0_112 = arith.constant 0 : index
    %291 = vector.load %arg0[%c1216, %c0_112] : memref<1232x128xf32, #tpu.memory_space<vmem>>, vector<16x128xf32>
    %292 = arith.addf %290, %291 : vector<16x128xf32>
    %c0_113 = arith.constant 0 : index
    %c0_114 = arith.constant 0 : index
    %293 = vector.load %arg2[%c0_113, %c0_114] : memref<16x128xf32, #tpu.memory_space<vmem>>, vector<16x128xf32>
    tpu.vector_store %arg2[%c0_113, %c0_114], %292 {strides = array<i32>} : memref<16x128xf32, #tpu.memory_space<vmem>>, vector<16x128xf32>,
    return
  }
}

</mosaic_0001>

<llo_original>
// kernel: tile.5
$region0: #{tile.5}
  %s0 = inlined_call_operand.vmem [shape: f32[2,8], index: 0, kind: input, shape index: {}]
  %s1 = inlined_call_operand.vmem [shape: f32[16], index: 1, kind: output, shape index: {}]
  $region1: #{tile.5} parent=0
    #allocation0 [shape = 'u8[4096]{0}', space=vmem, size = 0x1000, scoped, tag = 'scoped mem for output reshape']
    #allocation1 [shape = 'u8[4096]{0}', space=vmem, size = 0x1000, scoped, tag = 'scoped mem for input reshape']
    %s3 = ssub.s32 4, 1
    %v4 = vld [vmem:[%s0] sm:%s3]
    %5 = vst [vmem:[#allocation1] sm:%s3] %v4
    %v6 = vld [vmem:[#allocation1] sm:$0x1]
    %vm7 = vcmask 64512
    %8 = vst.msk [vmem:[#allocation0] sm:$0x1] %vm7, %v6
    %s9 = scalar_lea.vmem [#allocation1], 1
    %v10 = vld [vmem:[%s9] sm:$0x1]
    %11 = vrot.lane.b32.xlu0 %v10, 8
    %v12 = vpop.permute.xlu0 %11
    %vm13 = vcmask 130112
    %14 = vst.msk [vmem:[#allocation0] sm:$0x1] %vm13, %v12
    %s16 = ssub.s32 2, 1
    %v17 = vld [vmem:[#allocation0] sm:%s16]
    %s19 = ssub.s32 2, 1
    %20 = vst [vmem:[%s1] sm:%s19] %v17

// kernel: tile.6
$region0: #{tile.6}
  #allocation0 [shape = 's32[1]{0}', space=sflag, size = 0x4, scoped, tag = 'scoped memory for tile.6']
  %s0 = inlined_call_operand.vmem [shape: f32[16], index: 0, kind: input, shape index: {}]
  %s1 = inlined_call_operand.vmem [shape: f32[2,16], index: 1, kind: output, shape index: {}]
  // Predicated region
  $region2: #{tile.6} parent=0 // pred_check
    _
  $region3: #{tile.6} parent=0 // pred_check_branch
    %3 = sbr.rel (0) target = $region5
  $region4: #{tile.6} parent=0 // pred_region
    _
  $region5: #{tile.6} parent=0 // pred_fallthru
    _
  %v4 = vld [vmem:[%s0] ss:$0 sm:$0xff]
  %5 = vst [vmem:[%s1] sm:$0x3] %v4

// kernel: forward.1
$region0: #{forward.1}
  #allocation0 [shape = 'u32[]', space=smem, size = 0x4, offset = 0x4, fixed_abs, tag = 'smem constant byte address 0x4 - core index']
  #allocation1 [shape = 'u32[72,128]{1,0:T(1,128)}', space=vmem, size = 0x9000, scoped, tag = 'internal scratch']
  %s0 = inlined_call_operand.hbm [shape: f32[1232,128], index: 0, kind: input, shape index: {}]
  %s1 = inlined_call_operand.vmem [shape: f32[64,128], index: 1, kind: input, shape index: {}]
  %s2 = inlined_call_operand.vmem [shape: f32[16,128], index: 2, kind: output, shape index: {}]
  %s3 = sld [smem:[#allocation0]]
  $region22: #{forward.1} parent=0
    _
  %s5 = ssub.s32 1, %s3
  %s6 = scalar_select 0, %s5, %s3
  $region1: #{forward.1} parent=0
    #allocation2 [shape = 'u8[630784]{0}', space=vmem, size = 0x9a000, scoped, tag = 'input window, operand 0, single buffered']
    #allocation3 [shape = 's32[1]{0}', space=sflag, size = 0x4, scoped, tag = 'scoped memory for forward.1']
    %7 = vsyncpa [#allocation3], 0
    // Predicated region
    $region2: #{forward.1} parent=1 // pred_check
      _
    $region3: #{forward.1} parent=1 // pred_check_branch
      %9 = sbr.rel (0) target = $region5
    $region4: #{forward.1} parent=1 // pred_region
      %11 = vsyncadd [#allocation3], 0
      %s12 = sshll.u32 %s0, 4
      %s13 = int_to_ptr.hbm [resolvable:$true] %s12
      %s14 = sshll.u32 [#allocation2], 4
      %s15 = int_to_ptr.vmem [resolvable:$true] %s14
      %20 = dma.hbm_to_vmem [thread:$0]  %s13, 19712, %s15, [#allocation3], 128, 128, 8
    $region5: #{forward.1} parent=1 // pred_fallthru
      _
    // Predicated region
    $region6: #{forward.1} parent=1 // pred_check
      _
    $region7: #{forward.1} parent=1 // pred_check_branch
      %22 = sbr.rel (0) target = $region9
    $region8: #{forward.1} parent=1 // pred_region
      _
    $region9: #{forward.1} parent=1 // pred_fallthru
      _
    // Predicated region
    $region10: #{forward.1} parent=1 // pred_check
      _
    $region11: #{forward.1} parent=1 // pred_check_branch
      %24 = sbr.rel (0) target = $region13
    $region12: #{forward.1} parent=1 // pred_region
      %26 = dma.done [#allocation3], 19712
    $region13: #{forward.1} parent=1 // pred_fallthru
      _
    %v27 = vld [vmem:[#allocation2] sm:$0xff]
    %v28 = vld [vmem:[#allocation2 + $0x8] sm:$0xff]
    %v29 = vld [vmem:[%s1] sm:$0xff]
    %v30 = vld [vmem:[%s1 + $0x8] sm:$0xff]
    %v31 = vld [vmem:[%s1 + $0x10] sm:$0xff]
    %v32 = vld [vmem:[%s1 + $0x18] sm:$0xff]
    %vm33 = vcmask 130048
    %v35 = vsel %vm33, %v29, 0
    %v38 = vsel %vm33, %v30, 0
    %v41 = vsel %vm33, %v31, 0
    %v44 = vsel %vm33, %v32, 0
    %46 = vmatpush.msra.mxu0 0.0
    %47 = vmatpush.msra.mxu0 0.0
    %48 = vmatpush.msra.mxu0 0.0
    %49 = vmatpush.msra.mxu0 0.0
    %50 = vmatpush.msra.mxu0 0.0
    %51 = vmatpush.msra.mxu0 0.0
    %52 = vmatpush.msra.mxu0 0.0
    %53 = vmatpush.msra.mxu0 0.0
    %54 = vmatpush.msra.mxu0 0.0
    %55 = vmatpush.msra.mxu0 0.0
    %56 = vmatpush.msra.mxu0 0.0
    %57 = vmatpush.msra.mxu0 0.0
    %58 = vmatpush.msra.mxu0 0.0
    %59 = vmatpush.msra.mxu0 0.0
    %60 = vmatpush.msra.mxu0 %v28
    %61 = vmatpush.msra.mxu0 %v27
    %62 = vmatmul.f32.gmra.mxu0 %v35
    %v63 = vpop.f32.mrf.mxu0
    %v64 = vadd.f32 0.0, %v63
    %65 = vmatmul.f32.gmra.mxu0 %v38
    %v66 = vpop.f32.mrf.mxu0
    %v67 = vadd.f32 0.0, %v66
    %68 = vmatmul.f32.gmra.mxu0 %v41
    %v69 = vpop.f32.mrf.mxu0
    %v70 = vadd.f32 0.0, %v69
    %71 = vmatmul.f32.gmra.mxu0 %v44
    %v72 = vpop.f32.mrf.mxu0
    %v73 = vadd.f32 0.0, %v72
    %74 = vdwg.mxu0
    %v75 = vld [vmem:[%s1 + $0x20] sm:$0xff]
    %v76 = vld [vmem:[%s1 + $0x28] sm:$0xff]
    %v77 = vld [vmem:[%s1 + $0x30] sm:$0xff]
    %v78 = vld [vmem:[%s1 + $0x38] sm:$0xff]
    %v79 = vld [vmem:[#allocation2 + $0x10] sm:$0xff]
    %v80 = vld [vmem:[#allocation2 + $0x18] sm:$0xff]
    %v81 = vld [vmem:[#allocation2 + $0x20] sm:$0xff]
    %v82 = vld [vmem:[#allocation2 + $0x28] sm:$0xff]
    %v83 = vmul.f32 %v75, %v79
    %v84 = vmul.f32 %v76, %v80
    %v85 = vmul.f32 %v77, %v81
    %v86 = vmul.f32 %v78, %v82
    %v87 = vld [vmem:[#allocation2 + $0x30] sm:$0xff]
    %v88 = vld [vmem:[#allocation2 + $0x38] sm:$0xff]
    %v89 = vld [vmem:[#allocation2 + $0x40] sm:$0xff]
    %v90 = vld [vmem:[#allocation2 + $0x48] sm:$0xff]
    %v91 = vadd.f32 %v83, %v87
    %v92 = vadd.f32 %v84, %v88
    %v93 = vadd.f32 %v85, %v89
    %v94 = vadd.f32 %v86, %v90
    %v95 = vand.u32 2147483647, %v91
    %vm96 = vcmp.le.f32.partialorder %v95, 0.7853982
    %vm97 = vcmp.lt.s32.totalorder %v91, 0
    %v98 = vand.u32 %v91, 2139095040
    %v99 = vshrl.u32 %v98, 23
    %v100 = vsub.s32 %v99, 127
    %v101 = vand.u32 2147483647, %v91
    %v102 = vand.u32 %v101, 8388607
    %v103 = vor.u32 %v102, 8388608
    %v104 = vsub.s32 0, %v103
    %v105 = vadd.s32 %v100, 1
    %vm106 = vcmp.gt.s32.totalorder %v105, 0
    %v107 = vsel %vm106, %v105, 0
    %v108 = vshrl.u32 %v107, 5
    %v109 = vand.u32 %v107, 31
    %v110 = vsub.s32 32, %v109
    %v111 = vshrl.u32 683565275, %v110
    %v112 = vshll.u32 683565275, %v109
    %v113 = vshrl.u32 2475754826, %v110
    %v114 = vor.u32 %v112, %v113
    %v115 = vshll.u32 2475754826, %v109
    %v116 = vshrl.u32 2131351028, %v110
    %v117 = vor.u32 %v115, %v116
    %v118 = vshll.u32 2131351028, %v109
    %v119 = vshrl.u32 2102212464, %v110
    %v120 = vor.u32 %v118, %v119
    %v121 = vshll.u32 2102212464, %v109
    %v122 = vshrl.u32 920167782, %v110
    %v123 = vor.u32 %v121, %v122
    %v124 = vshll.u32 920167782, %v109
    %v125 = vshrl.u32 1326507024, %v110
    %v126 = vor.u32 %v124, %v125
    %vm127 = vcmp.lt.s32.totalorder %v108, 1
    %vm128 = vcmp.lt.s32.totalorder %v108, 2
    %vm129 = vcmp.lt.s32.totalorder %v108, 3
    %vm130 = vcmp.lt.s32.totalorder %v108, 4
    %v131 = vsel %vm127, %v111, %v114
    %v132 = vsel %vm130, %v120, 2102212464
    %v133 = vsel %vm129, %v117, %v132
    %v134 = vsel %vm128, %v131, %v133
    %v135 = vsel %vm127, %v114, %v117
    %v136 = vsel %vm130, %v123, 920167782
    %v137 = vsel %vm129, %v120, %v136
    %v138 = vsel %vm128, %v135, %v137
    %v139 = vsel %vm127, %v117, %v120
    %v140 = vsel %vm130, %v126, 1326507024
    %v141 = vsel %vm129, %v123, %v140
    %v142 = vsel %vm128, %v139, %v141
    %v143 = vshll.u32 %v103, 8
    %v144 = vand.u32 %v143, 65535
    %v145 = vshrl.u32 %v143, 16
    %v146 = vand.u32 %v142, 65535
    %v147 = vshrl.u32 %v142, 16
    %v148 = vmul.u32 %v144, %v146
    %v149 = vmul.u32 %v144, %v147
    %v150 = vmul.u32 %v145, %v146
    %v151 = vmul.u32 %v145, %v147
    %v152 = vshll.u32 %v149, 16
    %v153 = vshrl.u32 %v149, 16
    %v154 = vshll.u32 %v150, 16
    %v155 = vshrl.u32 %v150, 16
    %vm156 = vc.u32 %v148, %v152
    %v157 = vsel %vm156, 1, 0
    %v158 = vadd.s32 %v148, %v152
    %v159 = vadd.s32 %v151, %v157
    %vm160 = vc.u32 %v158, %v154
    %v161 = vsel %vm160, 1, 0
    %v162 = vadd.s32 %v158, %v154
    %v163 = vadd.s32 %v159, %v161
    %v164 = vadd.s32 %v163, %v153
    %v165 = vadd.s32 %v164, %v155
    %v166 = vand.u32 %v143, 65535
    %v167 = vshrl.u32 %v143, 16
    %v168 = vand.u32 %v138, 65535
    %v169 = vshrl.u32 %v138, 16
    %v170 = vmul.u32 %v166, %v168
    %v171 = vmul.u32 %v166, %v169
    %v172 = vmul.u32 %v167, %v168
    %v173 = vmul.u32 %v167, %v169
    %v174 = vshll.u32 %v171, 16
    %v175 = vshrl.u32 %v171, 16
    %v176 = vshll.u32 %v172, 16
    %v177 = vshrl.u32 %v172, 16
    %vm178 = vc.u32 %v170, %v174
    %v179 = vsel %vm178, 1, 0
    %v180 = vadd.s32 %v170, %v174
    %v181 = vadd.s32 %v173, %v179
    %vm182 = vc.u32 %v180, %v176
    %v183 = vsel %vm182, 1, 0
    %v184 = vadd.s32 %v180, %v176
    %v185 = vadd.s32 %v181, %v183
    %v186 = vadd.s32 %v185, %v175
    %v187 = vadd.s32 %v186, %v177
    %v188 = vmul.u32 %v143, %v134
    %v189 = vadd.s32 %v165, %v184
    %vm190 = vc.u32 %v165, %v184
    %v191 = vadd.s32 %v187, 1
    %v192 = vsel %vm190, %v191, %v187
    %v193 = vadd.s32 %v188, %v192
    %v194 = vadd.s32 %v193, 536870912
    %v195 = vshrl.u32 %v194, 30
    %v196 = vshll.u32 %v195, 30
    %v197 = vsub.s32 %v193, %v196
    %vm198 = vcmp.lt.s32.totalorder %v197, 0
    %v199 = vsub.s32 0, %v197
    %v200 = vsel %vm198, %v199, %v197
    %v201 = vclz %v200
    %v202 = vsub.s32 %v201, 2
    %vm203 = vcmp.gt.s32.totalorder 0, %v202
    %v204 = vsel %vm203, 0, %v202
    %v205 = vsub.s32 32, %v204
    %v206 = vshll.u32 %v197, %v204
    %v207 = vshrl.u32 %v189, %v205
    %v208 = vor.u32 %v206, %v207
    %v209 = vsub.s32 4294967266, %v204
    %v210 = vadd.s32 %v209, 127
    %v211 = vshll.u32 %v210, 23
    %v212 = vor.u32 4788187, %v211
    %v213 = vand.u32 2147483647, %v212
    %v215 = vcvt.s32.f32 %v208
    %v216 = vmul.f32 %v215, %v213
    %v217 = vxor.u32 %v216, 2147483648
    %v218 = vsel %vm97, %v217, %v216
    %v219 = vsub.s32 4, %v195
    %v220 = vsel %vm97, %v219, %v195
    %v221 = vsel %vm96, %v91, %v218
    %v222 = vsel %vm96, 0, %v220
    %v223 = vmul.f32 %v221, %v221
    %v224 = vmul.f32 %v223, -0.001358992
    %v225 = vadd.f32 %v224, 0.041655596
    %v226 = vmul.f32 %v223, %v225
    %v227 = vadd.f32 %v226, -0.4999988
    %v228 = vmul.f32 %v223, %v227
    %v229 = vadd.f32 1.0, %v228
    %v230 = vmul.f32 %v221, %v221
    %v231 = vmul.f32 %v230, -0.00019511016
    %v232 = vadd.f32 %v231, 0.008332121
    %v233 = vmul.f32 %v230, %v232
    %v234 = vadd.f32 %v233, -0.16666654
    %v235 = vmul.f32 %v230, %v234
    %v236 = vadd.f32 %v235, 1.0
    %v237 = vmul.f32 %v236, %v221
    %vm238 = vweird.f32 %v91
    %v239 = vadd.s32 %v222, 3
    %v240 = vand.u32 %v239, 3
    %vm241 = vcmp.lt.s32.totalorder %v240, 2
    %vm242 = vcmp.eq.s32.totalorder %v240, 0
    %v243 = vxor.u32 %v237, 2147483648
    %v244 = vsel %vm242, %v229, %v243
    %vm245 = vcmp.eq.s32.totalorder %v240, 2
    %v246 = vxor.u32 %v229, 2147483648
    %v247 = vsel %vm245, %v246, %v237
    %v248 = vsel %vm241, %v244, %v247
    %v249 = vsel %vm238, nan, %v248
    %v250 = vand.u32 2147483647, %v92
    %vm251 = vcmp.le.f32.partialorder %v250, 0.7853982
    %vm252 = vcmp.lt.s32.totalorder %v92, 0
    %v253 = vand.u32 %v92, 2139095040
    %v254 = vshrl.u32 %v253, 23
    %v255 = vsub.s32 %v254, 127
    %v256 = vand.u32 2147483647, %v92
    %v257 = vand.u32 %v256, 8388607
    %v258 = vor.u32 %v257, 8388608
    %v259 = vsub.s32 0, %v258
    %v260 = vadd.s32 %v255, 1
    %vm261 = vcmp.gt.s32.totalorder %v260, 0
    %v262 = vsel %vm261, %v260, 0
    %v263 = vshrl.u32 %v262, 5
    %v264 = vand.u32 %v262, 31
    %v265 = vsub.s32 32, %v264
    %v266 = vshrl.u32 683565275, %v265
    %v267 = vshll.u32 683565275, %v264
    %v268 = vshrl.u32 2475754826, %v265
    %v269 = vor.u32 %v267, %v268
    %v270 = vshll.u32 2475754826, %v264
    %v271 = vshrl.u32 2131351028, %v265
    %v272 = vor.u32 %v270, %v271
    %v273 = vshll.u32 2131351028, %v264
    %v274 = vshrl.u32 2102212464, %v265
    %v275 = vor.u32 %v273, %v274
    %v276 = vshll.u32 2102212464, %v264
    %v277 = vshrl.u32 920167782, %v265
    %v278 = vor.u32 %v276, %v277
    %v279 = vshll.u32 920167782, %v264
    %v280 = vshrl.u32 1326507024, %v265
    %v281 = vor.u32 %v279, %v280
    %vm282 = vcmp.lt.s32.totalorder %v263, 1
    %vm283 = vcmp.lt.s32.totalorder %v263, 2
    %vm284 = vcmp.lt.s32.totalorder %v263, 3
    %vm285 = vcmp.lt.s32.totalorder %v263, 4
    %v286 = vsel %vm282, %v266, %v269
    %v287 = vsel %vm285, %v275, 2102212464
    %v288 = vsel %vm284, %v272, %v287
    %v289 = vsel %vm283, %v286, %v288
    %v290 = vsel %vm282, %v269, %v272
    %v291 = vsel %vm285, %v278, 920167782
    %v292 = vsel %vm284, %v275, %v291
    %v293 = vsel %vm283, %v290, %v292
    %v294 = vsel %vm282, %v272, %v275
    %v295 = vsel %vm285, %v281, 1326507024
    %v296 = vsel %vm284, %v278, %v295
    %v297 = vsel %vm283, %v294, %v296
    %v298 = vshll.u32 %v258, 8
    %v299 = vand.u32 %v298, 65535
    %v300 = vshrl.u32 %v298, 16
    %v301 = vand.u32 %v297, 65535
    %v302 = vshrl.u32 %v297, 16
    %v303 = vmul.u32 %v299, %v301
    %v304 = vmul.u32 %v299, %v302
    %v305 = vmul.u32 %v300, %v301
    %v306 = vmul.u32 %v300, %v302
    %v307 = vshll.u32 %v304, 16
    %v308 = vshrl.u32 %v304, 16
    %v309 = vshll.u32 %v305, 16
    %v310 = vshrl.u32 %v305, 16
    %vm311 = vc.u32 %v303, %v307
    %v312 = vsel %vm311, 1, 0
    %v313 = vadd.s32 %v303, %v307
    %v314 = vadd.s32 %v306, %v312
    %vm315 = vc.u32 %v313, %v309
    %v316 = vsel %vm315, 1, 0
    %v317 = vadd.s32 %v313, %v309
    %v318 = vadd.s32 %v314, %v316
    %v319 = vadd.s32 %v318, %v308
    %v320 = vadd.s32 %v319, %v310
    %v321 = vand.u32 %v298, 65535
    %v322 = vshrl.u32 %v298, 16
    %v323 = vand.u32 %v293, 65535
    %v324 = vshrl.u32 %v293, 16
    %v325 = vmul.u32 %v321, %v323
    %v326 = vmul.u32 %v321, %v324
    %v327 = vmul.u32 %v322, %v323
    %v328 = vmul.u32 %v322, %v324
    %v329 = vshll.u32 %v326, 16
    %v330 = vshrl.u32 %v326, 16
    %v331 = vshll.u32 %v327, 16
    %v332 = vshrl.u32 %v327, 16
    %vm333 = vc.u32 %v325, %v329
    %v334 = vsel %vm333, 1, 0
    %v335 = vadd.s32 %v325, %v329
    %v336 = vadd.s32 %v328, %v334
    %vm337 = vc.u32 %v335, %v331
    %v338 = vsel %vm337, 1, 0
    %v339 = vadd.s32 %v335, %v331
    %v340 = vadd.s32 %v336, %v338
    %v341 = vadd.s32 %v340, %v330
    %v342 = vadd.s32 %v341, %v332
    %v343 = vmul.u32 %v298, %v289
    %v344 = vadd.s32 %v320, %v339
    %vm345 = vc.u32 %v320, %v339
    %v346 = vadd.s32 %v342, 1
    %v347 = vsel %vm345, %v346, %v342
    %v348 = vadd.s32 %v343, %v347
    %v349 = vadd.s32 %v348, 536870912
    %v350 = vshrl.u32 %v349, 30
    %v351 = vshll.u32 %v350, 30
    %v352 = vsub.s32 %v348, %v351
    %vm353 = vcmp.lt.s32.totalorder %v352, 0
    %v354 = vsub.s32 0, %v352
    %v355 = vsel %vm353, %v354, %v352
    %v356 = vclz %v355
    %v357 = vsub.s32 %v356, 2
    %vm358 = vcmp.gt.s32.totalorder 0, %v357
    %v359 = vsel %vm358, 0, %v357
    %v360 = vsub.s32 32, %v359
    %v361 = vshll.u32 %v352, %v359
    %v362 = vshrl.u32 %v344, %v360
    %v363 = vor.u32 %v361, %v362
    %v364 = vsub.s32 4294967266, %v359
    %v365 = vadd.s32 %v364, 127
    %v366 = vshll.u32 %v365, 23
    %v367 = vor.u32 4788187, %v366
    %v368 = vand.u32 2147483647, %v367
    %v370 = vcvt.s32.f32 %v363
    %v371 = vmul.f32 %v370, %v368
    %v372 = vxor.u32 %v371, 2147483648
    %v373 = vsel %vm252, %v372, %v371
    %v374 = vsub.s32 4, %v350
    %v375 = vsel %vm252, %v374, %v350
    %v376 = vsel %vm251, %v92, %v373
    %v377 = vsel %vm251, 0, %v375
    %v378 = vmul.f32 %v376, %v376
    %v379 = vmul.f32 %v378, -0.001358992
    %v380 = vadd.f32 %v379, 0.041655596
    %v381 = vmul.f32 %v378, %v380
    %v382 = vadd.f32 %v381, -0.4999988
    %v383 = vmul.f32 %v378, %v382
    %v384 = vadd.f32 1.0, %v383
    %v385 = vmul.f32 %v376, %v376
    %v386 = vmul.f32 %v385, -0.00019511016
    %v387 = vadd.f32 %v386, 0.008332121
    %v388 = vmul.f32 %v385, %v387
    %v389 = vadd.f32 %v388, -0.16666654
    %v390 = vmul.f32 %v385, %v389
    %v391 = vadd.f32 %v390, 1.0
    %v392 = vmul.f32 %v391, %v376
    %vm393 = vweird.f32 %v92
    %v394 = vadd.s32 %v377, 3
    %v395 = vand.u32 %v394, 3
    %vm396 = vcmp.lt.s32.totalorder %v395, 2
    %vm397 = vcmp.eq.s32.totalorder %v395, 0
    %v398 = vxor.u32 %v392, 2147483648
    %v399 = vsel %vm397, %v384, %v398
    %vm400 = vcmp.eq.s32.totalorder %v395, 2
    %v401 = vxor.u32 %v384, 2147483648
    %v402 = vsel %vm400, %v401, %v392
    %v403 = vsel %vm396, %v399, %v402
    %v404 = vsel %vm393, nan, %v403
    %v405 = vand.u32 2147483647, %v93
    %vm406 = vcmp.le.f32.partialorder %v405, 0.7853982
    %vm407 = vcmp.lt.s32.totalorder %v93, 0
    %v408 = vand.u32 %v93, 2139095040
    %v409 = vshrl.u32 %v408, 23
    %v410 = vsub.s32 %v409, 127
    %v411 = vand.u32 2147483647, %v93
    %v412 = vand.u32 %v411, 8388607
    %v413 = vor.u32 %v412, 8388608
    %v414 = vsub.s32 0, %v413
    %v415 = vadd.s32 %v410, 1
    %vm416 = vcmp.gt.s32.totalorder %v415, 0
    %v417 = vsel %vm416, %v415, 0
    %v418 = vshrl.u32 %v417, 5
    %v419 = vand.u32 %v417, 31
    %v420 = vsub.s32 32, %v419
    %v421 = vshrl.u32 683565275, %v420
    %v422 = vshll.u32 683565275, %v419
    %v423 = vshrl.u32 2475754826, %v420
    %v424 = vor.u32 %v422, %v423
    %v425 = vshll.u32 2475754826, %v419
    %v426 = vshrl.u32 2131351028, %v420
    %v427 = vor.u32 %v425, %v426
    %v428 = vshll.u32 2131351028, %v419
    %v429 = vshrl.u32 2102212464, %v420
    %v430 = vor.u32 %v428, %v429
    %v431 = vshll.u32 2102212464, %v419
    %v432 = vshrl.u32 920167782, %v420
    %v433 = vor.u32 %v431, %v432
    %v434 = vshll.u32 920167782, %v419
    %v435 = vshrl.u32 1326507024, %v420
    %v436 = vor.u32 %v434, %v435
    %vm437 = vcmp.lt.s32.totalorder %v418, 1
    %vm438 = vcmp.lt.s32.totalorder %v418, 2
    %vm439 = vcmp.lt.s32.totalorder %v418, 3
    %vm440 = vcmp.lt.s32.totalorder %v418, 4
    %v441 = vsel %vm437, %v421, %v424
    %v442 = vsel %vm440, %v430, 2102212464
    %v443 = vsel %vm439, %v427, %v442
    %v444 = vsel %vm438, %v441, %v443
    %v445 = vsel %vm437, %v424, %v427
    %v446 = vsel %vm440, %v433, 920167782
    %v447 = vsel %vm439, %v430, %v446
    %v448 = vsel %vm438, %v445, %v447
    %v449 = vsel %vm437, %v427, %v430
    %v450 = vsel %vm440, %v436, 1326507024
    %v451 = vsel %vm439, %v433, %v450
    %v452 = vsel %vm438, %v449, %v451
    %v453 = vshll.u32 %v413, 8
    %v454 = vand.u32 %v453, 65535
    %v455 = vshrl.u32 %v453, 16
    %v456 = vand.u32 %v452, 65535
    %v457 = vshrl.u32 %v452, 16
    %v458 = vmul.u32 %v454, %v456
    %v459 = vmul.u32 %v454, %v457
    %v460 = vmul.u32 %v455, %v456
    %v461 = vmul.u32 %v455, %v457
    %v462 = vshll.u32 %v459, 16
    %v463 = vshrl.u32 %v459, 16
    %v464 = vshll.u32 %v460, 16
    %v465 = vshrl.u32 %v460, 16
    %vm466 = vc.u32 %v458, %v462
    %v467 = vsel %vm466, 1, 0
    %v468 = vadd.s32 %v458, %v462
    %v469 = vadd.s32 %v461, %v467
    %vm470 = vc.u32 %v468, %v464
    %v471 = vsel %vm470, 1, 0
    %v472 = vadd.s32 %v468, %v464
    %v473 = vadd.s32 %v469, %v471
    %v474 = vadd.s32 %v473, %v463
    %v475 = vadd.s32 %v474, %v465
    %v476 = vand.u32 %v453, 65535
    %v477 = vshrl.u32 %v453, 16
    %v478 = vand.u32 %v448, 65535
    %v479 = vshrl.u32 %v448, 16
    %v480 = vmul.u32 %v476, %v478
    %v481 = vmul.u32 %v476, %v479
    %v482 = vmul.u32 %v477, %v478
    %v483 = vmul.u32 %v477, %v479
    %v484 = vshll.u32 %v481, 16
    %v485 = vshrl.u32 %v481, 16
    %v486 = vshll.u32 %v482, 16
    %v487 = vshrl.u32 %v482, 16
    %vm488 = vc.u32 %v480, %v484
    %v489 = vsel %vm488, 1, 0
    %v490 = vadd.s32 %v480, %v484
    %v491 = vadd.s32 %v483, %v489
    %vm492 = vc.u32 %v490, %v486
    %v493 = vsel %vm492, 1, 0
    %v494 = vadd.s32 %v490, %v486
    %v495 = vadd.s32 %v491, %v493
    %v496 = vadd.s32 %v495, %v485
    %v497 = vadd.s32 %v496, %v487
    %v498 = vmul.u32 %v453, %v444
    %v499 = vadd.s32 %v475, %v494
    %vm500 = vc.u32 %v475, %v494
    %v501 = vadd.s32 %v497, 1
    %v502 = vsel %vm500, %v501, %v497
    %v503 = vadd.s32 %v498, %v502
    %v504 = vadd.s32 %v503, 536870912
    %v505 = vshrl.u32 %v504, 30
    %v506 = vshll.u32 %v505, 30
    %v507 = vsub.s32 %v503, %v506
    %vm508 = vcmp.lt.s32.totalorder %v507, 0
    %v509 = vsub.s32 0, %v507
    %v510 = vsel %vm508, %v509, %v507
    %v511 = vclz %v510
    %v512 = vsub.s32 %v511, 2
    %vm513 = vcmp.gt.s32.totalorder 0, %v512
    %v514 = vsel %vm513, 0, %v512
    %v515 = vsub.s32 32, %v514
    %v516 = vshll.u32 %v507, %v514
    %v517 = vshrl.u32 %v499, %v515
    %v518 = vor.u32 %v516, %v517
    %v519 = vsub.s32 4294967266, %v514
    %v520 = vadd.s32 %v519, 127
    %v521 = vshll.u32 %v520, 23
    %v522 = vor.u32 4788187, %v521
    %v523 = vand.u32 2147483647, %v522
    %v525 = vcvt.s32.f32 %v518
    %v526 = vmul.f32 %v525, %v523
    %v527 = vxor.u32 %v526, 2147483648
    %v528 = vsel %vm407, %v527, %v526
    %v529 = vsub.s32 4, %v505
    %v530 = vsel %vm407, %v529, %v505
    %v531 = vsel %vm406, %v93, %v528
    %v532 = vsel %vm406, 0, %v530
    %v533 = vmul.f32 %v531, %v531
    %v534 = vmul.f32 %v533, -0.001358992
    %v535 = vadd.f32 %v534, 0.041655596
    %v536 = vmul.f32 %v533, %v535
    %v537 = vadd.f32 %v536, -0.4999988
    %v538 = vmul.f32 %v533, %v537
    %v539 = vadd.f32 1.0, %v538
    %v540 = vmul.f32 %v531, %v531
    %v541 = vmul.f32 %v540, -0.00019511016
    %v542 = vadd.f32 %v541, 0.008332121
    %v543 = vmul.f32 %v540, %v542
    %v544 = vadd.f32 %v543, -0.16666654
    %v545 = vmul.f32 %v540, %v544
    %v546 = vadd.f32 %v545, 1.0
    %v547 = vmul.f32 %v546, %v531
    %vm548 = vweird.f32 %v93
    %v549 = vadd.s32 %v532, 3
    %v550 = vand.u32 %v549, 3
    %vm551 = vcmp.lt.s32.totalorder %v550, 2
    %vm552 = vcmp.eq.s32.totalorder %v550, 0
    %v553 = vxor.u32 %v547, 2147483648
    %v554 = vsel %vm552, %v539, %v553
    %vm555 = vcmp.eq.s32.totalorder %v550, 2
    %v556 = vxor.u32 %v539, 2147483648
    %v557 = vsel %vm555, %v556, %v547
    %v558 = vsel %vm551, %v554, %v557
    %v559 = vsel %vm548, nan, %v558
    %v560 = vand.u32 2147483647, %v94
    %vm561 = vcmp.le.f32.partialorder %v560, 0.7853982
    %vm562 = vcmp.lt.s32.totalorder %v94, 0
    %v563 = vand.u32 %v94, 2139095040
    %v564 = vshrl.u32 %v563, 23
    %v565 = vsub.s32 %v564, 127
    %v566 = vand.u32 2147483647, %v94
    %v567 = vand.u32 %v566, 8388607
    %v568 = vor.u32 %v567, 8388608
    %v569 = vsub.s32 0, %v568
    %v570 = vadd.s32 %v565, 1
    %vm571 = vcmp.gt.s32.totalorder %v570, 0
    %v572 = vsel %vm571, %v570, 0
    %v573 = vshrl.u32 %v572, 5
    %v574 = vand.u32 %v572, 31
    %v575 = vsub.s32 32, %v574
    %v576 = vshrl.u32 683565275, %v575
    %v577 = vshll.u32 683565275, %v574
    %v578 = vshrl.u32 2475754826, %v575
    %v579 = vor.u32 %v577, %v578
    %v580 = vshll.u32 2475754826, %v574
    %v581 = vshrl.u32 2131351028, %v575
    %v582 = vor.u32 %v580, %v581
    %v583 = vshll.u32 2131351028, %v574
    %v584 = vshrl.u32 2102212464, %v575
    %v585 = vor.u32 %v583, %v584
    %v586 = vshll.u32 2102212464, %v574
    %v587 = vshrl.u32 920167782, %v575
    %v588 = vor.u32 %v586, %v587
    %v589 = vshll.u32 920167782, %v574
    %v590 = vshrl.u32 1326507024, %v575
    %v591 = vor.u32 %v589, %v590
    %vm592 = vcmp.lt.s32.totalorder %v573, 1
    %vm593 = vcmp.lt.s32.totalorder %v573, 2
    %vm594 = vcmp.lt.s32.totalorder %v573, 3
    %vm595 = vcmp.lt.s32.totalorder %v573, 4
    %v596 = vsel %vm592, %v576, %v579
    %v597 = vsel %vm595, %v585, 2102212464
    %v598 = vsel %vm594, %v582, %v597
    %v599 = vsel %vm593, %v596, %v598
    %v600 = vsel %vm592, %v579, %v582
    %v601 = vsel %vm595, %v588, 920167782
    %v602 = vsel %vm594, %v585, %v601
    %v603 = vsel %vm593, %v600, %v602
    %v604 = vsel %vm592, %v582, %v585
    %v605 = vsel %vm595, %v591, 1326507024
    %v606 = vsel %vm594, %v588, %v605
    %v607 = vsel %vm593, %v604, %v606
    %v608 = vshll.u32 %v568, 8
    %v609 = vand.u32 %v608, 65535
    %v610 = vshrl.u32 %v608, 16
    %v611 = vand.u32 %v607, 65535
    %v612 = vshrl.u32 %v607, 16
    %v613 = vmul.u32 %v609, %v611
    %v614 = vmul.u32 %v609, %v612
    %v615 = vmul.u32 %v610, %v611
    %v616 = vmul.u32 %v610, %v612
    %v617 = vshll.u32 %v614, 16
    %v618 = vshrl.u32 %v614, 16
    %v619 = vshll.u32 %v615, 16
    %v620 = vshrl.u32 %v615, 16
    %vm621 = vc.u32 %v613, %v617
    %v622 = vsel %vm621, 1, 0
    %v623 = vadd.s32 %v613, %v617
    %v624 = vadd.s32 %v616, %v622
    %vm625 = vc.u32 %v623, %v619
    %v626 = vsel %vm625, 1, 0
    %v627 = vadd.s32 %v623, %v619
    %v628 = vadd.s32 %v624, %v626
    %v629 = vadd.s32 %v628, %v618
    %v630 = vadd.s32 %v629, %v620
    %v631 = vand.u32 %v608, 65535
    %v632 = vshrl.u32 %v608, 16
    %v633 = vand.u32 %v603, 65535
    %v634 = vshrl.u32 %v603, 16
    %v635 = vmul.u32 %v631, %v633
    %v636 = vmul.u32 %v631, %v634
    %v637 = vmul.u32 %v632, %v633
    %v638 = vmul.u32 %v632, %v634
    %v639 = vshll.u32 %v636, 16
    %v640 = vshrl.u32 %v636, 16
    %v641 = vshll.u32 %v637, 16
    %v642 = vshrl.u32 %v637, 16
    %vm643 = vc.u32 %v635, %v639
    %v644 = vsel %vm643, 1, 0
    %v645 = vadd.s32 %v635, %v639
    %v646 = vadd.s32 %v638, %v644
    %vm647 = vc.u32 %v645, %v641
    %v648 = vsel %vm647, 1, 0
    %v649 = vadd.s32 %v645, %v641
    %v650 = vadd.s32 %v646, %v648
    %v651 = vadd.s32 %v650, %v640
    %v652 = vadd.s32 %v651, %v642
    %v653 = vmul.u32 %v608, %v599
    %v654 = vadd.s32 %v630, %v649
    %vm655 = vc.u32 %v630, %v649
    %v656 = vadd.s32 %v652, 1
    %v657 = vsel %vm655, %v656, %v652
    %v658 = vadd.s32 %v653, %v657
    %v659 = vadd.s32 %v658, 536870912
    %v660 = vshrl.u32 %v659, 30
    %v661 = vshll.u32 %v660, 30
    %v662 = vsub.s32 %v658, %v661
    %vm663 = vcmp.lt.s32.totalorder %v662, 0
    %v664 = vsub.s32 0, %v662
    %v665 = vsel %vm663, %v664, %v662
    %v666 = vclz %v665
    %v667 = vsub.s32 %v666, 2
    %vm668 = vcmp.gt.s32.totalorder 0, %v667
    %v669 = vsel %vm668, 0, %v667
    %v670 = vsub.s32 32, %v669
    %v671 = vshll.u32 %v662, %v669
    %v672 = vshrl.u32 %v654, %v670
    %v673 = vor.u32 %v671, %v672
    %v674 = vsub.s32 4294967266, %v669
    %v675 = vadd.s32 %v674, 127
    %v676 = vshll.u32 %v675, 23
    %v677 = vor.u32 4788187, %v676
    %v678 = vand.u32 2147483647, %v677
    %v680 = vcvt.s32.f32 %v673
    %v681 = vmul.f32 %v680, %v678
    %v682 = vxor.u32 %v681, 2147483648
    %v683 = vsel %vm562, %v682, %v681
    %v684 = vsub.s32 4, %v660
    %v685 = vsel %vm562, %v684, %v660
    %v686 = vsel %vm561, %v94, %v683
    %v687 = vsel %vm561, 0, %v685
    %v688 = vmul.f32 %v686, %v686
    %v689 = vmul.f32 %v688, -0.001358992
    %v690 = vadd.f32 %v689, 0.041655596
    %v691 = vmul.f32 %v688, %v690
    %v692 = vadd.f32 %v691, -0.4999988
    %v693 = vmul.f32 %v688, %v692
    %v694 = vadd.f32 1.0, %v693
    %v695 = vmul.f32 %v686, %v686
    %v696 = vmul.f32 %v695, -0.00019511016
    %v697 = vadd.f32 %v696, 0.008332121
    %v698 = vmul.f32 %v695, %v697
    %v699 = vadd.f32 %v698, -0.16666654
    %v700 = vmul.f32 %v695, %v699
    %v701 = vadd.f32 %v700, 1.0
    %v702 = vmul.f32 %v701, %v686
    %vm703 = vweird.f32 %v94
    %v704 = vadd.s32 %v687, 3
    %v705 = vand.u32 %v704, 3
    %vm706 = vcmp.lt.s32.totalorder %v705, 2
    %vm707 = vcmp.eq.s32.totalorder %v705, 0
    %v708 = vxor.u32 %v702, 2147483648
    %v709 = vsel %vm707, %v694, %v708
    %vm710 = vcmp.eq.s32.totalorder %v705, 2
    %v711 = vxor.u32 %v694, 2147483648
    %v712 = vsel %vm710, %v711, %v702
    %v713 = vsel %vm706, %v709, %v712
    %v714 = vsel %vm703, nan, %v713
    %v715 = vld [vmem:[#allocation2 + $0x70] sm:$0xff]
    %v716 = vld [vmem:[#allocation2 + $0x78] sm:$0xff]
    %v717 = vld [vmem:[#allocation2 + $0x80] sm:$0xff]
    %v718 = vld [vmem:[#allocation2 + $0x88] sm:$0xff]
    %vm719 = vcmp.gt.f32.partialorder %v715, 0.5
    %vm720 = vcmp.gt.f32.partialorder %v716, 0.5
    %vm721 = vcmp.gt.f32.partialorder %v717, 0.5
    %vm722 = vcmp.gt.f32.partialorder %v718, 0.5
    %v723 = vsel %vm719, %v249, %v64
    %v724 = vsel %vm720, %v404, %v67
    %v725 = vsel %vm721, %v559, %v70
    %v726 = vsel %vm722, %v714, %v73
    %v727 = vld [vmem:[#allocation2 + $0x50] sm:$0xff]
    %v728 = vld [vmem:[#allocation2 + $0x58] sm:$0xff]
    %v729 = vld [vmem:[#allocation2 + $0x60] sm:$0xff]
    %v730 = vld [vmem:[#allocation2 + $0x68] sm:$0xff]
    %v731 = vadd.f32 %v723, %v727
    %v732 = vadd.f32 %v724, %v728
    %v733 = vadd.f32 %v725, %v729
    %v734 = vadd.f32 %v726, %v730
    %v735 = vld [vmem:[#allocation2 + $0x90] sm:$0xff]
    %v736 = vld [vmem:[#allocation2 + $0x98] sm:$0xff]
    %v737 = vld [vmem:[#allocation2 + $0xa0] sm:$0xff]
    %v738 = vld [vmem:[#allocation2 + $0xa8] sm:$0xff]
    %vm739 = vcmask 261120
    %v740 = vsel %vm739, %v731, 0.0
    %741 = vadd.xlane.f32.xlu0 %v740
    %v742 = vpop.xlane.xlu0 %741
    %v743 = vsel %vm739, %v732, 0.0
    %744 = vadd.xlane.f32.xlu0 %v743
    %v745 = vpop.xlane.xlu0 %744
    %v746 = vsel %vm739, %v733, 0.0
    %747 = vadd.xlane.f32.xlu0 %v746
    %v748 = vpop.xlane.xlu0 %747
    %v749 = vsel %vm739, %v734, 0.0
    %750 = vadd.xlane.f32.xlu0 %v749
    %v751 = vpop.xlane.xlu0 %750
    %v752 = vrcp.pop 32.0
    %v753 = vmul.f32 32.0, %v752
    %v754 = vsub.f32 1.0, %v753
    %v755 = vmul.f32 %v752, %v754
    %v756 = vadd.f32 %v752, %v755
    %vm757 = vweird.f32 %v752
    %v758 = vsel %vm757, %v752, %v756
    %v759 = vmul.f32 %v742, %v758
    %v760 = vmul.f32 %v745, %v758
    %v761 = vmul.f32 %v748, %v758
    %v762 = vmul.f32 %v751, %v758
    %v763 = vsub.f32 %v731, %v759
    %v764 = vsub.f32 %v732, %v760
    %v765 = vsub.f32 %v733, %v761
    %v766 = vsub.f32 %v734, %v762
    %v767 = vmul.f32 %v763, %v763
    %v768 = vmul.f32 %v764, %v764
    %v769 = vmul.f32 %v765, %v765
    %v770 = vmul.f32 %v766, %v766
    %v771 = vsel %vm739, %v767, 0.0
    %772 = vadd.xlane.f32.xlu0 %v771
    %v773 = vpop.xlane.xlu0 %772
    %v774 = vsel %vm739, %v768, 0.0
    %775 = vadd.xlane.f32.xlu0 %v774
    %v776 = vpop.xlane.xlu0 %775
    %v777 = vsel %vm739, %v769, 0.0
    %778 = vadd.xlane.f32.xlu0 %v777
    %v779 = vpop.xlane.xlu0 %778
    %v780 = vsel %vm739, %v770, 0.0
    %781 = vadd.xlane.f32.xlu0 %v780
    %v782 = vpop.xlane.xlu0 %781
    %v783 = vmul.f32 %v773, %v758
    %v784 = vmul.f32 %v776, %v758
    %v785 = vmul.f32 %v779, %v758
    %v786 = vmul.f32 %v782, %v758
    %v787 = vadd.f32 %v783, 1e-05
    %v788 = vadd.f32 %v784, 1e-05
    %v789 = vadd.f32 %v785, 1e-05
    %v790 = vadd.f32 %v786, 1e-05
    %v791 = vrsqrt.pop %v787
    %v792 = vmul.f32 %v791, %v787
    %v793 = vmul.f32 %v792, %v791
    %v794 = vmul.f32 0.5, %v793
    %v795 = vsub.f32 1.5, %v794
    %v796 = vmul.f32 %v791, %v795
    %vm797 = vweird.f32 %v787
    %vm798 = vweird.f32 %v791
    %vm799 = vmor %vm797, %vm798
    %v800 = vsel %vm799, %v791, %v796
    %v801 = vrsqrt.pop %v788
    %v802 = vmul.f32 %v801, %v788
    %v803 = vmul.f32 %v802, %v801
    %v804 = vmul.f32 0.5, %v803
    %v805 = vsub.f32 1.5, %v804
    %v806 = vmul.f32 %v801, %v805
    %vm807 = vweird.f32 %v788
    %vm808 = vweird.f32 %v801
    %vm809 = vmor %vm807, %vm808
    %v810 = vsel %vm809, %v801, %v806
    %v811 = vrsqrt.pop %v789
    %v812 = vmul.f32 %v811, %v789
    %v813 = vmul.f32 %v812, %v811
    %v814 = vmul.f32 0.5, %v813
    %v815 = vsub.f32 1.5, %v814
    %v816 = vmul.f32 %v811, %v815
    %vm817 = vweird.f32 %v789
    %vm818 = vweird.f32 %v811
    %vm819 = vmor %vm817, %vm818
    %v820 = vsel %vm819, %v811, %v816
    %v821 = vrsqrt.pop %v790
    %v822 = vmul.f32 %v821, %v790
    %v823 = vmul.f32 %v822, %v821
    %v824 = vmul.f32 0.5, %v823
    %v825 = vsub.f32 1.5, %v824
    %v826 = vmul.f32 %v821, %v825
    %vm827 = vweird.f32 %v790
    %vm828 = vweird.f32 %v821
    %vm829 = vmor %vm827, %vm828
    %v830 = vsel %vm829, %v821, %v826
    %v831 = vmul.f32 %v763, %v800
    %v832 = vmul.f32 %v764, %v810
    %v833 = vmul.f32 %v765, %v820
    %v834 = vmul.f32 %v766, %v830
    %v835 = vld [vmem:[#allocation2 + $0xb0] sm:$0xff]
    %v836 = vld [vmem:[#allocation2 + $0xb8] sm:$0xff]
    %v837 = vld [vmem:[#allocation2 + $0xc0] sm:$0xff]
    %v838 = vld [vmem:[#allocation2 + $0xc8] sm:$0xff]
    %v839 = vld [vmem:[#allocation2 + $0xd0] sm:$0xff]
    %v840 = vld [vmem:[#allocation2 + $0xd8] sm:$0xff]
    %v842 = vsel %vm739, %v831, 0
    %v845 = vsel %vm739, %v832, 0
    %847 = vmatpush.msra.mxu0 0.0
    %848 = vmatpush.msra.mxu0 0.0
    %849 = vmatpush.msra.mxu0 0.0
    %850 = vmatpush.msra.mxu0 0.0
    %851 = vmatpush.msra.mxu0 0.0
    %852 = vmatpush.msra.mxu0 0.0
    %853 = vmatpush.msra.mxu0 0.0
    %854 = vmatpush.msra.mxu0 0.0
    %855 = vmatpush.msra.mxu0 0.0
    %856 = vmatpush.msra.mxu0 0.0
    %857 = vmatpush.msra.mxu0 0.0
    %858 = vmatpush.msra.mxu0 0.0
    %859 = vmatpush.msra.mxu0 %v838
    %860 = vmatpush.msra.mxu0 %v837
    %861 = vmatpush.msra.mxu0 %v836
    %862 = vmatpush.msra.mxu0 %v835
    %863 = vmatmul.f32.gmra.mxu0 %v842
    %v864 = vpop.f32.mrf.mxu0
    %v865 = vadd.f32 %v839, %v864
    %866 = vmatmul.f32.gmra.mxu0 %v845
    %v867 = vpop.f32.mrf.mxu0
    %v868 = vadd.f32 %v840, %v867
    %869 = vdwg.mxu0
    %v870 = vld [vmem:[#allocation2 + $0x270] sm:$0xff]
    %v871 = vld [vmem:[#allocation2 + $0x278] sm:$0xff]
    %v872 = vld [vmem:[#allocation2 + $0x280] sm:$0xff]
    %v873 = vld [vmem:[#allocation2 + $0x288] sm:$0xff]
    %v874 = vld [vmem:[#allocation2 + $0x290] sm:$0xff]
    %v875 = vld [vmem:[#allocation2 + $0x298] sm:$0xff]
    %v877 = vsel %vm739, %v833, 0
    %v880 = vsel %vm739, %v834, 0
    %882 = vmatpush.msra.mxu0 0.0
    %883 = vmatpush.msra.mxu0 0.0
    %884 = vmatpush.msra.mxu0 0.0
    %885 = vmatpush.msra.mxu0 0.0
    %886 = vmatpush.msra.mxu0 0.0
    %887 = vmatpush.msra.mxu0 0.0
    %888 = vmatpush.msra.mxu0 0.0
    %889 = vmatpush.msra.mxu0 0.0
    %890 = vmatpush.msra.mxu0 0.0
    %891 = vmatpush.msra.mxu0 0.0
    %892 = vmatpush.msra.mxu0 0.0
    %893 = vmatpush.msra.mxu0 0.0
    %894 = vmatpush.msra.mxu0 %v873
    %895 = vmatpush.msra.mxu0 %v872
    %896 = vmatpush.msra.mxu0 %v871
    %897 = vmatpush.msra.mxu0 %v870
    %898 = vmatmul.f32.gmra.mxu0 %v877
    %v899 = vpop.f32.mrf.mxu0
    %v900 = vadd.f32 %v874, %v899
    %901 = vmatmul.f32.gmra.mxu0 %v880
    %v902 = vpop.f32.mrf.mxu0
    %v903 = vadd.f32 %v875, %v902
    %904 = vdwg.mxu0
    %v905 = vld [vmem:[#allocation2 + $0xe0] sm:$0xff]
    %v906 = vld [vmem:[#allocation2 + $0xe8] sm:$0xff]
    %v907 = vld [vmem:[#allocation2 + $0xf0] sm:$0xff]
    %v908 = vld [vmem:[#allocation2 + $0xf8] sm:$0xff]
    %v909 = vld [vmem:[#allocation2 + $0x2a0] sm:$0xff]
    %v910 = vld [vmem:[#allocation2 + $0x2a8] sm:$0xff]
    %v911 = vld [vmem:[#allocation2 + $0x2b0] sm:$0xff]
    %v912 = vld [vmem:[#allocation2 + $0x2b8] sm:$0xff]
    %v913 = vld [vmem:[#allocation2 + $0x100] sm:$0xff]
    %v914 = vld [vmem:[#allocation2 + $0x108] sm:$0xff]
    %v915 = vld [vmem:[#allocation2 + $0x2c0] sm:$0xff]
    %v916 = vld [vmem:[#allocation2 + $0x2c8] sm:$0xff]
    %921 = vrot.lane.b32.xlu0 %v865, 96
    %v922 = vpop.permute.xlu0 %921
    %923 = vrot.lane.b32.xlu0 %v868, 96
    %v924 = vpop.permute.xlu0 %923
    %925 = vrot.lane.b32.xlu0 %v900, 96
    %v926 = vpop.permute.xlu0 %925
    %927 = vrot.lane.b32.xlu0 %v903, 96
    %v928 = vpop.permute.xlu0 %927
    %v929 = vsel %vm33, %v865, 0
    %v931 = vsel %vm33, %v868, 0
    %v933 = vsel %vm33, %v900, 0
    %v935 = vsel %vm33, %v903, 0
    %v937 = vsel %vm33, %v922, 0
    %v939 = vsel %vm33, %v924, 0
    %v941 = vsel %vm33, %v926, 0
    %v943 = vsel %vm33, %v928, 0
    %945 = vmatpush.xpose.msra.mxu0 0.0
    %946 = vmatpush.xpose.msra.mxu0 0.0
    %947 = vmatpush.xpose.msra.mxu0 0.0
    %948 = vmatpush.xpose.msra.mxu0 0.0
    %949 = vmatpush.xpose.msra.mxu0 0.0
    %950 = vmatpush.xpose.msra.mxu0 0.0
    %951 = vmatpush.xpose.msra.mxu0 0.0
    %952 = vmatpush.xpose.msra.mxu0 0.0
    %953 = vmatpush.xpose.msra.mxu0 0.0
    %954 = vmatpush.xpose.msra.mxu0 0.0
    %955 = vmatpush.xpose.msra.mxu0 0.0
    %956 = vmatpush.xpose.msra.mxu0 0.0
    %957 = vmatpush.xpose.msra.mxu0 %v943
    %958 = vmatpush.xpose.msra.mxu0 %v941
    %959 = vmatpush.xpose.msra.mxu0 %v939
    %960 = vmatpush.xpose.msra.mxu0 %v937
    %961 = vmatmul.f32.gmra.mxu0 %v929
    %v962 = vpop.f32.mrf.mxu0
    %v963 = vadd.f32 %v735, %v962
    %964 = vmatmul.f32.gmra.mxu0 %v931
    %v965 = vpop.f32.mrf.mxu0
    %v966 = vadd.f32 %v736, %v965
    %967 = vmatmul.f32.gmra.mxu0 %v933
    %v968 = vpop.f32.mrf.mxu0
    %v969 = vadd.f32 %v737, %v968
    %970 = vmatmul.f32.gmra.mxu0 %v935
    %v971 = vpop.f32.mrf.mxu0
    %v972 = vadd.f32 %v738, %v971
    %973 = vdwg.mxu0
    %v974 = vmul.f32 %v963, 1.442695
    %v975 = vpow.pop %v974
    %v976 = vmul.f32 %v966, 1.442695
    %v977 = vpow.pop %v976
    %v978 = vmul.f32 %v969, 1.442695
    %v979 = vpow.pop %v978
    %v980 = vmul.f32 %v972, 1.442695
    %v981 = vpow.pop %v980
    %v982 = vsel %vm739, %v975, 0.0
    %983 = vadd.xlane.f32.xlu0 %v982
    %v984 = vpop.xlane.xlu0 %983
    %v985 = vsel %vm739, %v977, 0.0
    %986 = vadd.xlane.f32.xlu0 %v985
    %v987 = vpop.xlane.xlu0 %986
    %v988 = vsel %vm739, %v979, 0.0
    %989 = vadd.xlane.f32.xlu0 %v988
    %v990 = vpop.xlane.xlu0 %989
    %v991 = vsel %vm739, %v981, 0.0
    %992 = vadd.xlane.f32.xlu0 %v991
    %v993 = vpop.xlane.xlu0 %992
    %v994 = vrcp.pop %v984
    %v995 = vrcp.pop %v987
    %v996 = vrcp.pop %v990
    %v997 = vrcp.pop %v993
    %v998 = vmul.f32 %v975, %v994
    %v999 = vmul.f32 %v977, %v995
    %v1000 = vmul.f32 %v979, %v996
    %v1001 = vmul.f32 %v981, %v997
    %1002 = vrot.lane.b32.xlu0 %v865, 64
    %v1003 = vpop.permute.xlu0 %1002
    %1004 = vrot.lane.b32.xlu0 %v868, 64
    %v1005 = vpop.permute.xlu0 %1004
    %1006 = vrot.lane.b32.xlu0 %v900, 64
    %v1007 = vpop.permute.xlu0 %1006
    %1008 = vrot.lane.b32.xlu0 %v903, 64
    %v1009 = vpop.permute.xlu0 %1008
    %v1015 = vsel %vm739, %v998, 0
    %v1018 = vsel %vm739, %v999, 0
    %v1021 = vsel %vm739, %v1000, 0
    %v1024 = vsel %vm739, %v1001, 0
    %1026 = vmatpush.msra.mxu0 0.0
    %1027 = vmatpush.msra.mxu0 0.0
    %1028 = vmatpush.msra.mxu0 0.0
    %1029 = vmatpush.msra.mxu0 0.0
    %1030 = vmatpush.msra.mxu0 0.0
    %1031 = vmatpush.msra.mxu0 0.0
    %1032 = vmatpush.msra.mxu0 0.0
    %1033 = vmatpush.msra.mxu0 0.0
    %1034 = vmatpush.msra.mxu0 0.0
    %1035 = vmatpush.msra.mxu0 0.0
    %1036 = vmatpush.msra.mxu0 0.0
    %1037 = vmatpush.msra.mxu0 0.0
    %1038 = vmatpush.msra.mxu0 %v1009
    %1039 = vmatpush.msra.mxu0 %v1007
    %1040 = vmatpush.msra.mxu0 %v1005
    %1041 = vmatpush.msra.mxu0 %v1003
    %1042 = vmatmul.f32.gmra.mxu0 %v1015
    %v1043 = vpop.f32.mrf.mxu0
    %v1044 = vadd.f32 0.0, %v1043
    %1045 = vmatmul.f32.gmra.mxu0 %v1018
    %v1046 = vpop.f32.mrf.mxu0
    %v1047 = vadd.f32 0.0, %v1046
    %1048 = vmatmul.f32.gmra.mxu0 %v1021
    %v1049 = vpop.f32.mrf.mxu0
    %v1050 = vadd.f32 0.0, %v1049
    %1051 = vmatmul.f32.gmra.mxu0 %v1024
    %v1052 = vpop.f32.mrf.mxu0
    %v1053 = vadd.f32 0.0, %v1052
    %1054 = vdwg.mxu0
    %v1056 = vsel %vm33, %v1044, 0
    %v1059 = vsel %vm33, %v1047, 0
    %1061 = vmatpush.msra.mxu0 0.0
    %1062 = vmatpush.msra.mxu0 0.0
    %1063 = vmatpush.msra.mxu0 0.0
    %1064 = vmatpush.msra.mxu0 0.0
    %1065 = vmatpush.msra.mxu0 0.0
    %1066 = vmatpush.msra.mxu0 0.0
    %1067 = vmatpush.msra.mxu0 0.0
    %1068 = vmatpush.msra.mxu0 0.0
    %1069 = vmatpush.msra.mxu0 0.0
    %1070 = vmatpush.msra.mxu0 0.0
    %1071 = vmatpush.msra.mxu0 0.0
    %1072 = vmatpush.msra.mxu0 0.0
    %1073 = vmatpush.msra.mxu0 0.0
    %1074 = vmatpush.msra.mxu0 0.0
    %1075 = vmatpush.msra.mxu0 %v906
    %1076 = vmatpush.msra.mxu0 %v905
    %1077 = vmatmul.f32.gmra.mxu0 %v1056
    %v1078 = vpop.f32.mrf.mxu0
    %v1079 = vadd.f32 0.0, %v1078
    %1080 = vmatmul.f32.gmra.mxu0 %v1059
    %v1081 = vpop.f32.mrf.mxu0
    %v1082 = vadd.f32 0.0, %v1081
    %1083 = vdwg.mxu0
    %v1084 = vadd.f32 %v913, %v1079
    %v1085 = vadd.f32 %v914, %v1082
    %v1087 = vsel %vm33, %v1050, 0
    %v1090 = vsel %vm33, %v1053, 0
    %1092 = vmatpush.msra.mxu0 0.0
    %1093 = vmatpush.msra.mxu0 0.0
    %1094 = vmatpush.msra.mxu0 0.0
    %1095 = vmatpush.msra.mxu0 0.0
    %1096 = vmatpush.msra.mxu0 0.0
    %1097 = vmatpush.msra.mxu0 0.0
    %1098 = vmatpush.msra.mxu0 0.0
    %1099 = vmatpush.msra.mxu0 0.0
    %1100 = vmatpush.msra.mxu0 0.0
    %1101 = vmatpush.msra.mxu0 0.0
    %1102 = vmatpush.msra.mxu0 0.0
    %1103 = vmatpush.msra.mxu0 0.0
    %1104 = vmatpush.msra.mxu0 0.0
    %1105 = vmatpush.msra.mxu0 0.0
    %1106 = vmatpush.msra.mxu0 %v910
    %1107 = vmatpush.msra.mxu0 %v909
    %1108 = vmatmul.f32.gmra.mxu0 %v1087
    %v1109 = vpop.f32.mrf.mxu0
    %v1110 = vadd.f32 0.0, %v1109
    %1111 = vmatmul.f32.gmra.mxu0 %v1090
    %v1112 = vpop.f32.mrf.mxu0
    %v1113 = vadd.f32 0.0, %v1112
    %1114 = vdwg.mxu0
    %v1115 = vadd.f32 %v915, %v1110
    %v1116 = vadd.f32 %v916, %v1113
    %1117 = vrot.lane.b32.xlu0 %v865, 112
    %v1118 = vpop.permute.xlu0 %1117
    %1119 = vrot.lane.b32.xlu0 %v868, 112
    %v1120 = vpop.permute.xlu0 %1119
    %1121 = vrot.lane.b32.xlu0 %v900, 112
    %v1122 = vpop.permute.xlu0 %1121
    %1123 = vrot.lane.b32.xlu0 %v903, 112
    %v1124 = vpop.permute.xlu0 %1123
    %1125 = vrot.lane.b32.xlu0 %v865, 80
    %v1126 = vpop.permute.xlu0 %1125
    %1127 = vrot.lane.b32.xlu0 %v868, 80
    %v1128 = vpop.permute.xlu0 %1127
    %1129 = vrot.lane.b32.xlu0 %v900, 80
    %v1130 = vpop.permute.xlu0 %1129
    %1131 = vrot.lane.b32.xlu0 %v903, 80
    %v1132 = vpop.permute.xlu0 %1131
    %v1133 = vsel %vm33, %v1118, 0
    %v1135 = vsel %vm33, %v1120, 0
    %v1137 = vsel %vm33, %v1122, 0
    %v1139 = vsel %vm33, %v1124, 0
    %v1141 = vsel %vm33, %v1126, 0
    %v1143 = vsel %vm33, %v1128, 0
    %v1145 = vsel %vm33, %v1130, 0
    %v1147 = vsel %vm33, %v1132, 0
    %1149 = vmatpush.xpose.msra.mxu0 0.0
    %1150 = vmatpush.xpose.msra.mxu0 0.0
    %1151 = vmatpush.xpose.msra.mxu0 0.0
    %1152 = vmatpush.xpose.msra.mxu0 0.0
    %1153 = vmatpush.xpose.msra.mxu0 0.0
    %1154 = vmatpush.xpose.msra.mxu0 0.0
    %1155 = vmatpush.xpose.msra.mxu0 0.0
    %1156 = vmatpush.xpose.msra.mxu0 0.0
    %1157 = vmatpush.xpose.msra.mxu0 0.0
    %1158 = vmatpush.xpose.msra.mxu0 0.0
    %1159 = vmatpush.xpose.msra.mxu0 0.0
    %1160 = vmatpush.xpose.msra.mxu0 0.0
    %1161 = vmatpush.xpose.msra.mxu0 %v1147
    %1162 = vmatpush.xpose.msra.mxu0 %v1145
    %1163 = vmatpush.xpose.msra.mxu0 %v1143
    %1164 = vmatpush.xpose.msra.mxu0 %v1141
    %1165 = vmatmul.f32.gmra.mxu0 %v1133
    %v1166 = vpop.f32.mrf.mxu0
    %v1167 = vadd.f32 %v735, %v1166
    %1168 = vmatmul.f32.gmra.mxu0 %v1135
    %v1169 = vpop.f32.mrf.mxu0
    %v1170 = vadd.f32 %v736, %v1169
    %1171 = vmatmul.f32.gmra.mxu0 %v1137
    %v1172 = vpop.f32.mrf.mxu0
    %v1173 = vadd.f32 %v737, %v1172
    %1174 = vmatmul.f32.gmra.mxu0 %v1139
    %v1175 = vpop.f32.mrf.mxu0
    %v1176 = vadd.f32 %v738, %v1175
    %1177 = vdwg.mxu0
    %v1178 = vmul.f32 %v1167, 1.442695
    %v1179 = vpow.pop %v1178
    %v1180 = vmul.f32 %v1170, 1.442695
    %v1181 = vpow.pop %v1180
    %v1182 = vmul.f32 %v1173, 1.442695
    %v1183 = vpow.pop %v1182
    %v1184 = vmul.f32 %v1176, 1.442695
    %v1185 = vpow.pop %v1184
    %v1186 = vsel %vm739, %v1179, 0.0
    %1187 = vadd.xlane.f32.xlu0 %v1186
    %v1188 = vpop.xlane.xlu0 %1187
    %v1189 = vsel %vm739, %v1181, 0.0
    %1190 = vadd.xlane.f32.xlu0 %v1189
    %v1191 = vpop.xlane.xlu0 %1190
    %v1192 = vsel %vm739, %v1183, 0.0
    %1193 = vadd.xlane.f32.xlu0 %v1192
    %v1194 = vpop.xlane.xlu0 %1193
    %v1195 = vsel %vm739, %v1185, 0.0
    %1196 = vadd.xlane.f32.xlu0 %v1195
    %v1197 = vpop.xlane.xlu0 %1196
    %v1198 = vrcp.pop %v1188
    %v1199 = vrcp.pop %v1191
    %v1200 = vrcp.pop %v1194
    %v1201 = vrcp.pop %v1197
    %v1202 = vmul.f32 %v1179, %v1198
    %v1203 = vmul.f32 %v1181, %v1199
    %v1204 = vmul.f32 %v1183, %v1200
    %v1205 = vmul.f32 %v1185, %v1201
    %1206 = vrot.lane.b32.xlu0 %v865, 48
    %v1207 = vpop.permute.xlu0 %1206
    %1208 = vrot.lane.b32.xlu0 %v868, 48
    %v1209 = vpop.permute.xlu0 %1208
    %1210 = vrot.lane.b32.xlu0 %v900, 48
    %v1211 = vpop.permute.xlu0 %1210
    %1212 = vrot.lane.b32.xlu0 %v903, 48
    %v1213 = vpop.permute.xlu0 %1212
    %v1219 = vsel %vm739, %v1202, 0
    %v1222 = vsel %vm739, %v1203, 0
    %v1225 = vsel %vm739, %v1204, 0
    %v1228 = vsel %vm739, %v1205, 0
    %1230 = vmatpush.msra.mxu0 0.0
    %1231 = vmatpush.msra.mxu0 0.0
    %1232 = vmatpush.msra.mxu0 0.0
    %1233 = vmatpush.msra.mxu0 0.0
    %1234 = vmatpush.msra.mxu0 0.0
    %1235 = vmatpush.msra.mxu0 0.0
    %1236 = vmatpush.msra.mxu0 0.0
    %1237 = vmatpush.msra.mxu0 0.0
    %1238 = vmatpush.msra.mxu0 0.0
    %1239 = vmatpush.msra.mxu0 0.0
    %1240 = vmatpush.msra.mxu0 0.0
    %1241 = vmatpush.msra.mxu0 0.0
    %1242 = vmatpush.msra.mxu0 %v1213
    %1243 = vmatpush.msra.mxu0 %v1211
    %1244 = vmatpush.msra.mxu0 %v1209
    %1245 = vmatpush.msra.mxu0 %v1207
    %1246 = vmatmul.f32.gmra.mxu0 %v1219
    %v1247 = vpop.f32.mrf.mxu0
    %v1248 = vadd.f32 0.0, %v1247
    %1249 = vmatmul.f32.gmra.mxu0 %v1222
    %v1250 = vpop.f32.mrf.mxu0
    %v1251 = vadd.f32 0.0, %v1250
    %1252 = vmatmul.f32.gmra.mxu0 %v1225
    %v1253 = vpop.f32.mrf.mxu0
    %v1254 = vadd.f32 0.0, %v1253
    %1255 = vmatmul.f32.gmra.mxu0 %v1228
    %v1256 = vpop.f32.mrf.mxu0
    %v1257 = vadd.f32 0.0, %v1256
    %1258 = vdwg.mxu0
    %v1260 = vsel %vm33, %v1248, 0
    %v1263 = vsel %vm33, %v1251, 0
    %1265 = vmatpush.msra.mxu0 0.0
    %1266 = vmatpush.msra.mxu0 0.0
    %1267 = vmatpush.msra.mxu0 0.0
    %1268 = vmatpush.msra.mxu0 0.0
    %1269 = vmatpush.msra.mxu0 0.0
    %1270 = vmatpush.msra.mxu0 0.0
    %1271 = vmatpush.msra.mxu0 0.0
    %1272 = vmatpush.msra.mxu0 0.0
    %1273 = vmatpush.msra.mxu0 0.0
    %1274 = vmatpush.msra.mxu0 0.0
    %1275 = vmatpush.msra.mxu0 0.0
    %1276 = vmatpush.msra.mxu0 0.0
    %1277 = vmatpush.msra.mxu0 0.0
    %1278 = vmatpush.msra.mxu0 0.0
    %1279 = vmatpush.msra.mxu0 %v908
    %1280 = vmatpush.msra.mxu0 %v907
    %1281 = vmatmul.f32.gmra.mxu0 %v1260
    %v1282 = vpop.f32.mrf.mxu0
    %v1283 = vadd.f32 0.0, %v1282
    %1284 = vmatmul.f32.gmra.mxu0 %v1263
    %v1285 = vpop.f32.mrf.mxu0
    %v1286 = vadd.f32 0.0, %v1285
    %1287 = vdwg.mxu0
    %v1288 = vadd.f32 %v1084, %v1283
    %v1289 = vadd.f32 %v1085, %v1286
    %v1291 = vsel %vm33, %v1254, 0
    %v1294 = vsel %vm33, %v1257, 0
    %1296 = vmatpush.msra.mxu0 0.0
    %1297 = vmatpush.msra.mxu0 0.0
    %1298 = vmatpush.msra.mxu0 0.0
    %1299 = vmatpush.msra.mxu0 0.0
    %1300 = vmatpush.msra.mxu0 0.0
    %1301 = vmatpush.msra.mxu0 0.0
    %1302 = vmatpush.msra.mxu0 0.0
    %1303 = vmatpush.msra.mxu0 0.0
    %1304 = vmatpush.msra.mxu0 0.0
    %1305 = vmatpush.msra.mxu0 0.0
    %1306 = vmatpush.msra.mxu0 0.0
    %1307 = vmatpush.msra.mxu0 0.0
    %1308 = vmatpush.msra.mxu0 0.0
    %1309 = vmatpush.msra.mxu0 0.0
    %1310 = vmatpush.msra.mxu0 %v912
    %1311 = vmatpush.msra.mxu0 %v911
    %1312 = vmatmul.f32.gmra.mxu0 %v1291
    %v1313 = vpop.f32.mrf.mxu0
    %v1314 = vadd.f32 0.0, %v1313
    %1315 = vmatmul.f32.gmra.mxu0 %v1294
    %v1316 = vpop.f32.mrf.mxu0
    %v1317 = vadd.f32 0.0, %v1316
    %1318 = vdwg.mxu0
    %v1319 = vadd.f32 %v1115, %v1314
    %v1320 = vadd.f32 %v1116, %v1317
    %v1321 = vadd.f32 %v731, %v1288
    %v1322 = vadd.f32 %v732, %v1289
    %v1323 = vadd.f32 %v733, %v1319
    %v1324 = vadd.f32 %v734, %v1320
    %v1325 = vsel %vm739, %v1321, 0.0
    %1326 = vadd.xlane.f32.xlu0 %v1325
    %v1327 = vpop.xlane.xlu0 %1326
    %v1328 = vsel %vm739, %v1322, 0.0
    %1329 = vadd.xlane.f32.xlu0 %v1328
    %v1330 = vpop.xlane.xlu0 %1329
    %v1331 = vsel %vm739, %v1323, 0.0
    %1332 = vadd.xlane.f32.xlu0 %v1331
    %v1333 = vpop.xlane.xlu0 %1332
    %v1334 = vsel %vm739, %v1324, 0.0
    %1335 = vadd.xlane.f32.xlu0 %v1334
    %v1336 = vpop.xlane.xlu0 %1335
    %v1337 = vmul.f32 %v1327, %v758
    %v1338 = vmul.f32 %v1330, %v758
    %v1339 = vmul.f32 %v1333, %v758
    %v1340 = vmul.f32 %v1336, %v758
    %v1341 = vsub.f32 %v1321, %v1337
    %v1342 = vsub.f32 %v1322, %v1338
    %v1343 = vsub.f32 %v1323, %v1339
    %v1344 = vsub.f32 %v1324, %v1340
    %v1345 = vmul.f32 %v1341, %v1341
    %v1346 = vmul.f32 %v1342, %v1342
    %v1347 = vmul.f32 %v1343, %v1343
    %v1348 = vmul.f32 %v1344, %v1344
    %v1349 = vsel %vm739, %v1345, 0.0
    %1350 = vadd.xlane.f32.xlu0 %v1349
    %v1351 = vpop.xlane.xlu0 %1350
    %v1352 = vsel %vm739, %v1346, 0.0
    %1353 = vadd.xlane.f32.xlu0 %v1352
    %v1354 = vpop.xlane.xlu0 %1353
    %v1355 = vsel %vm739, %v1347, 0.0
    %1356 = vadd.xlane.f32.xlu0 %v1355
    %v1357 = vpop.xlane.xlu0 %1356
    %v1358 = vsel %vm739, %v1348, 0.0
    %1359 = vadd.xlane.f32.xlu0 %v1358
    %v1360 = vpop.xlane.xlu0 %1359
    %v1361 = vmul.f32 %v1351, %v758
    %v1362 = vmul.f32 %v1354, %v758
    %v1363 = vmul.f32 %v1357, %v758
    %v1364 = vmul.f32 %v1360, %v758
    %v1365 = vadd.f32 %v1361, 1e-05
    %v1366 = vadd.f32 %v1362, 1e-05
    %v1367 = vadd.f32 %v1363, 1e-05
    %v1368 = vadd.f32 %v1364, 1e-05
    %v1369 = vrsqrt.pop %v1365
    %v1370 = vmul.f32 %v1369, %v1365
    %v1371 = vmul.f32 %v1370, %v1369
    %v1372 = vmul.f32 0.5, %v1371
    %v1373 = vsub.f32 1.5, %v1372
    %v1374 = vmul.f32 %v1369, %v1373
    %vm1375 = vweird.f32 %v1365
    %vm1376 = vweird.f32 %v1369
    %vm1377 = vmor %vm1375, %vm1376
    %v1378 = vsel %vm1377, %v1369, %v1374
    %v1379 = vrsqrt.pop %v1366
    %v1380 = vmul.f32 %v1379, %v1366
    %v1381 = vmul.f32 %v1380, %v1379
    %v1382 = vmul.f32 0.5, %v1381
    %v1383 = vsub.f32 1.5, %v1382
    %v1384 = vmul.f32 %v1379, %v1383
    %vm1385 = vweird.f32 %v1366
    %vm1386 = vweird.f32 %v1379
    %vm1387 = vmor %vm1385, %vm1386
    %v1388 = vsel %vm1387, %v1379, %v1384
    %v1389 = vrsqrt.pop %v1367
    %v1390 = vmul.f32 %v1389, %v1367
    %v1391 = vmul.f32 %v1390, %v1389
    %v1392 = vmul.f32 0.5, %v1391
    %v1393 = vsub.f32 1.5, %v1392
    %v1394 = vmul.f32 %v1389, %v1393
    %vm1395 = vweird.f32 %v1367
    %vm1396 = vweird.f32 %v1389
    %vm1397 = vmor %vm1395, %vm1396
    %v1398 = vsel %vm1397, %v1389, %v1394
    %v1399 = vrsqrt.pop %v1368
    %v1400 = vmul.f32 %v1399, %v1368
    %v1401 = vmul.f32 %v1400, %v1399
    %v1402 = vmul.f32 0.5, %v1401
    %v1403 = vsub.f32 1.5, %v1402
    %v1404 = vmul.f32 %v1399, %v1403
    %vm1405 = vweird.f32 %v1368
    %vm1406 = vweird.f32 %v1399
    %vm1407 = vmor %vm1405, %vm1406
    %v1408 = vsel %vm1407, %v1399, %v1404
    %v1409 = vmul.f32 %v1341, %v1378
    %v1410 = vmul.f32 %v1342, %v1388
    %v1411 = vmul.f32 %v1343, %v1398
    %v1412 = vmul.f32 %v1344, %v1408
    %v1413 = vld [vmem:[#allocation2 + $0x110] sm:$0xff]
    %v1414 = vld [vmem:[#allocation2 + $0x118] sm:$0xff]
    %v1415 = vld [vmem:[#allocation2 + $0x120] sm:$0xff]
    %v1416 = vld [vmem:[#allocation2 + $0x128] sm:$0xff]
    %v1417 = vld [vmem:[#allocation2 + $0x130] sm:$0xff]
    %v1418 = vld [vmem:[#allocation2 + $0x138] sm:$0xff]
    %v1420 = vsel %vm739, %v1409, 0
    %v1423 = vsel %vm739, %v1410, 0
    %1425 = vmatpush.msra.mxu0 0.0
    %1426 = vmatpush.msra.mxu0 0.0
    %1427 = vmatpush.msra.mxu0 0.0
    %1428 = vmatpush.msra.mxu0 0.0
    %1429 = vmatpush.msra.mxu0 0.0
    %1430 = vmatpush.msra.mxu0 0.0
    %1431 = vmatpush.msra.mxu0 0.0
    %1432 = vmatpush.msra.mxu0 0.0
    %1433 = vmatpush.msra.mxu0 0.0
    %1434 = vmatpush.msra.mxu0 0.0
    %1435 = vmatpush.msra.mxu0 0.0
    %1436 = vmatpush.msra.mxu0 0.0
    %1437 = vmatpush.msra.mxu0 %v1416
    %1438 = vmatpush.msra.mxu0 %v1415
    %1439 = vmatpush.msra.mxu0 %v1414
    %1440 = vmatpush.msra.mxu0 %v1413
    %1441 = vmatmul.f32.gmra.mxu0 %v1420
    %v1442 = vpop.f32.mrf.mxu0
    %v1443 = vadd.f32 %v1417, %v1442
    %1444 = vmatmul.f32.gmra.mxu0 %v1423
    %v1445 = vpop.f32.mrf.mxu0
    %v1446 = vadd.f32 %v1418, %v1445
    %1447 = vdwg.mxu0
    %v1448 = vld [vmem:[#allocation2 + $0x2d0] sm:$0xff]
    %v1449 = vld [vmem:[#allocation2 + $0x2d8] sm:$0xff]
    %v1450 = vld [vmem:[#allocation2 + $0x2e0] sm:$0xff]
    %v1451 = vld [vmem:[#allocation2 + $0x2e8] sm:$0xff]
    %v1452 = vld [vmem:[#allocation2 + $0x2f0] sm:$0xff]
    %v1453 = vld [vmem:[#allocation2 + $0x2f8] sm:$0xff]
    %v1455 = vsel %vm739, %v1411, 0
    %v1458 = vsel %vm739, %v1412, 0
    %1460 = vmatpush.msra.mxu0 0.0
    %1461 = vmatpush.msra.mxu0 0.0
    %1462 = vmatpush.msra.mxu0 0.0
    %1463 = vmatpush.msra.mxu0 0.0
    %1464 = vmatpush.msra.mxu0 0.0
    %1465 = vmatpush.msra.mxu0 0.0
    %1466 = vmatpush.msra.mxu0 0.0
    %1467 = vmatpush.msra.mxu0 0.0
    %1468 = vmatpush.msra.mxu0 0.0
    %1469 = vmatpush.msra.mxu0 0.0
    %1470 = vmatpush.msra.mxu0 0.0
    %1471 = vmatpush.msra.mxu0 0.0
    %1472 = vmatpush.msra.mxu0 %v1451
    %1473 = vmatpush.msra.mxu0 %v1450
    %1474 = vmatpush.msra.mxu0 %v1449
    %1475 = vmatpush.msra.mxu0 %v1448
    %1476 = vmatmul.f32.gmra.mxu0 %v1455
    %v1477 = vpop.f32.mrf.mxu0
    %v1478 = vadd.f32 %v1452, %v1477
    %1479 = vmatmul.f32.gmra.mxu0 %v1458
    %v1480 = vpop.f32.mrf.mxu0
    %v1481 = vadd.f32 %v1453, %v1480
    %1482 = vdwg.mxu0
    %v1483 = vmul.f32 %v1443, 0.5
    %v1484 = vmul.f32 %v1446, 0.5
    %v1485 = vmul.f32 %v1478, 0.5
    %v1486 = vmul.f32 %v1481, 0.5
    %v1487 = vmul.f32 %v1443, 0.044715
    %v1488 = vmul.f32 %v1446, 0.044715
    %v1489 = vmul.f32 %v1478, 0.044715
    %v1490 = vmul.f32 %v1481, 0.044715
    %v1491 = vmul.f32 %v1487, %v1443
    %v1492 = vmul.f32 %v1488, %v1446
    %v1493 = vmul.f32 %v1489, %v1478
    %v1494 = vmul.f32 %v1490, %v1481
    %v1495 = vmul.f32 %v1491, %v1443
    %v1496 = vmul.f32 %v1492, %v1446
    %v1497 = vmul.f32 %v1493, %v1478
    %v1498 = vmul.f32 %v1494, %v1481
    %v1499 = vadd.f32 %v1443, %v1495
    %v1500 = vadd.f32 %v1446, %v1496
    %v1501 = vadd.f32 %v1478, %v1497
    %v1502 = vadd.f32 %v1481, %v1498
    %v1503 = vmul.f32 %v1499, 0.7978846
    %v1504 = vmul.f32 %v1500, 0.7978846
    %v1505 = vmul.f32 %v1501, 0.7978846
    %v1506 = vmul.f32 %v1502, 0.7978846
    %v1507 = vtanh.pop %v1503
    %v1508 = vtanh.pop %v1504
    %v1509 = vtanh.pop %v1505
    %v1510 = vtanh.pop %v1506
    %v1511 = vadd.f32 %v1507, 1.0
    %v1512 = vadd.f32 %v1508, 1.0
    %v1513 = vadd.f32 %v1509, 1.0
    %v1514 = vadd.f32 %v1510, 1.0
    %v1515 = vmul.f32 %v1483, %v1511
    %v1516 = vmul.f32 %v1484, %v1512
    %v1517 = vmul.f32 %v1485, %v1513
    %v1518 = vmul.f32 %v1486, %v1514
    %v1519 = vld [vmem:[#allocation2 + $0x140] sm:$0xff]
    %v1520 = vld [vmem:[#allocation2 + $0x148] sm:$0xff]
    %v1521 = vld [vmem:[#allocation2 + $0x150] sm:$0xff]
    %v1522 = vld [vmem:[#allocation2 + $0x158] sm:$0xff]
    %v1523 = vld [vmem:[#allocation2 + $0x160] sm:$0xff]
    %v1524 = vld [vmem:[#allocation2 + $0x168] sm:$0xff]
    %v1525 = vld [vmem:[#allocation2 + $0x170] sm:$0xff]
    %v1526 = vld [vmem:[#allocation2 + $0x178] sm:$0xff]
    %v1527 = vld [vmem:[#allocation2 + $0x180] sm:$0xff]
    %v1528 = vld [vmem:[#allocation2 + $0x188] sm:$0xff]
    %vm1529 = vcmask 523264
    %v1531 = vsel %vm1529, %v1515, 0
    %v1534 = vsel %vm1529, %v1516, 0
    %1536 = vmatpush.msra.mxu0 0.0
    %1537 = vmatpush.msra.mxu0 0.0
    %1538 = vmatpush.msra.mxu0 0.0
    %1539 = vmatpush.msra.mxu0 0.0
    %1540 = vmatpush.msra.mxu0 0.0
    %1541 = vmatpush.msra.mxu0 0.0
    %1542 = vmatpush.msra.mxu0 0.0
    %1543 = vmatpush.msra.mxu0 0.0
    %1544 = vmatpush.msra.mxu0 %v1526
    %1545 = vmatpush.msra.mxu0 %v1525
    %1546 = vmatpush.msra.mxu0 %v1524
    %1547 = vmatpush.msra.mxu0 %v1523
    %1548 = vmatpush.msra.mxu0 %v1522
    %1549 = vmatpush.msra.mxu0 %v1521
    %1550 = vmatpush.msra.mxu0 %v1520
    %1551 = vmatpush.msra.mxu0 %v1519
    %1552 = vmatmul.f32.gmra.mxu0 %v1531
    %v1553 = vpop.f32.mrf.mxu0
    %v1554 = vadd.f32 %v1527, %v1553
    %1555 = vmatmul.f32.gmra.mxu0 %v1534
    %v1556 = vpop.f32.mrf.mxu0
    %v1557 = vadd.f32 %v1528, %v1556
    %1558 = vdwg.mxu0
    %v1559 = vld [vmem:[#allocation2 + $0x300] sm:$0xff]
    %v1560 = vld [vmem:[#allocation2 + $0x308] sm:$0xff]
    %v1561 = vld [vmem:[#allocation2 + $0x310] sm:$0xff]
    %v1562 = vld [vmem:[#allocation2 + $0x318] sm:$0xff]
    %v1563 = vld [vmem:[#allocation2 + $0x320] sm:$0xff]
    %v1564 = vld [vmem:[#allocation2 + $0x328] sm:$0xff]
    %v1565 = vld [vmem:[#allocation2 + $0x330] sm:$0xff]
    %v1566 = vld [vmem:[#allocation2 + $0x338] sm:$0xff]
    %v1567 = vld [vmem:[#allocation2 + $0x340] sm:$0xff]
    %v1568 = vld [vmem:[#allocation2 + $0x348] sm:$0xff]
    %v1570 = vsel %vm1529, %v1517, 0
    %v1573 = vsel %vm1529, %v1518, 0
    %1575 = vmatpush.msra.mxu0 0.0
    %1576 = vmatpush.msra.mxu0 0.0
    %1577 = vmatpush.msra.mxu0 0.0
    %1578 = vmatpush.msra.mxu0 0.0
    %1579 = vmatpush.msra.mxu0 0.0
    %1580 = vmatpush.msra.mxu0 0.0
    %1581 = vmatpush.msra.mxu0 0.0
    %1582 = vmatpush.msra.mxu0 0.0
    %1583 = vmatpush.msra.mxu0 %v1566
    %1584 = vmatpush.msra.mxu0 %v1565
    %1585 = vmatpush.msra.mxu0 %v1564
    %1586 = vmatpush.msra.mxu0 %v1563
    %1587 = vmatpush.msra.mxu0 %v1562
    %1588 = vmatpush.msra.mxu0 %v1561
    %1589 = vmatpush.msra.mxu0 %v1560
    %1590 = vmatpush.msra.mxu0 %v1559
    %1591 = vmatmul.f32.gmra.mxu0 %v1570
    %v1592 = vpop.f32.mrf.mxu0
    %v1593 = vadd.f32 %v1567, %v1592
    %1594 = vmatmul.f32.gmra.mxu0 %v1573
    %v1595 = vpop.f32.mrf.mxu0
    %v1596 = vadd.f32 %v1568, %v1595
    %1597 = vdwg.mxu0
    %v1598 = vadd.f32 %v1321, %v1554
    %v1599 = vadd.f32 %v1322, %v1557
    %v1600 = vadd.f32 %v1323, %v1593
    %v1601 = vadd.f32 %v1324, %v1596
    %v1602 = vsel %vm739, %v1598, 0.0
    %1603 = vadd.xlane.f32.xlu0 %v1602
    %v1604 = vpop.xlane.xlu0 %1603
    %v1605 = vsel %vm739, %v1599, 0.0
    %1606 = vadd.xlane.f32.xlu0 %v1605
    %v1607 = vpop.xlane.xlu0 %1606
    %v1608 = vsel %vm739, %v1600, 0.0
    %1609 = vadd.xlane.f32.xlu0 %v1608
    %v1610 = vpop.xlane.xlu0 %1609
    %v1611 = vsel %vm739, %v1601, 0.0
    %1612 = vadd.xlane.f32.xlu0 %v1611
    %v1613 = vpop.xlane.xlu0 %1612
    %v1614 = vmul.f32 %v1604, %v758
    %v1615 = vmul.f32 %v1607, %v758
    %v1616 = vmul.f32 %v1610, %v758
    %v1617 = vmul.f32 %v1613, %v758
    %v1618 = vsub.f32 %v1598, %v1614
    %v1619 = vsub.f32 %v1599, %v1615
    %v1620 = vsub.f32 %v1600, %v1616
    %v1621 = vsub.f32 %v1601, %v1617
    %v1622 = vmul.f32 %v1618, %v1618
    %v1623 = vmul.f32 %v1619, %v1619
    %v1624 = vmul.f32 %v1620, %v1620
    %v1625 = vmul.f32 %v1621, %v1621
    %v1626 = vsel %vm739, %v1622, 0.0
    %1627 = vadd.xlane.f32.xlu0 %v1626
    %v1628 = vpop.xlane.xlu0 %1627
    %v1629 = vsel %vm739, %v1623, 0.0
    %1630 = vadd.xlane.f32.xlu0 %v1629
    %v1631 = vpop.xlane.xlu0 %1630
    %v1632 = vsel %vm739, %v1624, 0.0
    %1633 = vadd.xlane.f32.xlu0 %v1632
    %v1634 = vpop.xlane.xlu0 %1633
    %v1635 = vsel %vm739, %v1625, 0.0
    %1636 = vadd.xlane.f32.xlu0 %v1635
    %v1637 = vpop.xlane.xlu0 %1636
    %v1638 = vmul.f32 %v1628, %v758
    %v1639 = vmul.f32 %v1631, %v758
    %v1640 = vmul.f32 %v1634, %v758
    %v1641 = vmul.f32 %v1637, %v758
    %v1642 = vadd.f32 %v1638, 1e-05
    %v1643 = vadd.f32 %v1639, 1e-05
    %v1644 = vadd.f32 %v1640, 1e-05
    %v1645 = vadd.f32 %v1641, 1e-05
    %v1646 = vrsqrt.pop %v1642
    %v1647 = vmul.f32 %v1646, %v1642
    %v1648 = vmul.f32 %v1647, %v1646
    %v1649 = vmul.f32 0.5, %v1648
    %v1650 = vsub.f32 1.5, %v1649
    %v1651 = vmul.f32 %v1646, %v1650
    %vm1652 = vweird.f32 %v1642
    %vm1653 = vweird.f32 %v1646
    %vm1654 = vmor %vm1652, %vm1653
    %v1655 = vsel %vm1654, %v1646, %v1651
    %v1656 = vrsqrt.pop %v1643
    %v1657 = vmul.f32 %v1656, %v1643
    %v1658 = vmul.f32 %v1657, %v1656
    %v1659 = vmul.f32 0.5, %v1658
    %v1660 = vsub.f32 1.5, %v1659
    %v1661 = vmul.f32 %v1656, %v1660
    %vm1662 = vweird.f32 %v1643
    %vm1663 = vweird.f32 %v1656
    %vm1664 = vmor %vm1662, %vm1663
    %v1665 = vsel %vm1664, %v1656, %v1661
    %v1666 = vrsqrt.pop %v1644
    %v1667 = vmul.f32 %v1666, %v1644
    %v1668 = vmul.f32 %v1667, %v1666
    %v1669 = vmul.f32 0.5, %v1668
    %v1670 = vsub.f32 1.5, %v1669
    %v1671 = vmul.f32 %v1666, %v1670
    %vm1672 = vweird.f32 %v1644
    %vm1673 = vweird.f32 %v1666
    %vm1674 = vmor %vm1672, %vm1673
    %v1675 = vsel %vm1674, %v1666, %v1671
    %v1676 = vrsqrt.pop %v1645
    %v1677 = vmul.f32 %v1676, %v1645
    %v1678 = vmul.f32 %v1677, %v1676
    %v1679 = vmul.f32 0.5, %v1678
    %v1680 = vsub.f32 1.5, %v1679
    %v1681 = vmul.f32 %v1676, %v1680
    %vm1682 = vweird.f32 %v1645
    %vm1683 = vweird.f32 %v1676
    %vm1684 = vmor %vm1682, %vm1683
    %v1685 = vsel %vm1684, %v1676, %v1681
    %v1686 = vmul.f32 %v1618, %v1655
    %v1687 = vmul.f32 %v1619, %v1665
    %v1688 = vmul.f32 %v1620, %v1675
    %v1689 = vmul.f32 %v1621, %v1685
    %v1690 = vld [vmem:[#allocation2 + $0x190] sm:$0xff]
    %v1691 = vld [vmem:[#allocation2 + $0x198] sm:$0xff]
    %v1692 = vld [vmem:[#allocation2 + $0x1a0] sm:$0xff]
    %v1693 = vld [vmem:[#allocation2 + $0x1a8] sm:$0xff]
    %v1694 = vld [vmem:[#allocation2 + $0x1b0] sm:$0xff]
    %v1695 = vld [vmem:[#allocation2 + $0x1b8] sm:$0xff]
    %v1697 = vsel %vm739, %v1686, 0
    %v1700 = vsel %vm739, %v1687, 0
    %1702 = vmatpush.msra.mxu0 0.0
    %1703 = vmatpush.msra.mxu0 0.0
    %1704 = vmatpush.msra.mxu0 0.0
    %1705 = vmatpush.msra.mxu0 0.0
    %1706 = vmatpush.msra.mxu0 0.0
    %1707 = vmatpush.msra.mxu0 0.0
    %1708 = vmatpush.msra.mxu0 0.0
    %1709 = vmatpush.msra.mxu0 0.0
    %1710 = vmatpush.msra.mxu0 0.0
    %1711 = vmatpush.msra.mxu0 0.0
    %1712 = vmatpush.msra.mxu0 0.0
    %1713 = vmatpush.msra.mxu0 0.0
    %1714 = vmatpush.msra.mxu0 %v1693
    %1715 = vmatpush.msra.mxu0 %v1692
    %1716 = vmatpush.msra.mxu0 %v1691
    %1717 = vmatpush.msra.mxu0 %v1690
    %1718 = vmatmul.f32.gmra.mxu0 %v1697
    %v1719 = vpop.f32.mrf.mxu0
    %v1720 = vadd.f32 %v1694, %v1719
    %1721 = vmatmul.f32.gmra.mxu0 %v1700
    %v1722 = vpop.f32.mrf.mxu0
    %v1723 = vadd.f32 %v1695, %v1722
    %1724 = vdwg.mxu0
    %v1725 = vld [vmem:[#allocation2 + $0x350] sm:$0xff]
    %v1726 = vld [vmem:[#allocation2 + $0x358] sm:$0xff]
    %v1727 = vld [vmem:[#allocation2 + $0x360] sm:$0xff]
    %v1728 = vld [vmem:[#allocation2 + $0x368] sm:$0xff]
    %v1729 = vld [vmem:[#allocation2 + $0x370] sm:$0xff]
    %v1730 = vld [vmem:[#allocation2 + $0x378] sm:$0xff]
    %v1732 = vsel %vm739, %v1688, 0
    %v1735 = vsel %vm739, %v1689, 0
    %1737 = vmatpush.msra.mxu0 0.0
    %1738 = vmatpush.msra.mxu0 0.0
    %1739 = vmatpush.msra.mxu0 0.0
    %1740 = vmatpush.msra.mxu0 0.0
    %1741 = vmatpush.msra.mxu0 0.0
    %1742 = vmatpush.msra.mxu0 0.0
    %1743 = vmatpush.msra.mxu0 0.0
    %1744 = vmatpush.msra.mxu0 0.0
    %1745 = vmatpush.msra.mxu0 0.0
    %1746 = vmatpush.msra.mxu0 0.0
    %1747 = vmatpush.msra.mxu0 0.0
    %1748 = vmatpush.msra.mxu0 0.0
    %1749 = vmatpush.msra.mxu0 %v1728
    %1750 = vmatpush.msra.mxu0 %v1727
    %1751 = vmatpush.msra.mxu0 %v1726
    %1752 = vmatpush.msra.mxu0 %v1725
    %1753 = vmatmul.f32.gmra.mxu0 %v1732
    %v1754 = vpop.f32.mrf.mxu0
    %v1755 = vadd.f32 %v1729, %v1754
    %1756 = vmatmul.f32.gmra.mxu0 %v1735
    %v1757 = vpop.f32.mrf.mxu0
    %v1758 = vadd.f32 %v1730, %v1757
    %1759 = vdwg.mxu0
    %v1760 = vld [vmem:[#allocation2 + $0x1c0] sm:$0xff]
    %v1761 = vld [vmem:[#allocation2 + $0x1c8] sm:$0xff]
    %v1762 = vld [vmem:[#allocation2 + $0x1d0] sm:$0xff]
    %v1763 = vld [vmem:[#allocation2 + $0x1d8] sm:$0xff]
    %v1764 = vld [vmem:[#allocation2 + $0x380] sm:$0xff]
    %v1765 = vld [vmem:[#allocation2 + $0x388] sm:$0xff]
    %v1766 = vld [vmem:[#allocation2 + $0x390] sm:$0xff]
    %v1767 = vld [vmem:[#allocation2 + $0x398] sm:$0xff]
    %v1768 = vld [vmem:[#allocation2 + $0x1e0] sm:$0xff]
    %v1769 = vld [vmem:[#allocation2 + $0x1e8] sm:$0xff]
    %v1770 = vld [vmem:[#allocation2 + $0x3a0] sm:$0xff]
    %v1771 = vld [vmem:[#allocation2 + $0x3a8] sm:$0xff]
    %1776 = vrot.lane.b32.xlu0 %v1720, 96
    %v1777 = vpop.permute.xlu0 %1776
    %1778 = vrot.lane.b32.xlu0 %v1723, 96
    %v1779 = vpop.permute.xlu0 %1778
    %1780 = vrot.lane.b32.xlu0 %v1755, 96
    %v1781 = vpop.permute.xlu0 %1780
    %1782 = vrot.lane.b32.xlu0 %v1758, 96
    %v1783 = vpop.permute.xlu0 %1782
    %v1784 = vsel %vm33, %v1720, 0
    %v1786 = vsel %vm33, %v1723, 0
    %v1788 = vsel %vm33, %v1755, 0
    %v1790 = vsel %vm33, %v1758, 0
    %v1792 = vsel %vm33, %v1777, 0
    %v1794 = vsel %vm33, %v1779, 0
    %v1796 = vsel %vm33, %v1781, 0
    %v1798 = vsel %vm33, %v1783, 0
    %1800 = vmatpush.xpose.msra.mxu0 0.0
    %1801 = vmatpush.xpose.msra.mxu0 0.0
    %1802 = vmatpush.xpose.msra.mxu0 0.0
    %1803 = vmatpush.xpose.msra.mxu0 0.0
    %1804 = vmatpush.xpose.msra.mxu0 0.0
    %1805 = vmatpush.xpose.msra.mxu0 0.0
    %1806 = vmatpush.xpose.msra.mxu0 0.0
    %1807 = vmatpush.xpose.msra.mxu0 0.0
    %1808 = vmatpush.xpose.msra.mxu0 0.0
    %1809 = vmatpush.xpose.msra.mxu0 0.0
    %1810 = vmatpush.xpose.msra.mxu0 0.0
    %1811 = vmatpush.xpose.msra.mxu0 0.0
    %1812 = vmatpush.xpose.msra.mxu0 %v1798
    %1813 = vmatpush.xpose.msra.mxu0 %v1796
    %1814 = vmatpush.xpose.msra.mxu0 %v1794
    %1815 = vmatpush.xpose.msra.mxu0 %v1792
    %1816 = vmatmul.f32.gmra.mxu0 %v1784
    %v1817 = vpop.f32.mrf.mxu0
    %v1818 = vadd.f32 %v735, %v1817
    %1819 = vmatmul.f32.gmra.mxu0 %v1786
    %v1820 = vpop.f32.mrf.mxu0
    %v1821 = vadd.f32 %v736, %v1820
    %1822 = vmatmul.f32.gmra.mxu0 %v1788
    %v1823 = vpop.f32.mrf.mxu0
    %v1824 = vadd.f32 %v737, %v1823
    %1825 = vmatmul.f32.gmra.mxu0 %v1790
    %v1826 = vpop.f32.mrf.mxu0
    %v1827 = vadd.f32 %v738, %v1826
    %1828 = vdwg.mxu0
    %v1829 = vmul.f32 %v1818, 1.442695
    %v1830 = vpow.pop %v1829
    %v1831 = vmul.f32 %v1821, 1.442695
    %v1832 = vpow.pop %v1831
    %v1833 = vmul.f32 %v1824, 1.442695
    %v1834 = vpow.pop %v1833
    %v1835 = vmul.f32 %v1827, 1.442695
    %v1836 = vpow.pop %v1835
    %v1837 = vsel %vm739, %v1830, 0.0
    %1838 = vadd.xlane.f32.xlu0 %v1837
    %v1839 = vpop.xlane.xlu0 %1838
    %v1840 = vsel %vm739, %v1832, 0.0
    %1841 = vadd.xlane.f32.xlu0 %v1840
    %v1842 = vpop.xlane.xlu0 %1841
    %v1843 = vsel %vm739, %v1834, 0.0
    %1844 = vadd.xlane.f32.xlu0 %v1843
    %v1845 = vpop.xlane.xlu0 %1844
    %v1846 = vsel %vm739, %v1836, 0.0
    %1847 = vadd.xlane.f32.xlu0 %v1846
    %v1848 = vpop.xlane.xlu0 %1847
    %v1849 = vrcp.pop %v1839
    %v1850 = vrcp.pop %v1842
    %v1851 = vrcp.pop %v1845
    %v1852 = vrcp.pop %v1848
    %v1853 = vmul.f32 %v1830, %v1849
    %v1854 = vmul.f32 %v1832, %v1850
    %v1855 = vmul.f32 %v1834, %v1851
    %v1856 = vmul.f32 %v1836, %v1852
    %1857 = vrot.lane.b32.xlu0 %v1720, 64
    %v1858 = vpop.permute.xlu0 %1857
    %1859 = vrot.lane.b32.xlu0 %v1723, 64
    %v1860 = vpop.permute.xlu0 %1859
    %1861 = vrot.lane.b32.xlu0 %v1755, 64
    %v1862 = vpop.permute.xlu0 %1861
    %1863 = vrot.lane.b32.xlu0 %v1758, 64
    %v1864 = vpop.permute.xlu0 %1863
    %v1870 = vsel %vm739, %v1853, 0
    %v1873 = vsel %vm739, %v1854, 0
    %v1876 = vsel %vm739, %v1855, 0
    %v1879 = vsel %vm739, %v1856, 0
    %1881 = vmatpush.msra.mxu0 0.0
    %1882 = vmatpush.msra.mxu0 0.0
    %1883 = vmatpush.msra.mxu0 0.0
    %1884 = vmatpush.msra.mxu0 0.0
    %1885 = vmatpush.msra.mxu0 0.0
    %1886 = vmatpush.msra.mxu0 0.0
    %1887 = vmatpush.msra.mxu0 0.0
    %1888 = vmatpush.msra.mxu0 0.0
    %1889 = vmatpush.msra.mxu0 0.0
    %1890 = vmatpush.msra.mxu0 0.0
    %1891 = vmatpush.msra.mxu0 0.0
    %1892 = vmatpush.msra.mxu0 0.0
    %1893 = vmatpush.msra.mxu0 %v1864
    %1894 = vmatpush.msra.mxu0 %v1862
    %1895 = vmatpush.msra.mxu0 %v1860
    %1896 = vmatpush.msra.mxu0 %v1858
    %1897 = vmatmul.f32.gmra.mxu0 %v1870
    %v1898 = vpop.f32.mrf.mxu0
    %v1899 = vadd.f32 0.0, %v1898
    %1900 = vmatmul.f32.gmra.mxu0 %v1873
    %v1901 = vpop.f32.mrf.mxu0
    %v1902 = vadd.f32 0.0, %v1901
    %1903 = vmatmul.f32.gmra.mxu0 %v1876
    %v1904 = vpop.f32.mrf.mxu0
    %v1905 = vadd.f32 0.0, %v1904
    %1906 = vmatmul.f32.gmra.mxu0 %v1879
    %v1907 = vpop.f32.mrf.mxu0
    %v1908 = vadd.f32 0.0, %v1907
    %1909 = vdwg.mxu0
    %v1911 = vsel %vm33, %v1899, 0
    %v1914 = vsel %vm33, %v1902, 0
    %1916 = vmatpush.msra.mxu0 0.0
    %1917 = vmatpush.msra.mxu0 0.0
    %1918 = vmatpush.msra.mxu0 0.0
    %1919 = vmatpush.msra.mxu0 0.0
    %1920 = vmatpush.msra.mxu0 0.0
    %1921 = vmatpush.msra.mxu0 0.0
    %1922 = vmatpush.msra.mxu0 0.0
    %1923 = vmatpush.msra.mxu0 0.0
    %1924 = vmatpush.msra.mxu0 0.0
    %1925 = vmatpush.msra.mxu0 0.0
    %1926 = vmatpush.msra.mxu0 0.0
    %1927 = vmatpush.msra.mxu0 0.0
    %1928 = vmatpush.msra.mxu0 0.0
    %1929 = vmatpush.msra.mxu0 0.0
    %1930 = vmatpush.msra.mxu0 %v1761
    %1931 = vmatpush.msra.mxu0 %v1760
    %1932 = vmatmul.f32.gmra.mxu0 %v1911
    %v1933 = vpop.f32.mrf.mxu0
    %v1934 = vadd.f32 0.0, %v1933
    %1935 = vmatmul.f32.gmra.mxu0 %v1914
    %v1936 = vpop.f32.mrf.mxu0
    %v1937 = vadd.f32 0.0, %v1936
    %1938 = vdwg.mxu0
    %v1939 = vadd.f32 %v1768, %v1934
    %v1940 = vadd.f32 %v1769, %v1937
    %v1942 = vsel %vm33, %v1905, 0
    %v1945 = vsel %vm33, %v1908, 0
    %1947 = vmatpush.msra.mxu0 0.0
    %1948 = vmatpush.msra.mxu0 0.0
    %1949 = vmatpush.msra.mxu0 0.0
    %1950 = vmatpush.msra.mxu0 0.0
    %1951 = vmatpush.msra.mxu0 0.0
    %1952 = vmatpush.msra.mxu0 0.0
    %1953 = vmatpush.msra.mxu0 0.0
    %1954 = vmatpush.msra.mxu0 0.0
    %1955 = vmatpush.msra.mxu0 0.0
    %1956 = vmatpush.msra.mxu0 0.0
    %1957 = vmatpush.msra.mxu0 0.0
    %1958 = vmatpush.msra.mxu0 0.0
    %1959 = vmatpush.msra.mxu0 0.0
    %1960 = vmatpush.msra.mxu0 0.0
    %1961 = vmatpush.msra.mxu0 %v1765
    %1962 = vmatpush.msra.mxu0 %v1764
    %1963 = vmatmul.f32.gmra.mxu0 %v1942
    %v1964 = vpop.f32.mrf.mxu0
    %v1965 = vadd.f32 0.0, %v1964
    %1966 = vmatmul.f32.gmra.mxu0 %v1945
    %v1967 = vpop.f32.mrf.mxu0
    %v1968 = vadd.f32 0.0, %v1967
    %1969 = vdwg.mxu0
    %v1970 = vadd.f32 %v1770, %v1965
    %v1971 = vadd.f32 %v1771, %v1968
    %1972 = vrot.lane.b32.xlu0 %v1720, 112
    %v1973 = vpop.permute.xlu0 %1972
    %1974 = vrot.lane.b32.xlu0 %v1723, 112
    %v1975 = vpop.permute.xlu0 %1974
    %1976 = vrot.lane.b32.xlu0 %v1755, 112
    %v1977 = vpop.permute.xlu0 %1976
    %1978 = vrot.lane.b32.xlu0 %v1758, 112
    %v1979 = vpop.permute.xlu0 %1978
    %1980 = vrot.lane.b32.xlu0 %v1720, 80
    %v1981 = vpop.permute.xlu0 %1980
    %1982 = vrot.lane.b32.xlu0 %v1723, 80
    %v1983 = vpop.permute.xlu0 %1982
    %1984 = vrot.lane.b32.xlu0 %v1755, 80
    %v1985 = vpop.permute.xlu0 %1984
    %1986 = vrot.lane.b32.xlu0 %v1758, 80
    %v1987 = vpop.permute.xlu0 %1986
    %v1988 = vsel %vm33, %v1973, 0
    %v1990 = vsel %vm33, %v1975, 0
    %v1992 = vsel %vm33, %v1977, 0
    %v1994 = vsel %vm33, %v1979, 0
    %v1996 = vsel %vm33, %v1981, 0
    %v1998 = vsel %vm33, %v1983, 0
    %v2000 = vsel %vm33, %v1985, 0
    %v2002 = vsel %vm33, %v1987, 0
    %2004 = vmatpush.xpose.msra.mxu0 0.0
    %2005 = vmatpush.xpose.msra.mxu0 0.0
    %2006 = vmatpush.xpose.msra.mxu0 0.0
    %2007 = vmatpush.xpose.msra.mxu0 0.0
    %2008 = vmatpush.xpose.msra.mxu0 0.0
    %2009 = vmatpush.xpose.msra.mxu0 0.0
    %2010 = vmatpush.xpose.msra.mxu0 0.0
    %2011 = vmatpush.xpose.msra.mxu0 0.0
    %2012 = vmatpush.xpose.msra.mxu0 0.0
    %2013 = vmatpush.xpose.msra.mxu0 0.0
    %2014 = vmatpush.xpose.msra.mxu0 0.0
    %2015 = vmatpush.xpose.msra.mxu0 0.0
    %2016 = vmatpush.xpose.msra.mxu0 %v2002
    %2017 = vmatpush.xpose.msra.mxu0 %v2000
    %2018 = vmatpush.xpose.msra.mxu0 %v1998
    %2019 = vmatpush.xpose.msra.mxu0 %v1996
    %2020 = vmatmul.f32.gmra.mxu0 %v1988
    %v2021 = vpop.f32.mrf.mxu0
    %v2022 = vadd.f32 %v735, %v2021
    %2023 = vmatmul.f32.gmra.mxu0 %v1990
    %v2024 = vpop.f32.mrf.mxu0
    %v2025 = vadd.f32 %v736, %v2024
    %2026 = vmatmul.f32.gmra.mxu0 %v1992
    %v2027 = vpop.f32.mrf.mxu0
    %v2028 = vadd.f32 %v737, %v2027
    %2029 = vmatmul.f32.gmra.mxu0 %v1994
    %v2030 = vpop.f32.mrf.mxu0
    %v2031 = vadd.f32 %v738, %v2030
    %2032 = vdwg.mxu0
    %v2033 = vmul.f32 %v2022, 1.442695
    %v2034 = vpow.pop %v2033
    %v2035 = vmul.f32 %v2025, 1.442695
    %v2036 = vpow.pop %v2035
    %v2037 = vmul.f32 %v2028, 1.442695
    %v2038 = vpow.pop %v2037
    %v2039 = vmul.f32 %v2031, 1.442695
    %v2040 = vpow.pop %v2039
    %v2041 = vsel %vm739, %v2034, 0.0
    %2042 = vadd.xlane.f32.xlu0 %v2041
    %v2043 = vpop.xlane.xlu0 %2042
    %v2044 = vsel %vm739, %v2036, 0.0
    %2045 = vadd.xlane.f32.xlu0 %v2044
    %v2046 = vpop.xlane.xlu0 %2045
    %v2047 = vsel %vm739, %v2038, 0.0
    %2048 = vadd.xlane.f32.xlu0 %v2047
    %v2049 = vpop.xlane.xlu0 %2048
    %v2050 = vsel %vm739, %v2040, 0.0
    %2051 = vadd.xlane.f32.xlu0 %v2050
    %v2052 = vpop.xlane.xlu0 %2051
    %v2053 = vrcp.pop %v2043
    %v2054 = vrcp.pop %v2046
    %v2055 = vrcp.pop %v2049
    %v2056 = vrcp.pop %v2052
    %v2057 = vmul.f32 %v2034, %v2053
    %v2058 = vmul.f32 %v2036, %v2054
    %v2059 = vmul.f32 %v2038, %v2055
    %v2060 = vmul.f32 %v2040, %v2056
    %2061 = vrot.lane.b32.xlu0 %v1720, 48
    %v2062 = vpop.permute.xlu0 %2061
    %2063 = vrot.lane.b32.xlu0 %v1723, 48
    %v2064 = vpop.permute.xlu0 %2063
    %2065 = vrot.lane.b32.xlu0 %v1755, 48
    %v2066 = vpop.permute.xlu0 %2065
    %2067 = vrot.lane.b32.xlu0 %v1758, 48
    %v2068 = vpop.permute.xlu0 %2067
    %v2074 = vsel %vm739, %v2057, 0
    %v2077 = vsel %vm739, %v2058, 0
    %v2080 = vsel %vm739, %v2059, 0
    %v2083 = vsel %vm739, %v2060, 0
    %2085 = vmatpush.msra.mxu0 0.0
    %2086 = vmatpush.msra.mxu0 0.0
    %2087 = vmatpush.msra.mxu0 0.0
    %2088 = vmatpush.msra.mxu0 0.0
    %2089 = vmatpush.msra.mxu0 0.0
    %2090 = vmatpush.msra.mxu0 0.0
    %2091 = vmatpush.msra.mxu0 0.0
    %2092 = vmatpush.msra.mxu0 0.0
    %2093 = vmatpush.msra.mxu0 0.0
    %2094 = vmatpush.msra.mxu0 0.0
    %2095 = vmatpush.msra.mxu0 0.0
    %2096 = vmatpush.msra.mxu0 0.0
    %2097 = vmatpush.msra.mxu0 %v2068
    %2098 = vmatpush.msra.mxu0 %v2066
    %2099 = vmatpush.msra.mxu0 %v2064
    %2100 = vmatpush.msra.mxu0 %v2062
    %2101 = vmatmul.f32.gmra.mxu0 %v2074
    %v2102 = vpop.f32.mrf.mxu0
    %v2103 = vadd.f32 0.0, %v2102
    %2104 = vmatmul.f32.gmra.mxu0 %v2077
    %v2105 = vpop.f32.mrf.mxu0
    %v2106 = vadd.f32 0.0, %v2105
    %2107 = vmatmul.f32.gmra.mxu0 %v2080
    %v2108 = vpop.f32.mrf.mxu0
    %v2109 = vadd.f32 0.0, %v2108
    %2110 = vmatmul.f32.gmra.mxu0 %v2083
    %v2111 = vpop.f32.mrf.mxu0
    %v2112 = vadd.f32 0.0, %v2111
    %2113 = vdwg.mxu0
    %v2115 = vsel %vm33, %v2103, 0
    %v2118 = vsel %vm33, %v2106, 0
    %2120 = vmatpush.msra.mxu0 0.0
    %2121 = vmatpush.msra.mxu0 0.0
    %2122 = vmatpush.msra.mxu0 0.0
    %2123 = vmatpush.msra.mxu0 0.0
    %2124 = vmatpush.msra.mxu0 0.0
    %2125 = vmatpush.msra.mxu0 0.0
    %2126 = vmatpush.msra.mxu0 0.0
    %2127 = vmatpush.msra.mxu0 0.0
    %2128 = vmatpush.msra.mxu0 0.0
    %2129 = vmatpush.msra.mxu0 0.0
    %2130 = vmatpush.msra.mxu0 0.0
    %2131 = vmatpush.msra.mxu0 0.0
    %2132 = vmatpush.msra.mxu0 0.0
    %2133 = vmatpush.msra.mxu0 0.0
    %2134 = vmatpush.msra.mxu0 %v1763
    %2135 = vmatpush.msra.mxu0 %v1762
    %2136 = vmatmul.f32.gmra.mxu0 %v2115
    %v2137 = vpop.f32.mrf.mxu0
    %v2138 = vadd.f32 0.0, %v2137
    %2139 = vmatmul.f32.gmra.mxu0 %v2118
    %v2140 = vpop.f32.mrf.mxu0
    %v2141 = vadd.f32 0.0, %v2140
    %2142 = vdwg.mxu0
    %v2143 = vadd.f32 %v1939, %v2138
    %v2144 = vadd.f32 %v1940, %v2141
    %v2146 = vsel %vm33, %v2109, 0
    %v2149 = vsel %vm33, %v2112, 0
    %2151 = vmatpush.msra.mxu0 0.0
    %2152 = vmatpush.msra.mxu0 0.0
    %2153 = vmatpush.msra.mxu0 0.0
    %2154 = vmatpush.msra.mxu0 0.0
    %2155 = vmatpush.msra.mxu0 0.0
    %2156 = vmatpush.msra.mxu0 0.0
    %2157 = vmatpush.msra.mxu0 0.0
    %2158 = vmatpush.msra.mxu0 0.0
    %2159 = vmatpush.msra.mxu0 0.0
    %2160 = vmatpush.msra.mxu0 0.0
    %2161 = vmatpush.msra.mxu0 0.0
    %2162 = vmatpush.msra.mxu0 0.0
    %2163 = vmatpush.msra.mxu0 0.0
    %2164 = vmatpush.msra.mxu0 0.0
    %2165 = vmatpush.msra.mxu0 %v1767
    %2166 = vmatpush.msra.mxu0 %v1766
    %2167 = vmatmul.f32.gmra.mxu0 %v2146
    %v2168 = vpop.f32.mrf.mxu0
    %v2169 = vadd.f32 0.0, %v2168
    %2170 = vmatmul.f32.gmra.mxu0 %v2149
    %v2171 = vpop.f32.mrf.mxu0
    %v2172 = vadd.f32 0.0, %v2171
    %2173 = vdwg.mxu0
    %v2174 = vadd.f32 %v1970, %v2169
    %v2175 = vadd.f32 %v1971, %v2172
    %v2176 = vadd.f32 %v1598, %v2143
    %v2177 = vadd.f32 %v1599, %v2144
    %v2178 = vadd.f32 %v1600, %v2174
    %v2179 = vadd.f32 %v1601, %v2175
    %v2180 = vsel %vm739, %v2176, 0.0
    %2181 = vadd.xlane.f32.xlu0 %v2180
    %v2182 = vpop.xlane.xlu0 %2181
    %v2183 = vsel %vm739, %v2177, 0.0
    %2184 = vadd.xlane.f32.xlu0 %v2183
    %v2185 = vpop.xlane.xlu0 %2184
    %v2186 = vsel %vm739, %v2178, 0.0
    %2187 = vadd.xlane.f32.xlu0 %v2186
    %v2188 = vpop.xlane.xlu0 %2187
    %v2189 = vsel %vm739, %v2179, 0.0
    %2190 = vadd.xlane.f32.xlu0 %v2189
    %v2191 = vpop.xlane.xlu0 %2190
    %v2192 = vmul.f32 %v2182, %v758
    %v2193 = vmul.f32 %v2185, %v758
    %v2194 = vmul.f32 %v2188, %v758
    %v2195 = vmul.f32 %v2191, %v758
    %v2196 = vsub.f32 %v2176, %v2192
    %v2197 = vsub.f32 %v2177, %v2193
    %v2198 = vsub.f32 %v2178, %v2194
    %v2199 = vsub.f32 %v2179, %v2195
    %v2200 = vmul.f32 %v2196, %v2196
    %v2201 = vmul.f32 %v2197, %v2197
    %v2202 = vmul.f32 %v2198, %v2198
    %v2203 = vmul.f32 %v2199, %v2199
    %v2204 = vsel %vm739, %v2200, 0.0
    %2205 = vadd.xlane.f32.xlu0 %v2204
    %v2206 = vpop.xlane.xlu0 %2205
    %v2207 = vsel %vm739, %v2201, 0.0
    %2208 = vadd.xlane.f32.xlu0 %v2207
    %v2209 = vpop.xlane.xlu0 %2208
    %v2210 = vsel %vm739, %v2202, 0.0
    %2211 = vadd.xlane.f32.xlu0 %v2210
    %v2212 = vpop.xlane.xlu0 %2211
    %v2213 = vsel %vm739, %v2203, 0.0
    %2214 = vadd.xlane.f32.xlu0 %v2213
    %v2215 = vpop.xlane.xlu0 %2214
    %v2216 = vmul.f32 %v2206, %v758
    %v2217 = vmul.f32 %v2209, %v758
    %v2218 = vmul.f32 %v2212, %v758
    %v2219 = vmul.f32 %v2215, %v758
    %v2220 = vadd.f32 %v2216, 1e-05
    %v2221 = vadd.f32 %v2217, 1e-05
    %v2222 = vadd.f32 %v2218, 1e-05
    %v2223 = vadd.f32 %v2219, 1e-05
    %v2224 = vrsqrt.pop %v2220
    %v2225 = vmul.f32 %v2224, %v2220
    %v2226 = vmul.f32 %v2225, %v2224
    %v2227 = vmul.f32 0.5, %v2226
    %v2228 = vsub.f32 1.5, %v2227
    %v2229 = vmul.f32 %v2224, %v2228
    %vm2230 = vweird.f32 %v2220
    %vm2231 = vweird.f32 %v2224
    %vm2232 = vmor %vm2230, %vm2231
    %v2233 = vsel %vm2232, %v2224, %v2229
    %v2234 = vrsqrt.pop %v2221
    %v2235 = vmul.f32 %v2234, %v2221
    %v2236 = vmul.f32 %v2235, %v2234
    %v2237 = vmul.f32 0.5, %v2236
    %v2238 = vsub.f32 1.5, %v2237
    %v2239 = vmul.f32 %v2234, %v2238
    %vm2240 = vweird.f32 %v2221
    %vm2241 = vweird.f32 %v2234
    %vm2242 = vmor %vm2240, %vm2241
    %v2243 = vsel %vm2242, %v2234, %v2239
    %v2244 = vrsqrt.pop %v2222
    %v2245 = vmul.f32 %v2244, %v2222
    %v2246 = vmul.f32 %v2245, %v2244
    %v2247 = vmul.f32 0.5, %v2246
    %v2248 = vsub.f32 1.5, %v2247
    %v2249 = vmul.f32 %v2244, %v2248
    %vm2250 = vweird.f32 %v2222
    %vm2251 = vweird.f32 %v2244
    %vm2252 = vmor %vm2250, %vm2251
    %v2253 = vsel %vm2252, %v2244, %v2249
    %v2254 = vrsqrt.pop %v2223
    %v2255 = vmul.f32 %v2254, %v2223
    %v2256 = vmul.f32 %v2255, %v2254
    %v2257 = vmul.f32 0.5, %v2256
    %v2258 = vsub.f32 1.5, %v2257
    %v2259 = vmul.f32 %v2254, %v2258
    %vm2260 = vweird.f32 %v2223
    %vm2261 = vweird.f32 %v2254
    %vm2262 = vmor %vm2260, %vm2261
    %v2263 = vsel %vm2262, %v2254, %v2259
    %v2264 = vmul.f32 %v2196, %v2233
    %v2265 = vmul.f32 %v2197, %v2243
    %v2266 = vmul.f32 %v2198, %v2253
    %v2267 = vmul.f32 %v2199, %v2263
    %v2268 = vld [vmem:[#allocation2 + $0x1f0] sm:$0xff]
    %v2269 = vld [vmem:[#allocation2 + $0x1f8] sm:$0xff]
    %v2270 = vld [vmem:[#allocation2 + $0x200] sm:$0xff]
    %v2271 = vld [vmem:[#allocation2 + $0x208] sm:$0xff]
    %v2272 = vld [vmem:[#allocation2 + $0x210] sm:$0xff]
    %v2273 = vld [vmem:[#allocation2 + $0x218] sm:$0xff]
    %v2275 = vsel %vm739, %v2264, 0
    %v2278 = vsel %vm739, %v2265, 0
    %2280 = vmatpush.msra.mxu0 0.0
    %2281 = vmatpush.msra.mxu0 0.0
    %2282 = vmatpush.msra.mxu0 0.0
    %2283 = vmatpush.msra.mxu0 0.0
    %2284 = vmatpush.msra.mxu0 0.0
    %2285 = vmatpush.msra.mxu0 0.0
    %2286 = vmatpush.msra.mxu0 0.0
    %2287 = vmatpush.msra.mxu0 0.0
    %2288 = vmatpush.msra.mxu0 0.0
    %2289 = vmatpush.msra.mxu0 0.0
    %2290 = vmatpush.msra.mxu0 0.0
    %2291 = vmatpush.msra.mxu0 0.0
    %2292 = vmatpush.msra.mxu0 %v2271
    %2293 = vmatpush.msra.mxu0 %v2270
    %2294 = vmatpush.msra.mxu0 %v2269
    %2295 = vmatpush.msra.mxu0 %v2268
    %2296 = vmatmul.f32.gmra.mxu0 %v2275
    %v2297 = vpop.f32.mrf.mxu0
    %v2298 = vadd.f32 %v2272, %v2297
    %2299 = vmatmul.f32.gmra.mxu0 %v2278
    %v2300 = vpop.f32.mrf.mxu0
    %v2301 = vadd.f32 %v2273, %v2300
    %2302 = vdwg.mxu0
    %v2303 = vld [vmem:[#allocation2 + $0x3b0] sm:$0xff]
    %v2304 = vld [vmem:[#allocation2 + $0x3b8] sm:$0xff]
    %v2305 = vld [vmem:[#allocation2 + $0x3c0] sm:$0xff]
    %v2306 = vld [vmem:[#allocation2 + $0x3c8] sm:$0xff]
    %v2307 = vld [vmem:[#allocation2 + $0x3d0] sm:$0xff]
    %v2308 = vld [vmem:[#allocation2 + $0x3d8] sm:$0xff]
    %v2310 = vsel %vm739, %v2266, 0
    %v2313 = vsel %vm739, %v2267, 0
    %2315 = vmatpush.msra.mxu0 0.0
    %2316 = vmatpush.msra.mxu0 0.0
    %2317 = vmatpush.msra.mxu0 0.0
    %2318 = vmatpush.msra.mxu0 0.0
    %2319 = vmatpush.msra.mxu0 0.0
    %2320 = vmatpush.msra.mxu0 0.0
    %2321 = vmatpush.msra.mxu0 0.0
    %2322 = vmatpush.msra.mxu0 0.0
    %2323 = vmatpush.msra.mxu0 0.0
    %2324 = vmatpush.msra.mxu0 0.0
    %2325 = vmatpush.msra.mxu0 0.0
    %2326 = vmatpush.msra.mxu0 0.0
    %2327 = vmatpush.msra.mxu0 %v2306
    %2328 = vmatpush.msra.mxu0 %v2305
    %2329 = vmatpush.msra.mxu0 %v2304
    %2330 = vmatpush.msra.mxu0 %v2303
    %2331 = vmatmul.f32.gmra.mxu0 %v2310
    %v2332 = vpop.f32.mrf.mxu0
    %v2333 = vadd.f32 %v2307, %v2332
    %2334 = vmatmul.f32.gmra.mxu0 %v2313
    %v2335 = vpop.f32.mrf.mxu0
    %v2336 = vadd.f32 %v2308, %v2335
    %2337 = vdwg.mxu0
    %v2338 = vmul.f32 %v2298, 0.5
    %v2339 = vmul.f32 %v2301, 0.5
    %v2340 = vmul.f32 %v2333, 0.5
    %v2341 = vmul.f32 %v2336, 0.5
    %v2342 = vmul.f32 %v2298, 0.044715
    %v2343 = vmul.f32 %v2301, 0.044715
    %v2344 = vmul.f32 %v2333, 0.044715
    %v2345 = vmul.f32 %v2336, 0.044715
    %v2346 = vmul.f32 %v2342, %v2298
    %v2347 = vmul.f32 %v2343, %v2301
    %v2348 = vmul.f32 %v2344, %v2333
    %v2349 = vmul.f32 %v2345, %v2336
    %v2350 = vmul.f32 %v2346, %v2298
    %v2351 = vmul.f32 %v2347, %v2301
    %v2352 = vmul.f32 %v2348, %v2333
    %v2353 = vmul.f32 %v2349, %v2336
    %v2354 = vadd.f32 %v2298, %v2350
    %v2355 = vadd.f32 %v2301, %v2351
    %v2356 = vadd.f32 %v2333, %v2352
    %v2357 = vadd.f32 %v2336, %v2353
    %v2358 = vmul.f32 %v2354, 0.7978846
    %v2359 = vmul.f32 %v2355, 0.7978846
    %v2360 = vmul.f32 %v2356, 0.7978846
    %v2361 = vmul.f32 %v2357, 0.7978846
    %v2362 = vtanh.pop %v2358
    %v2363 = vtanh.pop %v2359
    %v2364 = vtanh.pop %v2360
    %v2365 = vtanh.pop %v2361
    %v2366 = vadd.f32 %v2362, 1.0
    %v2367 = vadd.f32 %v2363, 1.0
    %v2368 = vadd.f32 %v2364, 1.0
    %v2369 = vadd.f32 %v2365, 1.0
    %v2370 = vmul.f32 %v2338, %v2366
    %v2371 = vmul.f32 %v2339, %v2367
    %v2372 = vmul.f32 %v2340, %v2368
    %v2373 = vmul.f32 %v2341, %v2369
    %v2374 = vld [vmem:[#allocation2 + $0x220] sm:$0xff]
    %v2375 = vld [vmem:[#allocation2 + $0x228] sm:$0xff]
    %v2376 = vld [vmem:[#allocation2 + $0x230] sm:$0xff]
    %v2377 = vld [vmem:[#allocation2 + $0x238] sm:$0xff]
    %v2378 = vld [vmem:[#allocation2 + $0x240] sm:$0xff]
    %v2379 = vld [vmem:[#allocation2 + $0x248] sm:$0xff]
    %v2380 = vld [vmem:[#allocation2 + $0x250] sm:$0xff]
    %v2381 = vld [vmem:[#allocation2 + $0x258] sm:$0xff]
    %v2382 = vld [vmem:[#allocation2 + $0x260] sm:$0xff]
    %v2383 = vld [vmem:[#allocation2 + $0x268] sm:$0xff]
    %v2385 = vsel %vm1529, %v2370, 0
    %v2388 = vsel %vm1529, %v2371, 0
    %2390 = vmatpush.msra.mxu0 0.0
    %2391 = vmatpush.msra.mxu0 0.0
    %2392 = vmatpush.msra.mxu0 0.0
    %2393 = vmatpush.msra.mxu0 0.0
    %2394 = vmatpush.msra.mxu0 0.0
    %2395 = vmatpush.msra.mxu0 0.0
    %2396 = vmatpush.msra.mxu0 0.0
    %2397 = vmatpush.msra.mxu0 0.0
    %2398 = vmatpush.msra.mxu0 %v2381
    %2399 = vmatpush.msra.mxu0 %v2380
    %2400 = vmatpush.msra.mxu0 %v2379
    %2401 = vmatpush.msra.mxu0 %v2378
    %2402 = vmatpush.msra.mxu0 %v2377
    %2403 = vmatpush.msra.mxu0 %v2376
    %2404 = vmatpush.msra.mxu0 %v2375
    %2405 = vmatpush.msra.mxu0 %v2374
    %2406 = vmatmul.f32.gmra.mxu0 %v2385
    %v2407 = vpop.f32.mrf.mxu0
    %v2408 = vadd.f32 %v2382, %v2407
    %2409 = vmatmul.f32.gmra.mxu0 %v2388
    %v2410 = vpop.f32.mrf.mxu0
    %v2411 = vadd.f32 %v2383, %v2410
    %2412 = vdwg.mxu0
    %v2413 = vld [vmem:[#allocation2 + $0x3e0] sm:$0xff]
    %v2414 = vld [vmem:[#allocation2 + $0x3e8] sm:$0xff]
    %v2415 = vld [vmem:[#allocation2 + $0x3f0] sm:$0xff]
    %v2416 = vld [vmem:[#allocation2 + $0x3f8] sm:$0xff]
    %v2417 = vld [vmem:[#allocation2 + $0x400] sm:$0xff]
    %v2418 = vld [vmem:[#allocation2 + $0x408] sm:$0xff]
    %v2419 = vld [vmem:[#allocation2 + $0x410] sm:$0xff]
    %v2420 = vld [vmem:[#allocation2 + $0x418] sm:$0xff]
    %v2421 = vld [vmem:[#allocation2 + $0x420] sm:$0xff]
    %v2422 = vld [vmem:[#allocation2 + $0x428] sm:$0xff]
    %v2424 = vsel %vm1529, %v2372, 0
    %v2427 = vsel %vm1529, %v2373, 0
    %2429 = vmatpush.msra.mxu0 0.0
    %2430 = vmatpush.msra.mxu0 0.0
    %2431 = vmatpush.msra.mxu0 0.0
    %2432 = vmatpush.msra.mxu0 0.0
    %2433 = vmatpush.msra.mxu0 0.0
    %2434 = vmatpush.msra.mxu0 0.0
    %2435 = vmatpush.msra.mxu0 0.0
    %2436 = vmatpush.msra.mxu0 0.0
    %2437 = vmatpush.msra.mxu0 %v2420
    %2438 = vmatpush.msra.mxu0 %v2419
    %2439 = vmatpush.msra.mxu0 %v2418
    %2440 = vmatpush.msra.mxu0 %v2417
    %2441 = vmatpush.msra.mxu0 %v2416
    %2442 = vmatpush.msra.mxu0 %v2415
    %2443 = vmatpush.msra.mxu0 %v2414
    %2444 = vmatpush.msra.mxu0 %v2413
    %2445 = vmatmul.f32.gmra.mxu0 %v2424
    %v2446 = vpop.f32.mrf.mxu0
    %v2447 = vadd.f32 %v2421, %v2446
    %2448 = vmatmul.f32.gmra.mxu0 %v2427
    %v2449 = vpop.f32.mrf.mxu0
    %v2450 = vadd.f32 %v2422, %v2449
    %2451 = vdwg.mxu0
    %v2452 = vadd.f32 %v2176, %v2408
    %v2453 = vadd.f32 %v2177, %v2411
    %v2454 = vadd.f32 %v2178, %v2447
    %v2455 = vadd.f32 %v2179, %v2450
    %v2456 = vld [vmem:[#allocation2 + $0x430] sm:$0xff]
    %v2457 = vld [vmem:[#allocation2 + $0x438] sm:$0xff]
    %v2458 = vld [vmem:[#allocation2 + $0x440] sm:$0xff]
    %v2459 = vld [vmem:[#allocation2 + $0x448] sm:$0xff]
    %v2460 = vld [vmem:[#allocation2 + $0x450] sm:$0xff]
    %v2461 = vld [vmem:[#allocation2 + $0x458] sm:$0xff]
    %v2462 = vld [vmem:[#allocation2 + $0x460] sm:$0xff]
    %v2463 = vld [vmem:[#allocation2 + $0x468] sm:$0xff]
    %v2465 = vsel %vm739, %v2454, 0
    %v2468 = vsel %vm739, %v2455, 0
    %2470 = vmatpush.msra.mxu0 0.0
    %2471 = vmatpush.msra.mxu0 0.0
    %2472 = vmatpush.msra.mxu0 0.0
    %2473 = vmatpush.msra.mxu0 0.0
    %2474 = vmatpush.msra.mxu0 0.0
    %2475 = vmatpush.msra.mxu0 0.0
    %2476 = vmatpush.msra.mxu0 0.0
    %2477 = vmatpush.msra.mxu0 0.0
    %2478 = vmatpush.msra.mxu0 0.0
    %2479 = vmatpush.msra.mxu0 0.0
    %2480 = vmatpush.msra.mxu0 0.0
    %2481 = vmatpush.msra.mxu0 0.0
    %2482 = vmatpush.msra.mxu0 %v2463
    %2483 = vmatpush.msra.mxu0 %v2462
    %2484 = vmatpush.msra.mxu0 %v2461
    %2485 = vmatpush.msra.mxu0 %v2460
    %2486 = vmatmul.f32.gmra.mxu0 %v2465
    %v2487 = vpop.f32.mrf.mxu0
    %v2488 = vadd.f32 0.0, %v2487
    %2489 = vmatmul.f32.gmra.mxu0 %v2468
    %v2490 = vpop.f32.mrf.mxu0
    %v2491 = vadd.f32 0.0, %v2490
    %2492 = vdwg.mxu0
    %v2494 = vsel %vm739, %v2452, 0
    %v2497 = vsel %vm739, %v2453, 0
    %2499 = vmatpush.msra.mxu0 0.0
    %2500 = vmatpush.msra.mxu0 0.0
    %2501 = vmatpush.msra.mxu0 0.0
    %2502 = vmatpush.msra.mxu0 0.0
    %2503 = vmatpush.msra.mxu0 0.0
    %2504 = vmatpush.msra.mxu0 0.0
    %2505 = vmatpush.msra.mxu0 0.0
    %2506 = vmatpush.msra.mxu0 0.0
    %2507 = vmatpush.msra.mxu0 0.0
    %2508 = vmatpush.msra.mxu0 0.0
    %2509 = vmatpush.msra.mxu0 0.0
    %2510 = vmatpush.msra.mxu0 0.0
    %2511 = vmatpush.msra.mxu0 %v2459
    %2512 = vmatpush.msra.mxu0 %v2458
    %2513 = vmatpush.msra.mxu0 %v2457
    %2514 = vmatpush.msra.mxu0 %v2456
    %2515 = vmatmul.f32.gmra.mxu0 %v2494
    %v2516 = vpop.f32.mrf.mxu0
    %v2517 = vadd.f32 %v2488, %v2516
    %2518 = vmatmul.f32.gmra.mxu0 %v2497
    %v2519 = vpop.f32.mrf.mxu0
    %v2520 = vadd.f32 %v2491, %v2519
    %2521 = vdwg.mxu0
    %v2522 = vld [vmem:[#allocation2 + $0x470] sm:$0xff]
    %v2523 = vld [vmem:[#allocation2 + $0x478] sm:$0xff]
    %v2524 = vadd.f32 %v2517, %v2522
    %v2525 = vadd.f32 %v2520, %v2523
    %v2526 = vmul.f32 %v2524, 0.5
    %v2527 = vmul.f32 %v2525, 0.5
    %v2528 = vmul.f32 %v2524, 0.044715
    %v2529 = vmul.f32 %v2525, 0.044715
    %v2530 = vmul.f32 %v2528, %v2524
    %v2531 = vmul.f32 %v2529, %v2525
    %v2532 = vmul.f32 %v2530, %v2524
    %v2533 = vmul.f32 %v2531, %v2525
    %v2534 = vadd.f32 %v2524, %v2532
    %v2535 = vadd.f32 %v2525, %v2533
    %v2536 = vmul.f32 %v2534, 0.7978846
    %v2537 = vmul.f32 %v2535, 0.7978846
    %v2538 = vtanh.pop %v2536
    %v2539 = vtanh.pop %v2537
    %v2540 = vadd.f32 %v2538, 1.0
    %v2541 = vadd.f32 %v2539, 1.0
    %v2542 = vmul.f32 %v2526, %v2540
    %v2543 = vmul.f32 %v2527, %v2541
    %v2544 = vld [vmem:[#allocation2 + $0x480] sm:$0xff]
    %v2545 = vld [vmem:[#allocation2 + $0x488] sm:$0xff]
    %v2546 = vld [vmem:[#allocation2 + $0x490] sm:$0xff]
    %v2547 = vld [vmem:[#allocation2 + $0x498] sm:$0xff]
    %v2548 = vld [vmem:[#allocation2 + $0x4a0] sm:$0xff]
    %v2549 = vld [vmem:[#allocation2 + $0x4a8] sm:$0xff]
    %v2550 = vld [vmem:[#allocation2 + $0x4b0] sm:$0xff]
    %v2551 = vld [vmem:[#allocation2 + $0x4b8] sm:$0xff]
    %v2552 = vld [vmem:[#allocation2 + $0x4c0] sm:$0xff]
    %v2553 = vld [vmem:[#allocation2 + $0x4c8] sm:$0xff]
    %v2555 = vsel %vm1529, %v2542, 0
    %v2558 = vsel %vm1529, %v2543, 0
    %2560 = vmatpush.msra.mxu0 0.0
    %2561 = vmatpush.msra.mxu0 0.0
    %2562 = vmatpush.msra.mxu0 0.0
    %2563 = vmatpush.msra.mxu0 0.0
    %2564 = vmatpush.msra.mxu0 0.0
    %2565 = vmatpush.msra.mxu0 0.0
    %2566 = vmatpush.msra.mxu0 0.0
    %2567 = vmatpush.msra.mxu0 0.0
    %2568 = vmatpush.msra.mxu0 %v2551
    %2569 = vmatpush.msra.mxu0 %v2550
    %2570 = vmatpush.msra.mxu0 %v2549
    %2571 = vmatpush.msra.mxu0 %v2548
    %2572 = vmatpush.msra.mxu0 %v2547
    %2573 = vmatpush.msra.mxu0 %v2546
    %2574 = vmatpush.msra.mxu0 %v2545
    %2575 = vmatpush.msra.mxu0 %v2544
    %2576 = vmatmul.f32.gmra.mxu0 %v2555
    %v2577 = vpop.f32.mrf.mxu0
    %v2578 = vadd.f32 %v2552, %v2577
    %2579 = vmatmul.f32.gmra.mxu0 %v2558
    %v2580 = vpop.f32.mrf.mxu0
    %v2581 = vadd.f32 %v2553, %v2580
    %2582 = vdwg.mxu0
    %2583 = vst [vmem:[%s2] sm:$0xff] %v2578
    %2584 = vst [vmem:[%s2 + $0x8] sm:$0xff] %v2581
    // Predicated region
    $region14: #{forward.1} parent=1 // pred_check
      _
    $region15: #{forward.1} parent=1 // pred_check_branch
      %2586 = sbr.rel (0) target = $region17
    $region16: #{forward.1} parent=1 // pred_region
      _
    $region17: #{forward.1} parent=1 // pred_fallthru
      _
    // Predicated region
    $region18: #{forward.1} parent=1 // pred_check
      _
    $region19: #{forward.1} parent=1 // pred_check_branch
      %2588 = sbr.rel (0) target = $region21
    $region20: #{forward.1} parent=1 // pred_region
      _
    $region21: #{forward.1} parent=1 // pred_fallthru
      _
    %2589 = vsyncpa [#allocation3], 1

</llo_original>
